<compile_context>
chip_gen: v6e
topology: v6e:2x2x1
jax: 0.10.0
libtpu: 0.0.40
codegen_flags: <defaults>
</compile_context>

<pallas_src>
from functools import partial

import jax
import jax.numpy as jnp
from jax import lax
from jax.experimental import pallas as pl
from jax.experimental.pallas import tpu as pltpu

EPS_WS = 1e-5   # weight-standardization eps (float32 path in torch)
EPS_GN = 1e-5   # nn.GroupNorm default eps
GROUPS = 8


def _silu(x):
    return x * jax.nn.sigmoid(x)


def _num_tensorcores():
    """Best-effort TensorCores-per-chip (2 on v7x, 1 on v5e/v6e); safe fallback 1."""
    try:
        info = pltpu.get_tpu_info()
    except Exception:
        return 1
    for attr in ("num_cores", "core_count", "num_tensorcores", "tensorcore_count",
                 "cores_per_chip", "num_cores_per_chip"):
        v = getattr(info, attr, None)
        if v is None:
            continue
        try:
            v = int(v)
        except (TypeError, ValueError):
            continue
        if v > 0:
            return v
    return 1


# --------------------------------------------------------------------------------------
# kernel
# --------------------------------------------------------------------------------------

def resnet_block_kernel(x_ref, a1_ref, b1_ref, g1_ref, be1_ref,
                        a2_ref, b2_ref, g2_ref, be2_ref,
                        gsum_ref, gbcast_ref, *rest,
                        bb, RP, H, use_res_conv):
    if use_res_conv:
        ar_ref, br_ref, o_ref, hpad_ref = rest
    else:
        o_ref, hpad_ref = rest
        ar_ref = br_ref = None

    M = bb * RP                                  # rows of the batch-stacked padded slab
    WCo = o_ref.shape[-1]                        # W * Cout (lane-dense)
    cdt = hpad_ref.dtype                         # compute dtype (bf16 by default)

    def mm(a, b):                                # operands are pre-cast; no astype here
        return jnp.dot(a, b, preferred_element_type=jnp.float32)

    b1f, g1f, be1f = b1_ref[...], g1_ref[...], be1_ref[...]
    b2f, g2f, be2f = b2_ref[...], g2_ref[...], be2_ref[...]
    gsum, gbcast = gsum_ref[...], gbcast_ref[...]

    def gn_silu(h, gamma, beta):
        # Per-image GroupNorm over (H rows) x (W positions) x (Cg channels), all lane-folded.
        # Two-stage thin reduction: sublane row-sum -> (W*C, G) group-mean -> (G, W*C) broadcast.
        s1 = jnp.sum(h, axis=0, keepdims=True)                    # (1, W*C)
        mean = mm(mm(s1, gsum), gbcast)                           # (1, W*C) per-lane group mean
        c = h - mean
        s2 = jnp.sum(c * c, axis=0, keepdims=True)
        var = mm(mm(s2, gsum), gbcast)
        hn = c * lax.rsqrt(var + EPS_GN) * gamma + beta
        return hn * jax.nn.sigmoid(hn)                            # SiLU

    # Zero only the halo / tail rows of the conv-2 scratch; interior rows are always
    # fully overwritten below (no interior re-zeroing).
    zrow = jnp.zeros((1, WCo), cdt)
    ztail = jnp.zeros((RP - H - 1, WCo), cdt)
    for b in range(bb):
        hpad_ref[b * RP:b * RP + 1, :] = zrow
        hpad_ref[b * RP + H + 1:(b + 1) * RP, :] = ztail

    # ---- proj_1 (weight-standardized 3x3 conv): 3 row-tap matmuls over the whole
    # batch-stacked slab (M = bb*RP-2 output rows; image-boundary rows are garbage
    # and never read).
    acc1 = (mm(x_ref[0:M - 2, :], a1_ref[0])
            + mm(x_ref[1:M - 1, :], a1_ref[1])
            + mm(x_ref[2:M, :], a1_ref[2]) + b1f)                 # (M-2, W*Cout) f32

    # ---- GroupNorm-1 + SiLU per image (statistics must not mix across the batch)
    for b in range(bb):
        h = gn_silu(acc1[b * RP:b * RP + H], g1f, be1f)
        hpad_ref[b * RP + 1:b * RP + 1 + H, :] = h.astype(cdt)

    # ---- proj_2 (3x3 conv): 3 row-tap matmuls over the stacked padded scratch
    acc2 = (mm(hpad_ref[0:M - 2, :], a2_ref[0])
            + mm(hpad_ref[1:M - 1, :], a2_ref[1])
            + mm(hpad_ref[2:M, :], a2_ref[2]) + b2f)              # (M-2, W*Cout) f32

    # ---- residual path (specialized at trace time)
    if use_res_conv:
        res_stack = mm(x_ref[...], ar_ref[...]) + br_ref[...]     # one stacked 1x1-conv matmul

    # ---- GroupNorm-2 + SiLU + residual add + store per image
    for b in range(bb):
        h2 = gn_silu(acc2[b * RP:b * RP + H], g2f, be2f)
        if use_res_conv:
            res = res_stack[b * RP + 1:b * RP + 1 + H]
        else:
            res = x_ref[b * RP + 1:b * RP + 1 + H, :].astype(jnp.float32)   # identity (W*Cin==W*Cout)
        o_ref[b * H:(b + 1) * H, :] = (h2 + res).astype(o_ref.dtype)


# --------------------------------------------------------------------------------------
# wrapper: layout + grid-invariant weight prep (all hoisted out of the kernel)
# --------------------------------------------------------------------------------------

def _banded_conv_mats(w, W):
    # w: (3, 3, Cin, Cout) [ky, kx, ci, co]  ->  (3, W*Cin, W*Cout) with
    # A[ky, xi*Cin+ci, xo*Cout+co] = w[ky, xi-xo+1, ci, co] if xi-xo+1 in {0,1,2} else 0.
    # The kx taps and the W-direction zero padding live entirely in this matrix.
    xi = jnp.arange(W)[:, None]
    xo = jnp.arange(W)[None, :]
    kx = xi - xo + 1
    valid = (kx >= 0) & (kx < 3)
    a = w[:, jnp.clip(kx, 0, 2), :, :]                            # (3, W, W, Cin, Cout)
    a = jnp.where(valid[None, :, :, None, None], a, 0.0)
    _, _, _, Cin, Cout = a.shape
    return jnp.transpose(a, (0, 1, 3, 2, 4)).reshape(3, W * Cin, W * Cout)


def _block_diag(wr, W):
    # 1x1 conv in the folded layout: (W*Cin, W*Cout) block-diagonal with wr blocks.
    Cin, Cout = wr.shape
    return jnp.einsum("xy,io->xiyo", jnp.eye(W, dtype=wr.dtype), wr).reshape(W * Cin, W * Cout)


def resnet_block(x_nchw, params, *, batch_block=None, compute_dtype=jnp.bfloat16):
    B, Cin, H, W = x_nchw.shape
    Cout = params["b1"].shape[-1]
    use_res_conv = "wr" in params                       # trace-time specialization
    assert Cout % GROUPS == 0
    Cg = Cout // GROUPS
    WCi, WCo = W * Cin, W * Cout
    assert WCi % 128 == 0 and WCo % 128 == 0, "lane-folded layout needs W*C to be a multiple of 128"

    # rows per image in the padded, batch-stacked layout (1 top halo + 1 bottom halo,
    # rounded up to a sublane multiple so partial batch blocks stay (8,128)-legal)
    RP = ((H + 2 + 7) // 8) * 8

    # batch block: split across TensorCores when possible (v7x), else fold the whole batch
    if batch_block is None:
        nc = _num_tensorcores()
        batch_block = B // nc if (nc > 1 and B % nc == 0 and H % 8 == 0) else B
    bb = batch_block
    assert B % bb == 0
    assert bb == B or H % 8 == 0, "partial batch blocks need H % 8 == 0 for the output BlockSpec"

    # ---- layout glue: NCHW -> NHWC -> pad H (halo + tail pad) -> fold (W,C) into lanes -> stack batch
    x = jnp.transpose(x_nchw, (0, 2, 3, 1))
    x = jnp.pad(x, ((0, 0), (1, RP - H - 1), (0, 0), (0, 0)))
    x = x.reshape(B * RP, WCi).astype(compute_dtype)

    # ---- hoisted weight standardization (grid-invariant)
    w1 = params["w1"].reshape(3, 3, Cin, Cout)
    mu = jnp.mean(w1, axis=(0, 1, 2), keepdims=True)
    var = jnp.mean((w1 - mu) ** 2, axis=(0, 1, 2), keepdims=True)   # unbiased=False
    w1s = (w1 - mu) * lax.rsqrt(var + EPS_WS)

    # banded conv weights pre-cast to the compute dtype (bf16 halves weight DMA / VMEM)
    a1 = _banded_conv_mats(w1s, W).astype(compute_dtype)                         # (3, W*Cin, W*Cout)
    a2 = _banded_conv_mats(params["w2"].reshape(3, 3, Cout, Cout), W).astype(compute_dtype)

    def fold(v):                                                    # (1, C) -> (1, W*C), f32
        return jnp.tile(v, (1, W)).astype(jnp.float32)

    b1f, g1f, be1f = fold(params["b1"]), fold(params["g1"]), fold(params["be1"])
    b2f, g2f, be2f = fold(params["b2"]), fold(params["g2"]), fold(params["be2"])

    # thin two-stage GroupNorm reduction matrices (replace the dense (W*C, W*C) matrix)
    gid = jnp.tile(jnp.arange(Cout) // Cg, W)                               # group id per folded lane
    onehot = (gid[:, None] == jnp.arange(GROUPS)[None, :]).astype(jnp.float32)   # (W*Cout, G)
    gsum = onehot / float(H * W * Cg)                                       # lane -> group mean
    gbcast = onehot.T                                                       # group -> lanes

    inputs = [x, a1, b1f, g1f, be1f, a2, b2f, g2f, be2f, gsum, gbcast]

    def full_spec(arr):
        nd = arr.ndim
        return pl.BlockSpec(arr.shape, lambda i, _nd=nd: (0,) * _nd)

    in_specs = [pl.BlockSpec((bb * RP, WCi), lambda i: (i, 0))]
    in_specs += [full_spec(a) for a in inputs[1:]]

    if use_res_conv:
        ar = _block_diag(params["wr"], W).astype(compute_dtype)
        brf = fold(params["br"])
        inputs += [ar, brf]
        in_specs += [full_spec(ar), full_spec(brf)]

    kernel = partial(resnet_block_kernel, bb=bb, RP=RP, H=H, use_res_conv=use_res_conv)

    # explicit VMEM budget (guards the O((W*C)^2) growth of the banded matrices on v7x's 64 MiB)
    op_bytes = sum(int(a.size) * a.dtype.itemsize for a in inputs)
    out_bytes = B * H * WCo * 4
    scratch_bytes = bb * RP * WCo * jnp.dtype(compute_dtype).itemsize
    vmem_bytes = min(2 * (op_bytes + out_bytes) + scratch_bytes + (8 << 20), 100 << 20)
    # TODO(synk): for much larger W*C, add an output-lane grid axis (blocking a1/a2 columns)
    # and single-buffer the grid-invariant weights; unnecessary at these toy sizes.

    out = pl.pallas_call(
        kernel,
        out_shape=jax.ShapeDtypeStruct((B * H, WCo), jnp.float32),
        grid_spec=pltpu.PrefetchScalarGridSpec(
            num_scalar_prefetch=0,
            grid=(B // bb,),
            in_specs=in_specs,
            out_specs=pl.BlockSpec((bb * H, WCo), lambda i: (i, 0)),
            scratch_shapes=[pltpu.VMEM((bb * RP, WCo), compute_dtype)],
        ),
        compiler_params=pltpu.CompilerParams(
            dimension_semantics=("parallel",),
            vmem_limit_bytes=int(vmem_bytes),
        ),
    )(*inputs)

    # unfold lanes (pure row-major reshape) and return NCHW like the torch module
    return jnp.transpose(out.reshape(B, H, W, Cout), (0, 3, 1, 2))


# --------------------------------------------------------------------------------------
# deterministic parameter init & pure-JAX reference
# --------------------------------------------------------------------------------------

def init_params(key, dim, dim_out):
    ks = jax.random.split(key, 10)
    p = {
        "w1": 0.1 * jax.random.normal(ks[0], (9, dim, dim_out), jnp.float32),
        "b1": 0.1 * jax.random.normal(ks[1], (1, dim_out), jnp.float32),
        "g1": 1.0 + 0.1 * jax.random.normal(ks[2], (1, dim_out), jnp.float32),
        "be1": 0.1 * jax.random.normal(ks[3], (1, dim_out), jnp.float32),
        "w2": 0.1 * jax.random.normal(ks[4], (9, dim_out, dim_out), jnp.float32),
        "b2": 0.1 * jax.random.normal(ks[5], (1, dim_out), jnp.float32),
        "g2": 1.0 + 0.1 * jax.random.normal(ks[6], (1, dim_out), jnp.float32),
        "be2": 0.1 * jax.random.normal(ks[7], (1, dim_out), jnp.float32),
    }
    if dim != dim_out:   # nn.Identity() residual otherwise -> no residual weights at all
        p["wr"] = 0.1 * jax.random.normal(ks[8], (dim, dim_out), jnp.float32)
        p["br"] = 0.1 * jax.random.normal(ks[9], (1, dim_out), jnp.float32)
    return p


def _gn_ref(h, gamma, beta):
    B, H, W, C = h.shape
    hg = h.reshape(B, H, W, GROUPS, C // GROUPS)
    mu = hg.mean(axis=(1, 2, 4), keepdims=True)
    var = ((hg - mu) ** 2).mean(axis=(1, 2, 4), keepdims=True)
    hn = ((hg - mu) * lax.rsqrt(var + EPS_GN)).reshape(B, H, W, C)
    return hn * gamma + beta


def ref_forward(x_nchw, params):
    x = jnp.transpose(x_nchw, (0, 2, 3, 1))
    Cin = x.shape[-1]
    Cout = params["b1"].shape[-1]
    dn = ("NHWC", "HWIO", "NHWC")

    w1 = params["w1"].reshape(3, 3, Cin, Cout)
    mu = w1.mean(axis=(0, 1, 2), keepdims=True)
    var = ((w1 - mu) ** 2).mean(axis=(0, 1, 2), keepdims=True)
    w1s = (w1 - mu) * lax.rsqrt(var + EPS_WS)

    h = lax.conv_general_dilated(x, w1s, (1, 1), "SAME", dimension_numbers=dn) + params["b1"]
    h = _silu(_gn_ref(h, params["g1"], params["be1"]))
    w2 = params["w2"].reshape(3, 3, Cout, Cout)
    h = lax.conv_general_dilated(h, w2, (1, 1), "SAME", dimension_numbers=dn) + params["b2"]
    h = _silu(_gn_ref(h, params["g2"], params["be2"]))
    res = (jnp.einsum("bhwc,cd->bhwd", x, params["wr"]) + params["br"]) if "wr" in params else x
    return jnp.transpose(h + res, (0, 3, 1, 2))


# TODO(synk): only the ResnetBlock submodule is a Pallas kernel; the rest of NoisePredNet
# (time MLP, sinusoidal embeddings, ResnetBlockwithT scale/shift, Down/Upsample, final conv,
# and the overall graph composition) remains ordinary JAX composition around it.

if __name__ == "__main__":
    B, dim, dim_out, H, W = 2, 8, 16, 16, 16          # PyTorch-equivalent NCHW input (2, 8, 16, 16)

    key = jax.random.PRNGKey(0)
    kx, kp, kx2, kp2 = jax.random.split(key, 4)

    # case 1: dim != dim_out  (1x1 residual conv path)
    x = jax.random.normal(kx, (B, dim, H, W), jnp.float32)
    params = init_params(kp, dim, dim_out)
    # case 2: dim == dim_out  (identity residual -> specialized kernel variant, no res matmul)
    x2 = jax.random.normal(kx2, (B, dim_out, H, W), jnp.float32)
    params2 = init_params(kp2, dim_out, dim_out)

    run_f32 = jax.jit(partial(resnet_block, compute_dtype=jnp.float32))
    run_bf16 = jax.jit(partial(resnet_block, compute_dtype=jnp.bfloat16))   # perf default

    # exact (f32) path: matches the module semantics tightly
    for xin, prm in ((x, params), (x2, params2)):
        out = jax.block_until_ready(run_f32(xin, prm))
        ref = ref_forward(xin, prm)
        assert out.shape == ref.shape
        assert jnp.allclose(out, ref, atol=2e-4, rtol=2e-4), float(jnp.max(jnp.abs(out - ref)))

    # bf16 weight/activation path (performance default): relative-L2 check
    for xin, prm in ((x, params), (x2, params2)):
        out = jax.block_until_ready(run_bf16(xin, prm))
        ref = ref_forward(xin, prm)
        rel = float(jnp.linalg.norm(out - ref) / jnp.linalg.norm(ref))
        assert rel < 3e-2, (rel, float(jnp.max(jnp.abs(out - ref))))

    print("KERNEL_OK")
</pallas_src>

<mosaic_0001>
module attributes {stable_mosaic.version = 11 : i64} {
  func.func @resnet_block_kernel(%arg0: i32, %arg1: memref<48x128xf32, #tpu.memory_space<vmem>>, %arg2: memref<3x128x256xf32, #tpu.memory_space<vmem>>, %arg3: memref<1x256xf32, #tpu.memory_space<vmem>>, %arg4: memref<1x256xf32, #tpu.memory_space<vmem>>, %arg5: memref<1x256xf32, #tpu.memory_space<vmem>>, %arg6: memref<3x256x256xf32, #tpu.memory_space<vmem>>, %arg7: memref<1x256xf32, #tpu.memory_space<vmem>>, %arg8: memref<1x256xf32, #tpu.memory_space<vmem>>, %arg9: memref<1x256xf32, #tpu.memory_space<vmem>>, %arg10: memref<256x8xf32, #tpu.memory_space<vmem>>, %arg11: memref<8x256xf32, #tpu.memory_space<vmem>>, %arg12: memref<128x256xf32, #tpu.memory_space<vmem>>, %arg13: memref<1x256xf32, #tpu.memory_space<vmem>>, %arg14: memref<32x256xf32, #tpu.memory_space<vmem>>, %arg15: memref<48x256xf32, #tpu.memory_space<vmem>>) attributes {dimension_semantics = [#tpu.dimension_semantics<parallel>], iteration_bounds = array<i64: 1>, scalar_prefetch = 0 : i64, scratch_operands = 1 : i64, tpu.core_type = #tpu.core_type<tc>, window_params = [{transform_indices = @transform_0, window_bounds = array<i64: 48, 128>}, {pipeline_mode = #tpu.pipeline_mode<synchronous>, transform_indices = @transform_1, window_bounds = array<i64: 3, 128, 256>}, {pipeline_mode = #tpu.pipeline_mode<synchronous>, transform_indices = @transform_2, window_bounds = array<i64: 1, 256>}, {pipeline_mode = #tpu.pipeline_mode<synchronous>, transform_indices = @transform_3, window_bounds = array<i64: 1, 256>}, {pipeline_mode = #tpu.pipeline_mode<synchronous>, transform_indices = @transform_4, window_bounds = array<i64: 1, 256>}, {pipeline_mode = #tpu.pipeline_mode<synchronous>, transform_indices = @transform_5, window_bounds = array<i64: 3, 256, 256>}, {pipeline_mode = #tpu.pipeline_mode<synchronous>, transform_indices = @transform_6, window_bounds = array<i64: 1, 256>}, {pipeline_mode = #tpu.pipeline_mode<synchronous>, transform_indices = @transform_7, window_bounds = array<i64: 1, 256>}, {pipeline_mode = #tpu.pipeline_mode<synchronous>, transform_indices = @transform_8, window_bounds = array<i64: 1, 256>}, {pipeline_mode = #tpu.pipeline_mode<synchronous>, transform_indices = @transform_9, window_bounds = array<i64: 256, 8>}, {pipeline_mode = #tpu.pipeline_mode<synchronous>, transform_indices = @transform_10, window_bounds = array<i64: 8, 256>}, {pipeline_mode = #tpu.pipeline_mode<synchronous>, transform_indices = @transform_11, window_bounds = array<i64: 128, 256>}, {pipeline_mode = #tpu.pipeline_mode<synchronous>, transform_indices = @transform_12, window_bounds = array<i64: 1, 256>}, {transform_indices = @transform_13, window_bounds = array<i64: 32, 256>}]} {
    %c0 = arith.constant 0 : index
    %c0_0 = arith.constant 0 : index
    %0 = vector.load %arg3[%c0, %c0_0] : memref<1x256xf32, #tpu.memory_space<vmem>>, vector<1x256xf32>
    %c0_1 = arith.constant 0 : index
    %c0_2 = arith.constant 0 : index
    %1 = vector.load %arg4[%c0_1, %c0_2] : memref<1x256xf32, #tpu.memory_space<vmem>>, vector<1x256xf32>
    %c0_3 = arith.constant 0 : index
    %c0_4 = arith.constant 0 : index
    %2 = vector.load %arg5[%c0_3, %c0_4] : memref<1x256xf32, #tpu.memory_space<vmem>>, vector<1x256xf32>
    %c0_5 = arith.constant 0 : index
    %c0_6 = arith.constant 0 : index
    %3 = vector.load %arg7[%c0_5, %c0_6] : memref<1x256xf32, #tpu.memory_space<vmem>>, vector<1x256xf32>
    %c0_7 = arith.constant 0 : index
    %c0_8 = arith.constant 0 : index
    %4 = vector.load %arg8[%c0_7, %c0_8] : memref<1x256xf32, #tpu.memory_space<vmem>>, vector<1x256xf32>
    %c0_9 = arith.constant 0 : index
    %c0_10 = arith.constant 0 : index
    %5 = vector.load %arg9[%c0_9, %c0_10] : memref<1x256xf32, #tpu.memory_space<vmem>>, vector<1x256xf32>
    %c0_11 = arith.constant 0 : index
    %c0_12 = arith.constant 0 : index
    %6 = vector.load %arg10[%c0_11, %c0_12] : memref<256x8xf32, #tpu.memory_space<vmem>>, vector<256x8xf32>
    %c0_13 = arith.constant 0 : index
    %c0_14 = arith.constant 0 : index
    %7 = vector.load %arg11[%c0_13, %c0_14] : memref<8x256xf32, #tpu.memory_space<vmem>>, vector<8x256xf32>
    %cst = arith.constant 0.000000e+00 : f32
    %8 = vector.broadcast %cst : f32 to vector<1x256xf32>
    %cst_15 = arith.constant 0.000000e+00 : f32
    %9 = vector.broadcast %cst_15 : f32 to vector<7x256xf32>
    %c0_16 = arith.constant 0 : index
    %c0_17 = arith.constant 0 : index
    %10 = vector.load %arg15[%c0_16, %c0_17] : memref<48x256xf32, #tpu.memory_space<vmem>>, vector<1x256xf32>
    tpu.vector_store %arg15[%c0_16, %c0_17], %8 {strides = array<i32>} : memref<48x256xf32, #tpu.memory_space<vmem>>, vector<1x256xf32>,
    %c17 = arith.constant 17 : index
    %c0_18 = arith.constant 0 : index
    %11 = vector.load %arg15[%c17, %c0_18] : memref<48x256xf32, #tpu.memory_space<vmem>>, vector<7x256xf32>
    tpu.vector_store %arg15[%c17, %c0_18], %9 {strides = array<i32>} : memref<48x256xf32, #tpu.memory_space<vmem>>, vector<7x256xf32>,
    %c24 = arith.constant 24 : index
    %c0_19 = arith.constant 0 : index
    %12 = vector.load %arg15[%c24, %c0_19] : memref<48x256xf32, #tpu.memory_space<vmem>>, vector<1x256xf32>
    tpu.vector_store %arg15[%c24, %c0_19], %8 {strides = array<i32>} : memref<48x256xf32, #tpu.memory_space<vmem>>, vector<1x256xf32>,
    %c41 = arith.constant 41 : index
    %c0_20 = arith.constant 0 : index
    %13 = vector.load %arg15[%c41, %c0_20] : memref<48x256xf32, #tpu.memory_space<vmem>>, vector<7x256xf32>
    tpu.vector_store %arg15[%c41, %c0_20], %9 {strides = array<i32>} : memref<48x256xf32, #tpu.memory_space<vmem>>, vector<7x256xf32>,
    %c0_21 = arith.constant 0 : index
    %c0_22 = arith.constant 0 : index
    %14 = vector.load %arg1[%c0_21, %c0_22] : memref<48x128xf32, #tpu.memory_space<vmem>>, vector<46x128xf32>
    %c0_23 = arith.constant 0 : index
    %c0_24 = arith.constant 0 : index
    %c0_25 = arith.constant 0 : index
    %15 = vector.load %arg2[%c0_23, %c0_24, %c0_25] : memref<3x128x256xf32, #tpu.memory_space<vmem>>, vector<1x128x256xf32>
    %16 = vector.shape_cast %15 : vector<1x128x256xf32> to vector<128x256xf32>
    %cst_26 = arith.constant dense<0.000000e+00> : vector<46x256xf32>
    %17 = tpu.matmul %14, %16, %cst_26 {dimension_numbers = #tpu.dot_dimension_numbers<[1], [0], [0], [1], [0, 0, 1, 1], [], []>} : vector<46x128xf32>, vector<128x256xf32>, vector<46x256xf32> -> vector<46x256xf32>
    %c1 = arith.constant 1 : index
    %c0_27 = arith.constant 0 : index
    %18 = vector.load %arg1[%c1, %c0_27] : memref<48x128xf32, #tpu.memory_space<vmem>>, vector<46x128xf32>
    %c1_28 = arith.constant 1 : index
    %c0_29 = arith.constant 0 : index
    %c0_30 = arith.constant 0 : index
    %19 = vector.load %arg2[%c1_28, %c0_29, %c0_30] : memref<3x128x256xf32, #tpu.memory_space<vmem>>, vector<1x128x256xf32>
    %20 = vector.shape_cast %19 : vector<1x128x256xf32> to vector<128x256xf32>
    %cst_31 = arith.constant dense<0.000000e+00> : vector<46x256xf32>
    %21 = tpu.matmul %18, %20, %cst_31 {dimension_numbers = #tpu.dot_dimension_numbers<[1], [0], [0], [1], [0, 0, 1, 1], [], []>} : vector<46x128xf32>, vector<128x256xf32>, vector<46x256xf32> -> vector<46x256xf32>
    %22 = arith.addf %17, %21 : vector<46x256xf32>
    %c2 = arith.constant 2 : index
    %c0_32 = arith.constant 0 : index
    %23 = vector.load %arg1[%c2, %c0_32] : memref<48x128xf32, #tpu.memory_space<vmem>>, vector<46x128xf32>
    %c2_33 = arith.constant 2 : index
    %c0_34 = arith.constant 0 : index
    %c0_35 = arith.constant 0 : index
    %24 = vector.load %arg2[%c2_33, %c0_34, %c0_35] : memref<3x128x256xf32, #tpu.memory_space<vmem>>, vector<1x128x256xf32>
    %25 = vector.shape_cast %24 : vector<1x128x256xf32> to vector<128x256xf32>
    %cst_36 = arith.constant dense<0.000000e+00> : vector<46x256xf32>
    %26 = tpu.matmul %23, %25, %cst_36 {dimension_numbers = #tpu.dot_dimension_numbers<[1], [0], [0], [1], [0, 0, 1, 1], [], []>} : vector<46x128xf32>, vector<128x256xf32>, vector<46x256xf32> -> vector<46x256xf32>
    %27 = arith.addf %22, %26 : vector<46x256xf32>
    %28 = vector.broadcast %0 : vector<1x256xf32> to vector<46x256xf32>
    %29 = arith.addf %27, %28 : vector<46x256xf32>
    %30 = vector.extract_strided_slice %29 {offsets = [0, 0], sizes = [16, 256], strides = [1, 1]} : vector<46x256xf32> to vector<16x256xf32>
    %cst_37 = arith.constant dense<0.000000e+00> : vector<256xf32>
    %31 = vector.multi_reduction <add>, %30, %cst_37 [0] : vector<16x256xf32> to vector<256xf32>
    %32 = vector.shape_cast %31 : vector<256xf32> to vector<1x256xf32>
    %cst_38 = arith.constant dense<0.000000e+00> : vector<1x8xf32>
    %33 = tpu.matmul %32, %6, %cst_38 {dimension_numbers = #tpu.dot_dimension_numbers<[1], [0], [0], [1], [0, 0, 1, 1], [], []>} : vector<1x256xf32>, vector<256x8xf32>, vector<1x8xf32> -> vector<1x8xf32>
    %cst_39 = arith.constant dense<0.000000e+00> : vector<1x256xf32>
    %34 = tpu.matmul %33, %7, %cst_39 {dimension_numbers = #tpu.dot_dimension_numbers<[1], [0], [0], [1], [0, 0, 1, 1], [], []>} : vector<1x8xf32>, vector<8x256xf32>, vector<1x256xf32> -> vector<1x256xf32>
    %35 = vector.broadcast %34 : vector<1x256xf32> to vector<16x256xf32>
    %36 = arith.subf %30, %35 : vector<16x256xf32>
    %37 = arith.mulf %36, %36 : vector<16x256xf32>
    %cst_40 = arith.constant dense<0.000000e+00> : vector<256xf32>
    %38 = vector.multi_reduction <add>, %37, %cst_40 [0] : vector<16x256xf32> to vector<256xf32>
    %39 = vector.shape_cast %38 : vector<256xf32> to vector<1x256xf32>
    %cst_41 = arith.constant dense<0.000000e+00> : vector<1x8xf32>
    %40 = tpu.matmul %39, %6, %cst_41 {dimension_numbers = #tpu.dot_dimension_numbers<[1], [0], [0], [1], [0, 0, 1, 1], [], []>} : vector<1x256xf32>, vector<256x8xf32>, vector<1x8xf32> -> vector<1x8xf32>
    %cst_42 = arith.constant dense<0.000000e+00> : vector<1x256xf32>
    %41 = tpu.matmul %40, %7, %cst_42 {dimension_numbers = #tpu.dot_dimension_numbers<[1], [0], [0], [1], [0, 0, 1, 1], [], []>} : vector<1x8xf32>, vector<8x256xf32>, vector<1x256xf32> -> vector<1x256xf32>
    %cst_43 = arith.constant 9.99999974E-6 : f32
    %42 = vector.broadcast %cst_43 : f32 to vector<1x256xf32>
    %43 = arith.addf %41, %42 : vector<1x256xf32>
    %44 = math.rsqrt %43 : vector<1x256xf32>
    %45 = vector.broadcast %44 : vector<1x256xf32> to vector<16x256xf32>
    %46 = arith.mulf %36, %45 : vector<16x256xf32>
    %47 = vector.broadcast %1 : vector<1x256xf32> to vector<16x256xf32>
    %48 = arith.mulf %46, %47 : vector<16x256xf32>
    %49 = vector.broadcast %2 : vector<1x256xf32> to vector<16x256xf32>
    %50 = arith.addf %48, %49 : vector<16x256xf32>
    %51 = arith.negf %50 : vector<16x256xf32>
    %52 = math.exp %51 : vector<16x256xf32>
    %cst_44 = arith.constant 1.000000e+00 : f32
    %53 = vector.broadcast %cst_44 : f32 to vector<16x256xf32>
    %54 = arith.addf %53, %52 : vector<16x256xf32>
    %55 = arith.divf %53, %54 : vector<16x256xf32>
    %56 = arith.mulf %50, %55 : vector<16x256xf32>
    %c1_45 = arith.constant 1 : index
    %c0_46 = arith.constant 0 : index
    %57 = vector.load %arg15[%c1_45, %c0_46] : memref<48x256xf32, #tpu.memory_space<vmem>>, vector<16x256xf32>
    tpu.vector_store %arg15[%c1_45, %c0_46], %56 {strides = array<i32>} : memref<48x256xf32, #tpu.memory_space<vmem>>, vector<16x256xf32>,
    %58 = vector.extract_strided_slice %29 {offsets = [24, 0], sizes = [16, 256], strides = [1, 1]} : vector<46x256xf32> to vector<16x256xf32>
    %cst_47 = arith.constant dense<0.000000e+00> : vector<256xf32>
    %59 = vector.multi_reduction <add>, %58, %cst_47 [0] : vector<16x256xf32> to vector<256xf32>
    %60 = vector.shape_cast %59 : vector<256xf32> to vector<1x256xf32>
    %cst_48 = arith.constant dense<0.000000e+00> : vector<1x8xf32>
    %61 = tpu.matmul %60, %6, %cst_48 {dimension_numbers = #tpu.dot_dimension_numbers<[1], [0], [0], [1], [0, 0, 1, 1], [], []>} : vector<1x256xf32>, vector<256x8xf32>, vector<1x8xf32> -> vector<1x8xf32>
    %cst_49 = arith.constant dense<0.000000e+00> : vector<1x256xf32>
    %62 = tpu.matmul %61, %7, %cst_49 {dimension_numbers = #tpu.dot_dimension_numbers<[1], [0], [0], [1], [0, 0, 1, 1], [], []>} : vector<1x8xf32>, vector<8x256xf32>, vector<1x256xf32> -> vector<1x256xf32>
    %63 = vector.broadcast %62 : vector<1x256xf32> to vector<16x256xf32>
    %64 = arith.subf %58, %63 : vector<16x256xf32>
    %65 = arith.mulf %64, %64 : vector<16x256xf32>
    %cst_50 = arith.constant dense<0.000000e+00> : vector<256xf32>
    %66 = vector.multi_reduction <add>, %65, %cst_50 [0] : vector<16x256xf32> to vector<256xf32>
    %67 = vector.shape_cast %66 : vector<256xf32> to vector<1x256xf32>
    %cst_51 = arith.constant dense<0.000000e+00> : vector<1x8xf32>
    %68 = tpu.matmul %67, %6, %cst_51 {dimension_numbers = #tpu.dot_dimension_numbers<[1], [0], [0], [1], [0, 0, 1, 1], [], []>} : vector<1x256xf32>, vector<256x8xf32>, vector<1x8xf32> -> vector<1x8xf32>
    %cst_52 = arith.constant dense<0.000000e+00> : vector<1x256xf32>
    %69 = tpu.matmul %68, %7, %cst_52 {dimension_numbers = #tpu.dot_dimension_numbers<[1], [0], [0], [1], [0, 0, 1, 1], [], []>} : vector<1x8xf32>, vector<8x256xf32>, vector<1x256xf32> -> vector<1x256xf32>
    %cst_53 = arith.constant 9.99999974E-6 : f32
    %70 = vector.broadcast %cst_53 : f32 to vector<1x256xf32>
    %71 = arith.addf %69, %70 : vector<1x256xf32>
    %72 = math.rsqrt %71 : vector<1x256xf32>
    %73 = vector.broadcast %72 : vector<1x256xf32> to vector<16x256xf32>
    %74 = arith.mulf %64, %73 : vector<16x256xf32>
    %75 = vector.broadcast %1 : vector<1x256xf32> to vector<16x256xf32>
    %76 = arith.mulf %74, %75 : vector<16x256xf32>
    %77 = vector.broadcast %2 : vector<1x256xf32> to vector<16x256xf32>
    %78 = arith.addf %76, %77 : vector<16x256xf32>
    %79 = arith.negf %78 : vector<16x256xf32>
    %80 = math.exp %79 : vector<16x256xf32>
    %cst_54 = arith.constant 1.000000e+00 : f32
    %81 = vector.broadcast %cst_54 : f32 to vector<16x256xf32>
    %82 = arith.addf %81, %80 : vector<16x256xf32>
    %83 = arith.divf %81, %82 : vector<16x256xf32>
    %84 = arith.mulf %78, %83 : vector<16x256xf32>
    %c25 = arith.constant 25 : index
    %c0_55 = arith.constant 0 : index
    %85 = vector.load %arg15[%c25, %c0_55] : memref<48x256xf32, #tpu.memory_space<vmem>>, vector<16x256xf32>
    tpu.vector_store %arg15[%c25, %c0_55], %84 {strides = array<i32>} : memref<48x256xf32, #tpu.memory_space<vmem>>, vector<16x256xf32>,
    %c0_56 = arith.constant 0 : index
    %c0_57 = arith.constant 0 : index
    %86 = vector.load %arg15[%c0_56, %c0_57] : memref<48x256xf32, #tpu.memory_space<vmem>>, vector<46x256xf32>
    %c0_58 = arith.constant 0 : index
    %c0_59 = arith.constant 0 : index
    %c0_60 = arith.constant 0 : index
    %87 = vector.load %arg6[%c0_58, %c0_59, %c0_60] : memref<3x256x256xf32, #tpu.memory_space<vmem>>, vector<1x256x256xf32>
    %88 = vector.shape_cast %87 : vector<1x256x256xf32> to vector<256x256xf32>
    %cst_61 = arith.constant dense<0.000000e+00> : vector<46x256xf32>
    %89 = tpu.matmul %86, %88, %cst_61 {dimension_numbers = #tpu.dot_dimension_numbers<[1], [0], [0], [1], [0, 0, 1, 1], [], []>} : vector<46x256xf32>, vector<256x256xf32>, vector<46x256xf32> -> vector<46x256xf32>
    %c1_62 = arith.constant 1 : index
    %c0_63 = arith.constant 0 : index
    %90 = vector.load %arg15[%c1_62, %c0_63] : memref<48x256xf32, #tpu.memory_space<vmem>>, vector<46x256xf32>
    %c1_64 = arith.constant 1 : index
    %c0_65 = arith.constant 0 : index
    %c0_66 = arith.constant 0 : index
    %91 = vector.load %arg6[%c1_64, %c0_65, %c0_66] : memref<3x256x256xf32, #tpu.memory_space<vmem>>, vector<1x256x256xf32>
    %92 = vector.shape_cast %91 : vector<1x256x256xf32> to vector<256x256xf32>
    %cst_67 = arith.constant dense<0.000000e+00> : vector<46x256xf32>
    %93 = tpu.matmul %90, %92, %cst_67 {dimension_numbers = #tpu.dot_dimension_numbers<[1], [0], [0], [1], [0, 0, 1, 1], [], []>} : vector<46x256xf32>, vector<256x256xf32>, vector<46x256xf32> -> vector<46x256xf32>
    %94 = arith.addf %89, %93 : vector<46x256xf32>
    %c2_68 = arith.constant 2 : index
    %c0_69 = arith.constant 0 : index
    %95 = vector.load %arg15[%c2_68, %c0_69] : memref<48x256xf32, #tpu.memory_space<vmem>>, vector<46x256xf32>
    %c2_70 = arith.constant 2 : index
    %c0_71 = arith.constant 0 : index
    %c0_72 = arith.constant 0 : index
    %96 = vector.load %arg6[%c2_70, %c0_71, %c0_72] : memref<3x256x256xf32, #tpu.memory_space<vmem>>, vector<1x256x256xf32>
    %97 = vector.shape_cast %96 : vector<1x256x256xf32> to vector<256x256xf32>
    %cst_73 = arith.constant dense<0.000000e+00> : vector<46x256xf32>
    %98 = tpu.matmul %95, %97, %cst_73 {dimension_numbers = #tpu.dot_dimension_numbers<[1], [0], [0], [1], [0, 0, 1, 1], [], []>} : vector<46x256xf32>, vector<256x256xf32>, vector<46x256xf32> -> vector<46x256xf32>
    %99 = arith.addf %94, %98 : vector<46x256xf32>
    %100 = vector.broadcast %3 : vector<1x256xf32> to vector<46x256xf32>
    %101 = arith.addf %99, %100 : vector<46x256xf32>
    %c0_74 = arith.constant 0 : index
    %c0_75 = arith.constant 0 : index
    %102 = vector.load %arg1[%c0_74, %c0_75] : memref<48x128xf32, #tpu.memory_space<vmem>>, vector<48x128xf32>
    %c0_76 = arith.constant 0 : index
    %c0_77 = arith.constant 0 : index
    %103 = vector.load %arg12[%c0_76, %c0_77] : memref<128x256xf32, #tpu.memory_space<vmem>>, vector<128x256xf32>
    %cst_78 = arith.constant dense<0.000000e+00> : vector<48x256xf32>
    %104 = tpu.matmul %102, %103, %cst_78 {dimension_numbers = #tpu.dot_dimension_numbers<[1], [0], [0], [1], [0, 0, 1, 1], [], []>} : vector<48x128xf32>, vector<128x256xf32>, vector<48x256xf32> -> vector<48x256xf32>
    %c0_79 = arith.constant 0 : index
    %c0_80 = arith.constant 0 : index
    %105 = vector.load %arg13[%c0_79, %c0_80] : memref<1x256xf32, #tpu.memory_space<vmem>>, vector<1x256xf32>
    %106 = vector.broadcast %105 : vector<1x256xf32> to vector<48x256xf32>
    %107 = arith.addf %104, %106 : vector<48x256xf32>
    %108 = vector.extract_strided_slice %101 {offsets = [0, 0], sizes = [16, 256], strides = [1, 1]} : vector<46x256xf32> to vector<16x256xf32>
    %cst_81 = arith.constant dense<0.000000e+00> : vector<256xf32>
    %109 = vector.multi_reduction <add>, %108, %cst_81 [0] : vector<16x256xf32> to vector<256xf32>
    %110 = vector.shape_cast %109 : vector<256xf32> to vector<1x256xf32>
    %cst_82 = arith.constant dense<0.000000e+00> : vector<1x8xf32>
    %111 = tpu.matmul %110, %6, %cst_82 {dimension_numbers = #tpu.dot_dimension_numbers<[1], [0], [0], [1], [0, 0, 1, 1], [], []>} : vector<1x256xf32>, vector<256x8xf32>, vector<1x8xf32> -> vector<1x8xf32>
    %cst_83 = arith.constant dense<0.000000e+00> : vector<1x256xf32>
    %112 = tpu.matmul %111, %7, %cst_83 {dimension_numbers = #tpu.dot_dimension_numbers<[1], [0], [0], [1], [0, 0, 1, 1], [], []>} : vector<1x8xf32>, vector<8x256xf32>, vector<1x256xf32> -> vector<1x256xf32>
    %113 = vector.broadcast %112 : vector<1x256xf32> to vector<16x256xf32>
    %114 = arith.subf %108, %113 : vector<16x256xf32>
    %115 = arith.mulf %114, %114 : vector<16x256xf32>
    %cst_84 = arith.constant dense<0.000000e+00> : vector<256xf32>
    %116 = vector.multi_reduction <add>, %115, %cst_84 [0] : vector<16x256xf32> to vector<256xf32>
    %117 = vector.shape_cast %116 : vector<256xf32> to vector<1x256xf32>
    %cst_85 = arith.constant dense<0.000000e+00> : vector<1x8xf32>
    %118 = tpu.matmul %117, %6, %cst_85 {dimension_numbers = #tpu.dot_dimension_numbers<[1], [0], [0], [1], [0, 0, 1, 1], [], []>} : vector<1x256xf32>, vector<256x8xf32>, vector<1x8xf32> -> vector<1x8xf32>
    %cst_86 = arith.constant dense<0.000000e+00> : vector<1x256xf32>
    %119 = tpu.matmul %118, %7, %cst_86 {dimension_numbers = #tpu.dot_dimension_numbers<[1], [0], [0], [1], [0, 0, 1, 1], [], []>} : vector<1x8xf32>, vector<8x256xf32>, vector<1x256xf32> -> vector<1x256xf32>
    %cst_87 = arith.constant 9.99999974E-6 : f32
    %120 = vector.broadcast %cst_87 : f32 to vector<1x256xf32>
    %121 = arith.addf %119, %120 : vector<1x256xf32>
    %122 = math.rsqrt %121 : vector<1x256xf32>
    %123 = vector.broadcast %122 : vector<1x256xf32> to vector<16x256xf32>
    %124 = arith.mulf %114, %123 : vector<16x256xf32>
    %125 = vector.broadcast %4 : vector<1x256xf32> to vector<16x256xf32>
    %126 = arith.mulf %124, %125 : vector<16x256xf32>
    %127 = vector.broadcast %5 : vector<1x256xf32> to vector<16x256xf32>
    %128 = arith.addf %126, %127 : vector<16x256xf32>
    %129 = arith.negf %128 : vector<16x256xf32>
    %130 = math.exp %129 : vector<16x256xf32>
    %cst_88 = arith.constant 1.000000e+00 : f32
    %131 = vector.broadcast %cst_88 : f32 to vector<16x256xf32>
    %132 = arith.addf %131, %130 : vector<16x256xf32>
    %133 = arith.divf %131, %132 : vector<16x256xf32>
    %134 = arith.mulf %128, %133 : vector<16x256xf32>
    %135 = vector.extract_strided_slice %107 {offsets = [1, 0], sizes = [16, 256], strides = [1, 1]} : vector<48x256xf32> to vector<16x256xf32>
    %136 = arith.addf %134, %135 : vector<16x256xf32>
    %c0_89 = arith.constant 0 : index
    %c0_90 = arith.constant 0 : index
    %137 = vector.load %arg14[%c0_89, %c0_90] : memref<32x256xf32, #tpu.memory_space<vmem>>, vector<16x256xf32>
    tpu.vector_store %arg14[%c0_89, %c0_90], %136 {strides = array<i32>} : memref<32x256xf32, #tpu.memory_space<vmem>>, vector<16x256xf32>,
    %138 = vector.extract_strided_slice %101 {offsets = [24, 0], sizes = [16, 256], strides = [1, 1]} : vector<46x256xf32> to vector<16x256xf32>
    %cst_91 = arith.constant dense<0.000000e+00> : vector<256xf32>
    %139 = vector.multi_reduction <add>, %138, %cst_91 [0] : vector<16x256xf32> to vector<256xf32>
    %140 = vector.shape_cast %139 : vector<256xf32> to vector<1x256xf32>
    %cst_92 = arith.constant dense<0.000000e+00> : vector<1x8xf32>
    %141 = tpu.matmul %140, %6, %cst_92 {dimension_numbers = #tpu.dot_dimension_numbers<[1], [0], [0], [1], [0, 0, 1, 1], [], []>} : vector<1x256xf32>, vector<256x8xf32>, vector<1x8xf32> -> vector<1x8xf32>
    %cst_93 = arith.constant dense<0.000000e+00> : vector<1x256xf32>
    %142 = tpu.matmul %141, %7, %cst_93 {dimension_numbers = #tpu.dot_dimension_numbers<[1], [0], [0], [1], [0, 0, 1, 1], [], []>} : vector<1x8xf32>, vector<8x256xf32>, vector<1x256xf32> -> vector<1x256xf32>
    %143 = vector.broadcast %142 : vector<1x256xf32> to vector<16x256xf32>
    %144 = arith.subf %138, %143 : vector<16x256xf32>
    %145 = arith.mulf %144, %144 : vector<16x256xf32>
    %cst_94 = arith.constant dense<0.000000e+00> : vector<256xf32>
    %146 = vector.multi_reduction <add>, %145, %cst_94 [0] : vector<16x256xf32> to vector<256xf32>
    %147 = vector.shape_cast %146 : vector<256xf32> to vector<1x256xf32>
    %cst_95 = arith.constant dense<0.000000e+00> : vector<1x8xf32>
    %148 = tpu.matmul %147, %6, %cst_95 {dimension_numbers = #tpu.dot_dimension_numbers<[1], [0], [0], [1], [0, 0, 1, 1], [], []>} : vector<1x256xf32>, vector<256x8xf32>, vector<1x8xf32> -> vector<1x8xf32>
    %cst_96 = arith.constant dense<0.000000e+00> : vector<1x256xf32>
    %149 = tpu.matmul %148, %7, %cst_96 {dimension_numbers = #tpu.dot_dimension_numbers<[1], [0], [0], [1], [0, 0, 1, 1], [], []>} : vector<1x8xf32>, vector<8x256xf32>, vector<1x256xf32> -> vector<1x256xf32>
    %cst_97 = arith.constant 9.99999974E-6 : f32
    %150 = vector.broadcast %cst_97 : f32 to vector<1x256xf32>
    %151 = arith.addf %149, %150 : vector<1x256xf32>
    %152 = math.rsqrt %151 : vector<1x256xf32>
    %153 = vector.broadcast %152 : vector<1x256xf32> to vector<16x256xf32>
    %154 = arith.mulf %144, %153 : vector<16x256xf32>
    %155 = vector.broadcast %4 : vector<1x256xf32> to vector<16x256xf32>
    %156 = arith.mulf %154, %155 : vector<16x256xf32>
    %157 = vector.broadcast %5 : vector<1x256xf32> to vector<16x256xf32>
    %158 = arith.addf %156, %157 : vector<16x256xf32>
    %159 = arith.negf %158 : vector<16x256xf32>
    %160 = math.exp %159 : vector<16x256xf32>
    %cst_98 = arith.constant 1.000000e+00 : f32
    %161 = vector.broadcast %cst_98 : f32 to vector<16x256xf32>
    %162 = arith.addf %161, %160 : vector<16x256xf32>
    %163 = arith.divf %161, %162 : vector<16x256xf32>
    %164 = arith.mulf %158, %163 : vector<16x256xf32>
    %165 = vector.extract_strided_slice %107 {offsets = [25, 0], sizes = [16, 256], strides = [1, 1]} : vector<48x256xf32> to vector<16x256xf32>
    %166 = arith.addf %164, %165 : vector<16x256xf32>
    %c16 = arith.constant 16 : index
    %c0_99 = arith.constant 0 : index
    %167 = vector.load %arg14[%c16, %c0_99] : memref<32x256xf32, #tpu.memory_space<vmem>>, vector<16x256xf32>
    tpu.vector_store %arg14[%c16, %c0_99], %166 {strides = array<i32>} : memref<32x256xf32, #tpu.memory_space<vmem>>, vector<16x256xf32>,
    return
  }
  func.func @transform_0(%arg0: i32) -> (i32, i32) {
    %c0_i32 = arith.constant 0 : i32
    %c0_i32_0 = arith.constant 0 : i32
    return %arg0, %c0_i32 : i32, i32
  }
  func.func @transform_1(%arg0: i32) -> (i32, i32, i32) {
    %c0_i32 = arith.constant 0 : i32
    %c0_i32_0 = arith.constant 0 : i32
    %c0_i32_1 = arith.constant 0 : i32
    %c0_i32_2 = arith.constant 0 : i32
    return %c0_i32, %c0_i32_0, %c0_i32_1 : i32, i32, i32
  }
  func.func @transform_2(%arg0: i32) -> (i32, i32) {
    %c0_i32 = arith.constant 0 : i32
    %c0_i32_0 = arith.constant 0 : i32
    %c0_i32_1 = arith.constant 0 : i32
    return %c0_i32, %c0_i32_0 : i32, i32
  }
  func.func @transform_3(%arg0: i32) -> (i32, i32) {
    %c0_i32 = arith.constant 0 : i32
    %c0_i32_0 = arith.constant 0 : i32
    %c0_i32_1 = arith.constant 0 : i32
    return %c0_i32, %c0_i32_0 : i32, i32
  }
  func.func @transform_4(%arg0: i32) -> (i32, i32) {
    %c0_i32 = arith.constant 0 : i32
    %c0_i32_0 = arith.constant 0 : i32
    %c0_i32_1 = arith.constant 0 : i32
    return %c0_i32, %c0_i32_0 : i32, i32
  }
  func.func @transform_5(%arg0: i32) -> (i32, i32, i32) {
    %c0_i32 = arith.constant 0 : i32
    %c0_i32_0 = arith.constant 0 : i32
    %c0_i32_1 = arith.constant 0 : i32
    %c0_i32_2 = arith.constant 0 : i32
    return %c0_i32, %c0_i32_0, %c0_i32_1 : i32, i32, i32
  }
  func.func @transform_6(%arg0: i32) -> (i32, i32) {
    %c0_i32 = arith.constant 0 : i32
    %c0_i32_0 = arith.constant 0 : i32
    %c0_i32_1 = arith.constant 0 : i32
    return %c0_i32, %c0_i32_0 : i32, i32
  }
  func.func @transform_7(%arg0: i32) -> (i32, i32) {
    %c0_i32 = arith.constant 0 : i32
    %c0_i32_0 = arith.constant 0 : i32
    %c0_i32_1 = arith.constant 0 : i32
    return %c0_i32, %c0_i32_0 : i32, i32
  }
  func.func @transform_8(%arg0: i32) -> (i32, i32) {
    %c0_i32 = arith.constant 0 : i32
    %c0_i32_0 = arith.constant 0 : i32
    %c0_i32_1 = arith.constant 0 : i32
    return %c0_i32, %c0_i32_0 : i32, i32
  }
  func.func @transform_9(%arg0: i32) -> (i32, i32) {
    %c0_i32 = arith.constant 0 : i32
    %c0_i32_0 = arith.constant 0 : i32
    %c0_i32_1 = arith.constant 0 : i32
    return %c0_i32, %c0_i32_0 : i32, i32
  }
  func.func @transform_10(%arg0: i32) -> (i32, i32) {
    %c0_i32 = arith.constant 0 : i32
    %c0_i32_0 = arith.constant 0 : i32
    %c0_i32_1 = arith.constant 0 : i32
    return %c0_i32, %c0_i32_0 : i32, i32
  }
  func.func @transform_11(%arg0: i32) -> (i32, i32) {
    %c0_i32 = arith.constant 0 : i32
    %c0_i32_0 = arith.constant 0 : i32
    %c0_i32_1 = arith.constant 0 : i32
    return %c0_i32, %c0_i32_0 : i32, i32
  }
  func.func @transform_12(%arg0: i32) -> (i32, i32) {
    %c0_i32 = arith.constant 0 : i32
    %c0_i32_0 = arith.constant 0 : i32
    %c0_i32_1 = arith.constant 0 : i32
    return %c0_i32, %c0_i32_0 : i32, i32
  }
  func.func @transform_13(%arg0: i32) -> (i32, i32) {
    %c0_i32 = arith.constant 0 : i32
    %c0_i32_0 = arith.constant 0 : i32
    return %arg0, %c0_i32 : i32, i32
  }
}

</mosaic_0001>

<llo_original>
// kernel: tile.73
$region0: #{tile.73}
  #allocation0 [shape = 's32[1]{0}', space=sflag, size = 0x4, scoped, tag = 'scoped memory for tile.73']
  %s0 = inlined_call_operand.vmem [shape: s32[16], index: 0, kind: input, shape index: {}]
  %s1 = inlined_call_operand.vmem [shape: s32[16,16], index: 1, kind: output, shape index: {}]
  // Predicated region
  $region2: #{tile.73} parent=0 // pred_check
    _
  $region3: #{tile.73} parent=0 // pred_check_branch
    %3 = sbr.rel (0) target = $region5
  $region4: #{tile.73} parent=0 // pred_region
    _
  $region5: #{tile.73} parent=0 // pred_fallthru
    _
  %v4 = vld [vmem:[%s0] ss:$0 sm:$0xff]
  %5 = vst [vmem:[%s1] sm:$0xff] %v4
  %s6 = scalar_lea.vmem %s1, 8
  %7 = vst [vmem:[%s6] sm:$0xff] %v4

// kernel: eq.9
$region0: #{eq.9}
  %s0 = inlined_call_operand.vmem [shape: s32[16,16], index: 0, kind: input, shape index: {}]
  %s1 = inlined_call_operand.vmem [shape: s32[256], index: 1, kind: output, shape index: {}]
  $region1: #{eq.9} parent=0
    #allocation0 [shape = 'u8[4096]{0}', space=vmem, size = 0x1000, scoped, tag = 'scoped mem for output reshape']
    %s2 = smov 3
    %v3 = vld [vmem:[%s0] ss:$8 sm:%s2]
    %vm4 = vcmask 130048
    %5 = vst.msk [vmem:[#allocation0] sm:$0x3] %vm4, %v3
    %s6 = scalar_lea.vmem %s0, 7
    %s7 = smov 3
    %v8 = vld [vmem:[%s6] ss:$8 sm:%s7]
    %9 = vrot.lane.b32.xlu0 %v8, 112
    %v10 = vpop.permute.xlu0 %9
    %vm11 = vcmask 1048448
    %12 = vst.msk [vmem:[#allocation0] sm:$0x3] %vm11, %v10
    %s13 = scalar_lea.vmem %s0, 6
    %s14 = smov 3
    %v15 = vld [vmem:[%s13] ss:$8 sm:%s14]
    %16 = vrot.lane.b32.xlu0 %v15, 96
    %v17 = vpop.permute.xlu0 %16
    %vm18 = vcmask 917248
    %19 = vst.msk [vmem:[#allocation0] sm:$0x3] %vm18, %v17
    %s20 = scalar_lea.vmem %s0, 5
    %s21 = smov 3
    %v22 = vld [vmem:[%s20] ss:$8 sm:%s21]
    %23 = vrot.lane.b32.xlu0 %v22, 80
    %v24 = vpop.permute.xlu0 %23
    %vm25 = vcmask 786048
    %26 = vst.msk [vmem:[#allocation0] sm:$0x3] %vm25, %v24
    %s27 = scalar_lea.vmem %s0, 4
    %s28 = smov 3
    %v29 = vld [vmem:[%s27] ss:$8 sm:%s28]
    %30 = vrot.lane.b32.xlu0 %v29, 64
    %v31 = vpop.permute.xlu0 %30
    %vm32 = vcmask 654848
    %33 = vst.msk [vmem:[#allocation0] sm:$0x3] %vm32, %v31
    %s34 = scalar_lea.vmem %s0, 3
    %s35 = smov 3
    %v36 = vld [vmem:[%s34] ss:$8 sm:%s35]
    %37 = vrot.lane.b32.xlu0 %v36, 48
    %v38 = vpop.permute.xlu0 %37
    %vm39 = vcmask 523648
    %40 = vst.msk [vmem:[#allocation0] sm:$0x3] %vm39, %v38
    %s41 = scalar_lea.vmem %s0, 2
    %s42 = smov 3
    %v43 = vld [vmem:[%s41] ss:$8 sm:%s42]
    %44 = vrot.lane.b32.xlu0 %v43, 32
    %v45 = vpop.permute.xlu0 %44
    %vm46 = vcmask 392448
    %47 = vst.msk [vmem:[#allocation0] sm:$0x3] %vm46, %v45
    %s48 = scalar_lea.vmem %s0, 1
    %s49 = smov 3
    %v50 = vld [vmem:[%s48] ss:$8 sm:%s49]
    %51 = vrot.lane.b32.xlu0 %v50, 16
    %v52 = vpop.permute.xlu0 %51
    %vm53 = vcmask 261248
    %54 = vst.msk [vmem:[#allocation0] sm:$0x3] %vm53, %v52
    %s56 = sshll.u32 1, 2
    %s57 = ssub.s32 %s56, 1
    %v59 = vld [vmem:[#allocation0] sm:%s57]
    %s60 = sshll.u32 1, 2
    %s61 = ssub.s32 %s60, 1
    %62 = vst [vmem:[%s1] sm:%s61] %v59

// kernel: resnet_block.1
$region0: #{resnet_block.1}
  #allocation0 [shape = 'u32[]', space=smem, size = 0x4, offset = 0x4, fixed_abs, tag = 'smem constant byte address 0x4 - core index']
  #allocation1 [shape = 'u32[144,128]{1,0:T(1,128)}', space=vmem, size = 0x12000, scoped, tag = 'internal scratch']
  #allocation2 [shape = 'f32[48,256]{1,0:T(8,128)}', space=vmem, size = 0xc000, scoped, tag = 'scratch operand']
  %s0 = inlined_call_operand.vmem [shape: f32[48,128], index: 0, kind: input, shape index: {}]
  %s1 = inlined_call_operand.vmem [shape: f32[3,128,256], index: 1, kind: input, shape index: {}]
  %s2 = inlined_call_operand.vmem [shape: f32[1,256], index: 2, kind: input, shape index: {}]
  %s3 = inlined_call_operand.vmem [shape: f32[1,256], index: 3, kind: input, shape index: {}]
  %s4 = inlined_call_operand.vmem [shape: f32[1,256], index: 4, kind: input, shape index: {}]
  %s5 = inlined_call_operand.vmem [shape: f32[3,256,256], index: 5, kind: input, shape index: {}]
  %s6 = inlined_call_operand.vmem [shape: f32[1,256], index: 6, kind: input, shape index: {}]
  %s7 = inlined_call_operand.vmem [shape: f32[1,256], index: 7, kind: input, shape index: {}]
  %s8 = inlined_call_operand.vmem [shape: f32[1,256], index: 8, kind: input, shape index: {}]
  %s9 = inlined_call_operand.vmem [shape: f32[256,8], index: 9, kind: input, shape index: {}]
  %s10 = inlined_call_operand.vmem [shape: f32[8,256], index: 10, kind: input, shape index: {}]
  %s11 = inlined_call_operand.vmem [shape: f32[128,256], index: 11, kind: input, shape index: {}]
  %s12 = inlined_call_operand.vmem [shape: f32[1,256], index: 12, kind: input, shape index: {}]
  %s13 = inlined_call_operand.vmem [shape: f32[32,256], index: 13, kind: output, shape index: {}]
  %s14 = sld [smem:[#allocation0]]
  $region62: #{resnet_block.1} parent=0
    _
  %s16 = ssub.s32 1, %s14
  %s17 = scalar_select 0, %s16, %s14
  // Predicated region
  $region2: #{resnet_block.1} parent=0 // pred_check
    _
  $region3: #{resnet_block.1} parent=0 // pred_check_branch
    %19 = sbr.rel (0) target = $region5
  $region4: #{resnet_block.1} parent=0 // pred_region
    _
  $region5: #{resnet_block.1} parent=0 // pred_fallthru
    _
  // Predicated region
  $region6: #{resnet_block.1} parent=0 // pred_check
    _
  $region7: #{resnet_block.1} parent=0 // pred_check_branch
    %21 = sbr.rel (0) target = $region9
  $region8: #{resnet_block.1} parent=0 // pred_region
    _
  $region9: #{resnet_block.1} parent=0 // pred_fallthru
    _
  // Predicated region
  $region10: #{resnet_block.1} parent=0 // pred_check
    _
  $region11: #{resnet_block.1} parent=0 // pred_check_branch
    %23 = sbr.rel (0) target = $region13
  $region12: #{resnet_block.1} parent=0 // pred_region
    _
  $region13: #{resnet_block.1} parent=0 // pred_fallthru
    _
  // Predicated region
  $region14: #{resnet_block.1} parent=0 // pred_check
    _
  $region15: #{resnet_block.1} parent=0 // pred_check_branch
    %25 = sbr.rel (0) target = $region17
  $region16: #{resnet_block.1} parent=0 // pred_region
    _
  $region17: #{resnet_block.1} parent=0 // pred_fallthru
    _
  // Predicated region
  $region18: #{resnet_block.1} parent=0 // pred_check
    _
  $region19: #{resnet_block.1} parent=0 // pred_check_branch
    %27 = sbr.rel (0) target = $region21
  $region20: #{resnet_block.1} parent=0 // pred_region
    _
  $region21: #{resnet_block.1} parent=0 // pred_fallthru
    _
  // Predicated region
  $region22: #{resnet_block.1} parent=0 // pred_check
    _
  $region23: #{resnet_block.1} parent=0 // pred_check_branch
    %29 = sbr.rel (0) target = $region25
  $region24: #{resnet_block.1} parent=0 // pred_region
    _
  $region25: #{resnet_block.1} parent=0 // pred_fallthru
    _
  // Predicated region
  $region26: #{resnet_block.1} parent=0 // pred_check
    _
  $region27: #{resnet_block.1} parent=0 // pred_check_branch
    %31 = sbr.rel (0) target = $region29
  $region28: #{resnet_block.1} parent=0 // pred_region
    _
  $region29: #{resnet_block.1} parent=0 // pred_fallthru
    _
  // Predicated region
  $region30: #{resnet_block.1} parent=0 // pred_check
    _
  $region31: #{resnet_block.1} parent=0 // pred_check_branch
    %33 = sbr.rel (0) target = $region33
  $region32: #{resnet_block.1} parent=0 // pred_region
    _
  $region33: #{resnet_block.1} parent=0 // pred_fallthru
    _
  // Predicated region
  $region34: #{resnet_block.1} parent=0 // pred_check
    _
  $region35: #{resnet_block.1} parent=0 // pred_check_branch
    %35 = sbr.rel (0) target = $region37
  $region36: #{resnet_block.1} parent=0 // pred_region
    _
  $region37: #{resnet_block.1} parent=0 // pred_fallthru
    _
  // Predicated region
  $region38: #{resnet_block.1} parent=0 // pred_check
    _
  $region39: #{resnet_block.1} parent=0 // pred_check_branch
    %37 = sbr.rel (0) target = $region41
  $region40: #{resnet_block.1} parent=0 // pred_region
    _
  $region41: #{resnet_block.1} parent=0 // pred_fallthru
    _
  // Predicated region
  $region42: #{resnet_block.1} parent=0 // pred_check
    _
  $region43: #{resnet_block.1} parent=0 // pred_check_branch
    %39 = sbr.rel (0) target = $region45
  $region44: #{resnet_block.1} parent=0 // pred_region
    _
  $region45: #{resnet_block.1} parent=0 // pred_fallthru
    _
  // Predicated region
  $region46: #{resnet_block.1} parent=0 // pred_check
    _
  $region47: #{resnet_block.1} parent=0 // pred_check_branch
    %41 = sbr.rel (0) target = $region49
  $region48: #{resnet_block.1} parent=0 // pred_region
    _
  $region49: #{resnet_block.1} parent=0 // pred_fallthru
    _
  // Predicated region
  $region50: #{resnet_block.1} parent=0 // pred_check
    _
  $region51: #{resnet_block.1} parent=0 // pred_check_branch
    %43 = sbr.rel (0) target = $region53
  $region52: #{resnet_block.1} parent=0 // pred_region
    _
  $region53: #{resnet_block.1} parent=0 // pred_fallthru
    _
  %v44 = vld [vmem:[%s2] sm:$0x3]
  %v45 = vld [vmem:[%s3] sm:$0x3]
  %v46 = vld [vmem:[%s4] sm:$0x3]
  %v47 = vld [vmem:[%s6] sm:$0x3]
  %v48 = vld [vmem:[%s7] sm:$0x3]
  %v49 = vld [vmem:[%s8] sm:$0x3]
  %v50 = vld [vmem:[%s9] sm:$0xff]
  %v51 = vld [vmem:[%s9 + $0x8] sm:$0xff]
  %v52 = vld [vmem:[%s9 + $0x10] sm:$0xff]
  %v53 = vld [vmem:[%s9 + $0x18] sm:$0xff]
  %v54 = vld [vmem:[%s9 + $0x20] sm:$0xff]
  %v55 = vld [vmem:[%s9 + $0x28] sm:$0xff]
  %v56 = vld [vmem:[%s9 + $0x30] sm:$0xff]
  %v57 = vld [vmem:[%s9 + $0x38] sm:$0xff]
  %v58 = vld [vmem:[%s9 + $0x40] sm:$0xff]
  %v59 = vld [vmem:[%s9 + $0x48] sm:$0xff]
  %v60 = vld [vmem:[%s9 + $0x50] sm:$0xff]
  %v61 = vld [vmem:[%s9 + $0x58] sm:$0xff]
  %v62 = vld [vmem:[%s9 + $0x60] sm:$0xff]
  %v63 = vld [vmem:[%s9 + $0x68] sm:$0xff]
  %v64 = vld [vmem:[%s9 + $0x70] sm:$0xff]
  %v65 = vld [vmem:[%s9 + $0x78] sm:$0xff]
  %v66 = vld [vmem:[%s9 + $0x80] sm:$0xff]
  %v67 = vld [vmem:[%s9 + $0x88] sm:$0xff]
  %v68 = vld [vmem:[%s9 + $0x90] sm:$0xff]
  %v69 = vld [vmem:[%s9 + $0x98] sm:$0xff]
  %v70 = vld [vmem:[%s9 + $0xa0] sm:$0xff]
  %v71 = vld [vmem:[%s9 + $0xa8] sm:$0xff]
  %v72 = vld [vmem:[%s9 + $0xb0] sm:$0xff]
  %v73 = vld [vmem:[%s9 + $0xb8] sm:$0xff]
  %v74 = vld [vmem:[%s9 + $0xc0] sm:$0xff]
  %v75 = vld [vmem:[%s9 + $0xc8] sm:$0xff]
  %v76 = vld [vmem:[%s9 + $0xd0] sm:$0xff]
  %v77 = vld [vmem:[%s9 + $0xd8] sm:$0xff]
  %v78 = vld [vmem:[%s9 + $0xe0] sm:$0xff]
  %v79 = vld [vmem:[%s9 + $0xe8] sm:$0xff]
  %v80 = vld [vmem:[%s9 + $0xf0] sm:$0xff]
  %v81 = vld [vmem:[%s9 + $0xf8] sm:$0xff]
  %v82 = vld [vmem:[%s10] sm:$0xff]
  %v83 = vld [vmem:[%s10 + $0x8] sm:$0xff]
  %v84 = vlaneseq
  %vm85 = vcmp.ge.s32.totalorder %v84, 0
  %vm86 = vcmp.lt.s32.totalorder %v84, 256
  %vm87 = vmand %vm85, %vm86
  %88 = vst.msk [vmem:[#allocation2] ss:$8 sm:$0x3] %vm87, 0.0
  %89 = vst.msk [vmem:[#allocation2] ss:$8 sm:$0x0] %vm87, 0.0
  %90 = vst [vmem:[#allocation2 + $0x20] sm:$0xfe] 0.0
  %91 = vst [vmem:[#allocation2 + $0x28] sm:$0xfe] 0.0
  %s92 = scalar_lea.vmem [#allocation2], 48
  %93 = vst.msk [vmem:[%s92] ss:$8 sm:$0x3] %vm87, 0.0
  %94 = vst.msk [vmem:[%s92] ss:$8 sm:$0x0] %vm87, 0.0
  %95 = vst [vmem:[#allocation2 + $0x50] sm:$0xfe] 0.0
  %96 = vst [vmem:[#allocation2 + $0x58] sm:$0xfe] 0.0
  %v97 = vld [vmem:[%s0] sm:$0xff]
  %v98 = vld [vmem:[%s0 + $0x8] sm:$0xff]
  %v99 = vld [vmem:[%s0 + $0x10] sm:$0xff]
  %v100 = vld [vmem:[%s0 + $0x18] sm:$0xff]
  %v101 = vld [vmem:[%s0 + $0x20] sm:$0xff]
  %v102 = vld [vmem:[%s0 + $0x28] sm:$0x3f]
  %v103 = vld [vmem:[%s1] sm:$0xff]
  %v104 = vld [vmem:[%s1 + $0x8] sm:$0xff]
  %v105 = vld [vmem:[%s1 + $0x10] sm:$0xff]
  %v106 = vld [vmem:[%s1 + $0x18] sm:$0xff]
  %v107 = vld [vmem:[%s1 + $0x20] sm:$0xff]
  %v108 = vld [vmem:[%s1 + $0x28] sm:$0xff]
  %v109 = vld [vmem:[%s1 + $0x30] sm:$0xff]
  %v110 = vld [vmem:[%s1 + $0x38] sm:$0xff]
  %v111 = vld [vmem:[%s1 + $0x40] sm:$0xff]
  %v112 = vld [vmem:[%s1 + $0x48] sm:$0xff]
  %v113 = vld [vmem:[%s1 + $0x50] sm:$0xff]
  %v114 = vld [vmem:[%s1 + $0x58] sm:$0xff]
  %v115 = vld [vmem:[%s1 + $0x60] sm:$0xff]
  %v116 = vld [vmem:[%s1 + $0x68] sm:$0xff]
  %v117 = vld [vmem:[%s1 + $0x70] sm:$0xff]
  %v118 = vld [vmem:[%s1 + $0x78] sm:$0xff]
  %v119 = vld [vmem:[%s1 + $0x80] sm:$0xff]
  %v120 = vld [vmem:[%s1 + $0x88] sm:$0xff]
  %v121 = vld [vmem:[%s1 + $0x90] sm:$0xff]
  %v122 = vld [vmem:[%s1 + $0x98] sm:$0xff]
  %v123 = vld [vmem:[%s1 + $0xa0] sm:$0xff]
  %v124 = vld [vmem:[%s1 + $0xa8] sm:$0xff]
  %v125 = vld [vmem:[%s1 + $0xb0] sm:$0xff]
  %v126 = vld [vmem:[%s1 + $0xb8] sm:$0xff]
  %v127 = vld [vmem:[%s1 + $0xc0] sm:$0xff]
  %v128 = vld [vmem:[%s1 + $0xc8] sm:$0xff]
  %v129 = vld [vmem:[%s1 + $0xd0] sm:$0xff]
  %v130 = vld [vmem:[%s1 + $0xd8] sm:$0xff]
  %v131 = vld [vmem:[%s1 + $0xe0] sm:$0xff]
  %v132 = vld [vmem:[%s1 + $0xe8] sm:$0xff]
  %v133 = vld [vmem:[%s1 + $0xf0] sm:$0xff]
  %v134 = vld [vmem:[%s1 + $0xf8] sm:$0xff]
  %v135 = vld [vmem:[%s0 + $0x1] sm:$0xff]
  %v136 = vld [vmem:[%s0 + $0x9] sm:$0xff]
  %v137 = vld [vmem:[%s0 + $0x11] sm:$0xff]
  %v138 = vld [vmem:[%s0 + $0x19] sm:$0xff]
  %v139 = vld [vmem:[%s0 + $0x21] sm:$0xff]
  %v140 = vld [vmem:[%s0 + $0x29] sm:$0x3f]
  %s141 = scalar_lea.vmem %s1, 256
  %v142 = vld [vmem:[%s141] sm:$0xff]
  %v143 = vld [vmem:[%s141 + $0x8] sm:$0xff]
  %v144 = vld [vmem:[%s141 + $0x10] sm:$0xff]
  %v145 = vld [vmem:[%s141 + $0x18] sm:$0xff]
  %v146 = vld [vmem:[%s141 + $0x20] sm:$0xff]
  %v147 = vld [vmem:[%s141 + $0x28] sm:$0xff]
  %v148 = vld [vmem:[%s141 + $0x30] sm:$0xff]
  %v149 = vld [vmem:[%s141 + $0x38] sm:$0xff]
  %v150 = vld [vmem:[%s141 + $0x40] sm:$0xff]
  %v151 = vld [vmem:[%s141 + $0x48] sm:$0xff]
  %v152 = vld [vmem:[%s141 + $0x50] sm:$0xff]
  %v153 = vld [vmem:[%s141 + $0x58] sm:$0xff]
  %v154 = vld [vmem:[%s141 + $0x60] sm:$0xff]
  %v155 = vld [vmem:[%s141 + $0x68] sm:$0xff]
  %v156 = vld [vmem:[%s141 + $0x70] sm:$0xff]
  %v157 = vld [vmem:[%s141 + $0x78] sm:$0xff]
  %v158 = vld [vmem:[%s141 + $0x80] sm:$0xff]
  %v159 = vld [vmem:[%s141 + $0x88] sm:$0xff]
  %v160 = vld [vmem:[%s141 + $0x90] sm:$0xff]
  %v161 = vld [vmem:[%s141 + $0x98] sm:$0xff]
  %v162 = vld [vmem:[%s141 + $0xa0] sm:$0xff]
  %v163 = vld [vmem:[%s141 + $0xa8] sm:$0xff]
  %v164 = vld [vmem:[%s141 + $0xb0] sm:$0xff]
  %v165 = vld [vmem:[%s141 + $0xb8] sm:$0xff]
  %v166 = vld [vmem:[%s141 + $0xc0] sm:$0xff]
  %v167 = vld [vmem:[%s141 + $0xc8] sm:$0xff]
  %v168 = vld [vmem:[%s141 + $0xd0] sm:$0xff]
  %v169 = vld [vmem:[%s141 + $0xd8] sm:$0xff]
  %v170 = vld [vmem:[%s141 + $0xe0] sm:$0xff]
  %v171 = vld [vmem:[%s141 + $0xe8] sm:$0xff]
  %v172 = vld [vmem:[%s141 + $0xf0] sm:$0xff]
  %v173 = vld [vmem:[%s141 + $0xf8] sm:$0xff]
  %174 = vmatprep.subr.mxu0 %v173
  %175 = vmatpush1.msra.mxu0 %v172
  %176 = vmatprep.subr.mxu0 %v171
  %177 = vmatpush1.msra.mxu0 %v170
  %178 = vmatprep.subr.mxu0 %v169
  %179 = vmatpush1.msra.mxu0 %v168
  %180 = vmatprep.subr.mxu0 %v167
  %181 = vmatpush1.msra.mxu0 %v166
  %182 = vmatprep.subr.mxu0 %v165
  %183 = vmatpush1.msra.mxu0 %v164
  %184 = vmatprep.subr.mxu0 %v163
  %185 = vmatpush1.msra.mxu0 %v162
  %186 = vmatprep.subr.mxu0 %v161
  %187 = vmatpush1.msra.mxu0 %v160
  %188 = vmatprep.subr.mxu0 %v159
  %189 = vmatpush1.msra.mxu0 %v158
  %190 = vmatprep.subr.mxu0 %v157
  %191 = vmatpush1.msra.mxu0 %v156
  %192 = vmatprep.subr.mxu0 %v155
  %193 = vmatpush1.msra.mxu0 %v154
  %194 = vmatprep.subr.mxu0 %v153
  %195 = vmatpush1.msra.mxu0 %v152
  %196 = vmatprep.subr.mxu0 %v151
  %197 = vmatpush1.msra.mxu0 %v150
  %198 = vmatprep.subr.mxu0 %v149
  %199 = vmatpush1.msra.mxu0 %v148
  %200 = vmatprep.subr.mxu0 %v147
  %201 = vmatpush1.msra.mxu0 %v146
  %202 = vmatprep.subr.mxu0 %v145
  %203 = vmatpush1.msra.mxu0 %v144
  %204 = vmatprep.subr.mxu0 %v143
  %205 = vmatpush1.msra.mxu0 %v142
  %206 = vmatprep.subr.mxu0 0.0
  %207 = vmatpush2.msra.mxu0 0.0
  %208 = vmatprep.subr.mxu0 0.0
  %209 = vmatpush2.msra.mxu0 0.0
  %210 = vmatprep.subr.mxu0 0.0
  %211 = vmatpush2.msra.mxu0 0.0
  %212 = vmatprep.subr.mxu0 0.0
  %213 = vmatpush2.msra.mxu0 0.0
  %214 = vmatprep.subr.mxu0 0.0
  %215 = vmatpush2.msra.mxu0 0.0
  %216 = vmatprep.subr.mxu0 0.0
  %217 = vmatpush2.msra.mxu0 0.0
  %218 = vmatprep.subr.mxu0 0.0
  %219 = vmatpush2.msra.mxu0 0.0
  %220 = vmatprep.subr.mxu0 0.0
  %221 = vmatpush2.msra.mxu0 0.0
  %222 = vmatprep.subr.mxu0 0.0
  %223 = vmatpush2.msra.mxu0 0.0
  %224 = vmatprep.subr.mxu0 0.0
  %225 = vmatpush2.msra.mxu0 0.0
  %226 = vmatprep.subr.mxu0 0.0
  %227 = vmatpush2.msra.mxu0 0.0
  %228 = vmatprep.subr.mxu0 0.0
  %229 = vmatpush2.msra.mxu0 0.0
  %230 = vmatprep.subr.mxu0 0.0
  %231 = vmatpush2.msra.mxu0 0.0
  %232 = vmatprep.subr.mxu0 0.0
  %233 = vmatpush2.msra.mxu0 0.0
  %234 = vmatprep.subr.mxu0 0.0
  %235 = vmatpush2.msra.mxu0 0.0
  %236 = vmatprep.subr.mxu0 0.0
  %237 = vmatpush2.msra.mxu0 0.0
  %238 = vmatprep.mubr.f32.mxu0 0.0
  %239 = vmatmul.mubr.f32.gmra.mxu0 %v135
  %v240 = vpop.f32.mrf.mxu0
  %v241 = vadd.f32 0.0, %v240
  %v242 = vpop.f32.mrf.mxu0
  %v243 = vadd.f32 0.0, %v242
  %244 = vmatprep.mubr.f32.mxu0 0.0
  %245 = vmatmul.mubr.f32.gmra.mxu0 %v136
  %v246 = vpop.f32.mrf.mxu0
  %v247 = vadd.f32 0.0, %v246
  %v248 = vpop.f32.mrf.mxu0
  %v249 = vadd.f32 0.0, %v248
  %250 = vmatprep.mubr.f32.mxu0 0.0
  %251 = vmatmul.mubr.f32.gmra.mxu0 %v137
  %v252 = vpop.f32.mrf.mxu0
  %v253 = vpop.f32.mrf.mxu0
  %254 = vmatprep.mubr.f32.mxu0 0.0
  %255 = vmatmul.mubr.f32.gmra.mxu0 %v138
  %v256 = vpop.f32.mrf.mxu0
  %v257 = vadd.f32 0.0, %v256
  %v258 = vpop.f32.mrf.mxu0
  %v259 = vadd.f32 0.0, %v258
  %260 = vmatprep.mubr.f32.mxu0 0.0
  %261 = vmatmul.mubr.f32.gmra.mxu0 %v139
  %v262 = vpop.f32.mrf.mxu0
  %v263 = vadd.f32 0.0, %v262
  %v264 = vpop.f32.mrf.mxu0
  %v265 = vadd.f32 0.0, %v264
  %266 = vmatprep.mubr.f32.mxu0 0.0
  %267 = vmatmul.mubr.f32.gmra.mxu0 %v140
  %v268 = vpop.f32.mrf.mxu0
  %v269 = vpop.f32.mrf.mxu0
  %270 = vdwg.mxu0
  %271 = vmatprep.subr.mxu0 %v134
  %272 = vmatpush1.msra.mxu0 %v133
  %273 = vmatprep.subr.mxu0 %v132
  %274 = vmatpush1.msra.mxu0 %v131
  %275 = vmatprep.subr.mxu0 %v130
  %276 = vmatpush1.msra.mxu0 %v129
  %277 = vmatprep.subr.mxu0 %v128
  %278 = vmatpush1.msra.mxu0 %v127
  %279 = vmatprep.subr.mxu0 %v126
  %280 = vmatpush1.msra.mxu0 %v125
  %281 = vmatprep.subr.mxu0 %v124
  %282 = vmatpush1.msra.mxu0 %v123
  %283 = vmatprep.subr.mxu0 %v122
  %284 = vmatpush1.msra.mxu0 %v121
  %285 = vmatprep.subr.mxu0 %v120
  %286 = vmatpush1.msra.mxu0 %v119
  %287 = vmatprep.subr.mxu0 %v118
  %288 = vmatpush1.msra.mxu0 %v117
  %289 = vmatprep.subr.mxu0 %v116
  %290 = vmatpush1.msra.mxu0 %v115
  %291 = vmatprep.subr.mxu0 %v114
  %292 = vmatpush1.msra.mxu0 %v113
  %293 = vmatprep.subr.mxu0 %v112
  %294 = vmatpush1.msra.mxu0 %v111
  %295 = vmatprep.subr.mxu0 %v110
  %296 = vmatpush1.msra.mxu0 %v109
  %297 = vmatprep.subr.mxu0 %v108
  %298 = vmatpush1.msra.mxu0 %v107
  %299 = vmatprep.subr.mxu0 %v106
  %300 = vmatpush1.msra.mxu0 %v105
  %301 = vmatprep.subr.mxu0 %v104
  %302 = vmatpush1.msra.mxu0 %v103
  %303 = vmatprep.subr.mxu0 0.0
  %304 = vmatpush2.msra.mxu0 0.0
  %305 = vmatprep.subr.mxu0 0.0
  %306 = vmatpush2.msra.mxu0 0.0
  %307 = vmatprep.subr.mxu0 0.0
  %308 = vmatpush2.msra.mxu0 0.0
  %309 = vmatprep.subr.mxu0 0.0
  %310 = vmatpush2.msra.mxu0 0.0
  %311 = vmatprep.subr.mxu0 0.0
  %312 = vmatpush2.msra.mxu0 0.0
  %313 = vmatprep.subr.mxu0 0.0
  %314 = vmatpush2.msra.mxu0 0.0
  %315 = vmatprep.subr.mxu0 0.0
  %316 = vmatpush2.msra.mxu0 0.0
  %317 = vmatprep.subr.mxu0 0.0
  %318 = vmatpush2.msra.mxu0 0.0
  %319 = vmatprep.subr.mxu0 0.0
  %320 = vmatpush2.msra.mxu0 0.0
  %321 = vmatprep.subr.mxu0 0.0
  %322 = vmatpush2.msra.mxu0 0.0
  %323 = vmatprep.subr.mxu0 0.0
  %324 = vmatpush2.msra.mxu0 0.0
  %325 = vmatprep.subr.mxu0 0.0
  %326 = vmatpush2.msra.mxu0 0.0
  %327 = vmatprep.subr.mxu0 0.0
  %328 = vmatpush2.msra.mxu0 0.0
  %329 = vmatprep.subr.mxu0 0.0
  %330 = vmatpush2.msra.mxu0 0.0
  %331 = vmatprep.subr.mxu0 0.0
  %332 = vmatpush2.msra.mxu0 0.0
  %333 = vmatprep.subr.mxu0 0.0
  %334 = vmatpush2.msra.mxu0 0.0
  %335 = vmatprep.mubr.f32.mxu0 0.0
  %336 = vmatmul.mubr.f32.gmra.mxu0 %v97
  %v337 = vpop.f32.mrf.mxu0
  %v338 = vadd.f32 %v241, %v337
  %v339 = vpop.f32.mrf.mxu0
  %v340 = vadd.f32 %v243, %v339
  %341 = vmatprep.mubr.f32.mxu0 0.0
  %342 = vmatmul.mubr.f32.gmra.mxu0 %v98
  %v343 = vpop.f32.mrf.mxu0
  %v344 = vadd.f32 %v247, %v343
  %v345 = vpop.f32.mrf.mxu0
  %v346 = vadd.f32 %v249, %v345
  %347 = vmatprep.mubr.f32.mxu0 0.0
  %348 = vmatmul.mubr.f32.gmra.mxu0 %v99
  %v349 = vpop.f32.mrf.mxu0
  %v350 = vpop.f32.mrf.mxu0
  %351 = vmatprep.mubr.f32.mxu0 0.0
  %352 = vmatmul.mubr.f32.gmra.mxu0 %v100
  %v353 = vpop.f32.mrf.mxu0
  %v354 = vadd.f32 %v257, %v353
  %v355 = vpop.f32.mrf.mxu0
  %v356 = vadd.f32 %v259, %v355
  %357 = vmatprep.mubr.f32.mxu0 0.0
  %358 = vmatmul.mubr.f32.gmra.mxu0 %v101
  %v359 = vpop.f32.mrf.mxu0
  %v360 = vadd.f32 %v263, %v359
  %v361 = vpop.f32.mrf.mxu0
  %v362 = vadd.f32 %v265, %v361
  %363 = vmatprep.mubr.f32.mxu0 0.0
  %364 = vmatmul.mubr.f32.gmra.mxu0 %v102
  %v365 = vpop.f32.mrf.mxu0
  %v366 = vpop.f32.mrf.mxu0
  %367 = vdwg.mxu0
  %v368 = vld [vmem:[%s0 + $0x2] sm:$0xff]
  %v369 = vld [vmem:[%s0 + $0xa] sm:$0xff]
  %v370 = vld [vmem:[%s0 + $0x12] sm:$0xff]
  %v371 = vld [vmem:[%s0 + $0x1a] sm:$0xff]
  %v372 = vld [vmem:[%s0 + $0x22] sm:$0xff]
  %v373 = vld [vmem:[%s0 + $0x2a] sm:$0x3f]
  %s374 = scalar_lea.vmem %s1, 512
  %v375 = vld [vmem:[%s374] sm:$0xff]
  %v376 = vld [vmem:[%s374 + $0x8] sm:$0xff]
  %v377 = vld [vmem:[%s374 + $0x10] sm:$0xff]
  %v378 = vld [vmem:[%s374 + $0x18] sm:$0xff]
  %v379 = vld [vmem:[%s374 + $0x20] sm:$0xff]
  %v380 = vld [vmem:[%s374 + $0x28] sm:$0xff]
  %v381 = vld [vmem:[%s374 + $0x30] sm:$0xff]
  %v382 = vld [vmem:[%s374 + $0x38] sm:$0xff]
  %v383 = vld [vmem:[%s374 + $0x40] sm:$0xff]
  %v384 = vld [vmem:[%s374 + $0x48] sm:$0xff]
  %v385 = vld [vmem:[%s374 + $0x50] sm:$0xff]
  %v386 = vld [vmem:[%s374 + $0x58] sm:$0xff]
  %v387 = vld [vmem:[%s374 + $0x60] sm:$0xff]
  %v388 = vld [vmem:[%s374 + $0x68] sm:$0xff]
  %v389 = vld [vmem:[%s374 + $0x70] sm:$0xff]
  %v390 = vld [vmem:[%s374 + $0x78] sm:$0xff]
  %v391 = vld [vmem:[%s374 + $0x80] sm:$0xff]
  %v392 = vld [vmem:[%s374 + $0x88] sm:$0xff]
  %v393 = vld [vmem:[%s374 + $0x90] sm:$0xff]
  %v394 = vld [vmem:[%s374 + $0x98] sm:$0xff]
  %v395 = vld [vmem:[%s374 + $0xa0] sm:$0xff]
  %v396 = vld [vmem:[%s374 + $0xa8] sm:$0xff]
  %v397 = vld [vmem:[%s374 + $0xb0] sm:$0xff]
  %v398 = vld [vmem:[%s374 + $0xb8] sm:$0xff]
  %v399 = vld [vmem:[%s374 + $0xc0] sm:$0xff]
  %v400 = vld [vmem:[%s374 + $0xc8] sm:$0xff]
  %v401 = vld [vmem:[%s374 + $0xd0] sm:$0xff]
  %v402 = vld [vmem:[%s374 + $0xd8] sm:$0xff]
  %v403 = vld [vmem:[%s374 + $0xe0] sm:$0xff]
  %v404 = vld [vmem:[%s374 + $0xe8] sm:$0xff]
  %v405 = vld [vmem:[%s374 + $0xf0] sm:$0xff]
  %v406 = vld [vmem:[%s374 + $0xf8] sm:$0xff]
  %407 = vmatprep.subr.mxu0 %v406
  %408 = vmatpush1.msra.mxu0 %v405
  %409 = vmatprep.subr.mxu0 %v404
  %410 = vmatpush1.msra.mxu0 %v403
  %411 = vmatprep.subr.mxu0 %v402
  %412 = vmatpush1.msra.mxu0 %v401
  %413 = vmatprep.subr.mxu0 %v400
  %414 = vmatpush1.msra.mxu0 %v399
  %415 = vmatprep.subr.mxu0 %v398
  %416 = vmatpush1.msra.mxu0 %v397
  %417 = vmatprep.subr.mxu0 %v396
  %418 = vmatpush1.msra.mxu0 %v395
  %419 = vmatprep.subr.mxu0 %v394
  %420 = vmatpush1.msra.mxu0 %v393
  %421 = vmatprep.subr.mxu0 %v392
  %422 = vmatpush1.msra.mxu0 %v391
  %423 = vmatprep.subr.mxu0 %v390
  %424 = vmatpush1.msra.mxu0 %v389
  %425 = vmatprep.subr.mxu0 %v388
  %426 = vmatpush1.msra.mxu0 %v387
  %427 = vmatprep.subr.mxu0 %v386
  %428 = vmatpush1.msra.mxu0 %v385
  %429 = vmatprep.subr.mxu0 %v384
  %430 = vmatpush1.msra.mxu0 %v383
  %431 = vmatprep.subr.mxu0 %v382
  %432 = vmatpush1.msra.mxu0 %v381
  %433 = vmatprep.subr.mxu0 %v380
  %434 = vmatpush1.msra.mxu0 %v379
  %435 = vmatprep.subr.mxu0 %v378
  %436 = vmatpush1.msra.mxu0 %v377
  %437 = vmatprep.subr.mxu0 %v376
  %438 = vmatpush1.msra.mxu0 %v375
  %439 = vmatprep.subr.mxu0 0.0
  %440 = vmatpush2.msra.mxu0 0.0
  %441 = vmatprep.subr.mxu0 0.0
  %442 = vmatpush2.msra.mxu0 0.0
  %443 = vmatprep.subr.mxu0 0.0
  %444 = vmatpush2.msra.mxu0 0.0
  %445 = vmatprep.subr.mxu0 0.0
  %446 = vmatpush2.msra.mxu0 0.0
  %447 = vmatprep.subr.mxu0 0.0
  %448 = vmatpush2.msra.mxu0 0.0
  %449 = vmatprep.subr.mxu0 0.0
  %450 = vmatpush2.msra.mxu0 0.0
  %451 = vmatprep.subr.mxu0 0.0
  %452 = vmatpush2.msra.mxu0 0.0
  %453 = vmatprep.subr.mxu0 0.0
  %454 = vmatpush2.msra.mxu0 0.0
  %455 = vmatprep.subr.mxu0 0.0
  %456 = vmatpush2.msra.mxu0 0.0
  %457 = vmatprep.subr.mxu0 0.0
  %458 = vmatpush2.msra.mxu0 0.0
  %459 = vmatprep.subr.mxu0 0.0
  %460 = vmatpush2.msra.mxu0 0.0
  %461 = vmatprep.subr.mxu0 0.0
  %462 = vmatpush2.msra.mxu0 0.0
  %463 = vmatprep.subr.mxu0 0.0
  %464 = vmatpush2.msra.mxu0 0.0
  %465 = vmatprep.subr.mxu0 0.0
  %466 = vmatpush2.msra.mxu0 0.0
  %467 = vmatprep.subr.mxu0 0.0
  %468 = vmatpush2.msra.mxu0 0.0
  %469 = vmatprep.subr.mxu0 0.0
  %470 = vmatpush2.msra.mxu0 0.0
  %471 = vmatprep.mubr.f32.mxu0 0.0
  %472 = vmatmul.mubr.f32.gmra.mxu0 %v368
  %v473 = vpop.f32.mrf.mxu0
  %v474 = vadd.f32 0.0, %v473
  %v475 = vpop.f32.mrf.mxu0
  %v476 = vadd.f32 0.0, %v475
  %477 = vmatprep.mubr.f32.mxu0 0.0
  %478 = vmatmul.mubr.f32.gmra.mxu0 %v369
  %v479 = vpop.f32.mrf.mxu0
  %v480 = vadd.f32 0.0, %v479
  %v481 = vpop.f32.mrf.mxu0
  %v482 = vadd.f32 0.0, %v481
  %483 = vmatprep.mubr.f32.mxu0 0.0
  %484 = vmatmul.mubr.f32.gmra.mxu0 %v370
  %v485 = vpop.f32.mrf.mxu0
  %v486 = vpop.f32.mrf.mxu0
  %487 = vmatprep.mubr.f32.mxu0 0.0
  %488 = vmatmul.mubr.f32.gmra.mxu0 %v371
  %v489 = vpop.f32.mrf.mxu0
  %v490 = vadd.f32 0.0, %v489
  %v491 = vpop.f32.mrf.mxu0
  %v492 = vadd.f32 0.0, %v491
  %493 = vmatprep.mubr.f32.mxu0 0.0
  %494 = vmatmul.mubr.f32.gmra.mxu0 %v372
  %v495 = vpop.f32.mrf.mxu0
  %v496 = vadd.f32 0.0, %v495
  %v497 = vpop.f32.mrf.mxu0
  %v498 = vadd.f32 0.0, %v497
  %499 = vmatprep.mubr.f32.mxu0 0.0
  %500 = vmatmul.mubr.f32.gmra.mxu0 %v373
  %v501 = vpop.f32.mrf.mxu0
  %v502 = vpop.f32.mrf.mxu0
  %503 = vdwg.mxu0
  %v504 = vadd.f32 %v338, %v474
  %v505 = vadd.f32 %v340, %v476
  %v506 = vadd.f32 %v344, %v480
  %v507 = vadd.f32 %v346, %v482
  %v508 = vadd.f32 %v354, %v490
  %v509 = vadd.f32 %v356, %v492
  %v510 = vadd.f32 %v360, %v496
  %v511 = vadd.f32 %v362, %v498
  %v513 = vlaneseq
  %v514 = vshrl.u32 %v513, 7
  %v515 = vsub.s32 0, %v514
  %v516 = vrot.slane %v44, %v515
  %v517 = vlaneseq
  %v518 = vshrl.u32 %v517, 7
  %v519 = vsub.s32 1, %v518
  %v520 = vrot.slane %v44, %v519
  %v523 = vadd.f32 %v504, %v516
  %v524 = vadd.f32 %v505, %v520
  %v525 = vadd.f32 %v506, %v516
  %v526 = vadd.f32 %v507, %v520
  %v527 = vadd.f32 %v508, %v516
  %v528 = vadd.f32 %v509, %v520
  %v529 = vadd.f32 %v510, %v516
  %v530 = vadd.f32 %v511, %v520
  %v531 = vadd.f32 %v523, %v525
  %v532 = vrot.slane %v531, 4
  %v533 = vadd.f32 %v531, %v532
  %v534 = vrot.slane %v533, 2
  %v535 = vadd.f32 %v533, %v534
  %v536 = vrot.slane %v535, 1
  %v537 = vadd.f32 %v535, %v536
  %v538 = vadd.f32 %v524, %v526
  %v539 = vrot.slane %v538, 4
  %v540 = vadd.f32 %v538, %v539
  %v541 = vrot.slane %v540, 2
  %v542 = vadd.f32 %v540, %v541
  %v543 = vrot.slane %v542, 1
  %v544 = vadd.f32 %v542, %v543
  %545 = vmatprep.subr.mxu0 0.0
  %546 = vmatpush1.msra.mxu0 %v65
  %547 = vmatprep.subr.mxu0 0.0
  %548 = vmatpush1.msra.mxu0 %v64
  %549 = vmatprep.subr.mxu0 0.0
  %550 = vmatpush1.msra.mxu0 %v63
  %551 = vmatprep.subr.mxu0 0.0
  %552 = vmatpush1.msra.mxu0 %v62
  %553 = vmatprep.subr.mxu0 0.0
  %554 = vmatpush1.msra.mxu0 %v61
  %555 = vmatprep.subr.mxu0 0.0
  %556 = vmatpush1.msra.mxu0 %v60
  %557 = vmatprep.subr.mxu0 0.0
  %558 = vmatpush1.msra.mxu0 %v59
  %559 = vmatprep.subr.mxu0 0.0
  %560 = vmatpush1.msra.mxu0 %v58
  %561 = vmatprep.subr.mxu0 0.0
  %562 = vmatpush1.msra.mxu0 %v57
  %563 = vmatprep.subr.mxu0 0.0
  %564 = vmatpush1.msra.mxu0 %v56
  %565 = vmatprep.subr.mxu0 0.0
  %566 = vmatpush1.msra.mxu0 %v55
  %567 = vmatprep.subr.mxu0 0.0
  %568 = vmatpush1.msra.mxu0 %v54
  %569 = vmatprep.subr.mxu0 0.0
  %570 = vmatpush1.msra.mxu0 %v53
  %571 = vmatprep.subr.mxu0 0.0
  %572 = vmatpush1.msra.mxu0 %v52
  %573 = vmatprep.subr.mxu0 0.0
  %574 = vmatpush1.msra.mxu0 %v51
  %575 = vmatprep.subr.mxu0 0.0
  %576 = vmatpush1.msra.mxu0 %v50
  %577 = vmatprep.subr.mxu0 0.0
  %578 = vmatpush2.msra.mxu0 %v81
  %579 = vmatprep.subr.mxu0 0.0
  %580 = vmatpush2.msra.mxu0 %v80
  %581 = vmatprep.subr.mxu0 0.0
  %582 = vmatpush2.msra.mxu0 %v79
  %583 = vmatprep.subr.mxu0 0.0
  %584 = vmatpush2.msra.mxu0 %v78
  %585 = vmatprep.subr.mxu0 0.0
  %586 = vmatpush2.msra.mxu0 %v77
  %587 = vmatprep.subr.mxu0 0.0
  %588 = vmatpush2.msra.mxu0 %v76
  %589 = vmatprep.subr.mxu0 0.0
  %590 = vmatpush2.msra.mxu0 %v75
  %591 = vmatprep.subr.mxu0 0.0
  %592 = vmatpush2.msra.mxu0 %v74
  %593 = vmatprep.subr.mxu0 0.0
  %594 = vmatpush2.msra.mxu0 %v73
  %595 = vmatprep.subr.mxu0 0.0
  %596 = vmatpush2.msra.mxu0 %v72
  %597 = vmatprep.subr.mxu0 0.0
  %598 = vmatpush2.msra.mxu0 %v71
  %599 = vmatprep.subr.mxu0 0.0
  %600 = vmatpush2.msra.mxu0 %v70
  %601 = vmatprep.subr.mxu0 0.0
  %602 = vmatpush2.msra.mxu0 %v69
  %603 = vmatprep.subr.mxu0 0.0
  %604 = vmatpush2.msra.mxu0 %v68
  %605 = vmatprep.subr.mxu0 0.0
  %606 = vmatpush2.msra.mxu0 %v67
  %607 = vmatprep.subr.mxu0 0.0
  %608 = vmatpush2.msra.mxu0 %v66
  %609 = vmatprep.mubr.f32.mxu0 %v544
  %610 = vmatmul.mubr.f32.gmra.mxu0 %v537
  %v611 = vpop.f32.mrf.mxu0
  %v612 = vadd.f32 0.0, %v611
  %v613 = vpop.f32.mrf.mxu0
  %614 = vdwg.mxu0
  %vm615 = vcmask 64512
  %v617 = vsel %vm615, %v612, 0
  %619 = vmatprep.subr.mxu0 0.0
  %620 = vmatpush1.msra.mxu0 0.0
  %621 = vmatprep.subr.mxu0 0.0
  %622 = vmatpush1.msra.mxu0 0.0
  %623 = vmatprep.subr.mxu0 0.0
  %624 = vmatpush1.msra.mxu0 0.0
  %625 = vmatprep.subr.mxu0 0.0
  %626 = vmatpush1.msra.mxu0 0.0
  %627 = vmatprep.subr.mxu0 0.0
  %628 = vmatpush1.msra.mxu0 0.0
  %629 = vmatprep.subr.mxu0 0.0
  %630 = vmatpush1.msra.mxu0 0.0
  %631 = vmatprep.subr.mxu0 0.0
  %632 = vmatpush1.msra.mxu0 0.0
  %633 = vmatprep.subr.mxu0 0.0
  %634 = vmatpush1.msra.mxu0 0.0
  %635 = vmatprep.subr.mxu0 0.0
  %636 = vmatpush1.msra.mxu0 0.0
  %637 = vmatprep.subr.mxu0 0.0
  %638 = vmatpush1.msra.mxu0 0.0
  %639 = vmatprep.subr.mxu0 0.0
  %640 = vmatpush1.msra.mxu0 0.0
  %641 = vmatprep.subr.mxu0 0.0
  %642 = vmatpush1.msra.mxu0 0.0
  %643 = vmatprep.subr.mxu0 0.0
  %644 = vmatpush1.msra.mxu0 0.0
  %645 = vmatprep.subr.mxu0 0.0
  %646 = vmatpush1.msra.mxu0 0.0
  %647 = vmatprep.subr.mxu0 0.0
  %648 = vmatpush1.msra.mxu0 0.0
  %649 = vmatprep.subr.mxu0 %v83
  %650 = vmatpush1.msra.mxu0 %v82
  %651 = vmatprep.subr.mxu0 0.0
  %652 = vmatpush2.msra.mxu0 0.0
  %653 = vmatprep.subr.mxu0 0.0
  %654 = vmatpush2.msra.mxu0 0.0
  %655 = vmatprep.subr.mxu0 0.0
  %656 = vmatpush2.msra.mxu0 0.0
  %657 = vmatprep.subr.mxu0 0.0
  %658 = vmatpush2.msra.mxu0 0.0
  %659 = vmatprep.subr.mxu0 0.0
  %660 = vmatpush2.msra.mxu0 0.0
  %661 = vmatprep.subr.mxu0 0.0
  %662 = vmatpush2.msra.mxu0 0.0
  %663 = vmatprep.subr.mxu0 0.0
  %664 = vmatpush2.msra.mxu0 0.0
  %665 = vmatprep.subr.mxu0 0.0
  %666 = vmatpush2.msra.mxu0 0.0
  %667 = vmatprep.subr.mxu0 0.0
  %668 = vmatpush2.msra.mxu0 0.0
  %669 = vmatprep.subr.mxu0 0.0
  %670 = vmatpush2.msra.mxu0 0.0
  %671 = vmatprep.subr.mxu0 0.0
  %672 = vmatpush2.msra.mxu0 0.0
  %673 = vmatprep.subr.mxu0 0.0
  %674 = vmatpush2.msra.mxu0 0.0
  %675 = vmatprep.subr.mxu0 0.0
  %676 = vmatpush2.msra.mxu0 0.0
  %677 = vmatprep.subr.mxu0 0.0
  %678 = vmatpush2.msra.mxu0 0.0
  %679 = vmatprep.subr.mxu0 0.0
  %680 = vmatpush2.msra.mxu0 0.0
  %681 = vmatprep.subr.mxu0 0.0
  %682 = vmatpush2.msra.mxu0 0.0
  %683 = vmatprep.mubr.f32.mxu0 0.0
  %684 = vmatmul.mubr.f32.gmra.mxu0 %v617
  %v685 = vpop.f32.mrf.mxu0
  %v686 = vadd.f32 0.0, %v685
  %v687 = vpop.f32.mrf.mxu0
  %v688 = vadd.f32 0.0, %v687
  %689 = vdwg.mxu0
  %v690 = vlaneseq
  %v691 = vshrl.u32 %v690, 7
  %v692 = vsub.s32 0, %v691
  %v693 = vrot.slane %v686, %v692
  %v694 = vlaneseq
  %v695 = vshrl.u32 %v694, 7
  %v696 = vsub.s32 0, %v695
  %v697 = vrot.slane %v688, %v696
  %v698 = vsub.f32 %v523, %v693
  %v699 = vsub.f32 %v524, %v697
  %v700 = vsub.f32 %v525, %v693
  %v701 = vsub.f32 %v526, %v697
  %v702 = vmul.f32 %v698, %v698
  %v703 = vmul.f32 %v699, %v699
  %v704 = vmul.f32 %v700, %v700
  %v705 = vmul.f32 %v701, %v701
  %v706 = vadd.f32 %v702, %v704
  %v707 = vrot.slane %v706, 4
  %v708 = vadd.f32 %v706, %v707
  %v709 = vrot.slane %v708, 2
  %v710 = vadd.f32 %v708, %v709
  %v711 = vrot.slane %v710, 1
  %v712 = vadd.f32 %v710, %v711
  %v713 = vadd.f32 %v703, %v705
  %v714 = vrot.slane %v713, 4
  %v715 = vadd.f32 %v713, %v714
  %v716 = vrot.slane %v715, 2
  %v717 = vadd.f32 %v715, %v716
  %v718 = vrot.slane %v717, 1
  %v719 = vadd.f32 %v717, %v718
  %720 = vmatprep.subr.mxu0 0.0
  %721 = vmatpush1.msra.mxu0 %v65
  %722 = vmatprep.subr.mxu0 0.0
  %723 = vmatpush1.msra.mxu0 %v64
  %724 = vmatprep.subr.mxu0 0.0
  %725 = vmatpush1.msra.mxu0 %v63
  %726 = vmatprep.subr.mxu0 0.0
  %727 = vmatpush1.msra.mxu0 %v62
  %728 = vmatprep.subr.mxu0 0.0
  %729 = vmatpush1.msra.mxu0 %v61
  %730 = vmatprep.subr.mxu0 0.0
  %731 = vmatpush1.msra.mxu0 %v60
  %732 = vmatprep.subr.mxu0 0.0
  %733 = vmatpush1.msra.mxu0 %v59
  %734 = vmatprep.subr.mxu0 0.0
  %735 = vmatpush1.msra.mxu0 %v58
  %736 = vmatprep.subr.mxu0 0.0
  %737 = vmatpush1.msra.mxu0 %v57
  %738 = vmatprep.subr.mxu0 0.0
  %739 = vmatpush1.msra.mxu0 %v56
  %740 = vmatprep.subr.mxu0 0.0
  %741 = vmatpush1.msra.mxu0 %v55
  %742 = vmatprep.subr.mxu0 0.0
  %743 = vmatpush1.msra.mxu0 %v54
  %744 = vmatprep.subr.mxu0 0.0
  %745 = vmatpush1.msra.mxu0 %v53
  %746 = vmatprep.subr.mxu0 0.0
  %747 = vmatpush1.msra.mxu0 %v52
  %748 = vmatprep.subr.mxu0 0.0
  %749 = vmatpush1.msra.mxu0 %v51
  %750 = vmatprep.subr.mxu0 0.0
  %751 = vmatpush1.msra.mxu0 %v50
  %752 = vmatprep.subr.mxu0 0.0
  %753 = vmatpush2.msra.mxu0 %v81
  %754 = vmatprep.subr.mxu0 0.0
  %755 = vmatpush2.msra.mxu0 %v80
  %756 = vmatprep.subr.mxu0 0.0
  %757 = vmatpush2.msra.mxu0 %v79
  %758 = vmatprep.subr.mxu0 0.0
  %759 = vmatpush2.msra.mxu0 %v78
  %760 = vmatprep.subr.mxu0 0.0
  %761 = vmatpush2.msra.mxu0 %v77
  %762 = vmatprep.subr.mxu0 0.0
  %763 = vmatpush2.msra.mxu0 %v76
  %764 = vmatprep.subr.mxu0 0.0
  %765 = vmatpush2.msra.mxu0 %v75
  %766 = vmatprep.subr.mxu0 0.0
  %767 = vmatpush2.msra.mxu0 %v74
  %768 = vmatprep.subr.mxu0 0.0
  %769 = vmatpush2.msra.mxu0 %v73
  %770 = vmatprep.subr.mxu0 0.0
  %771 = vmatpush2.msra.mxu0 %v72
  %772 = vmatprep.subr.mxu0 0.0
  %773 = vmatpush2.msra.mxu0 %v71
  %774 = vmatprep.subr.mxu0 0.0
  %775 = vmatpush2.msra.mxu0 %v70
  %776 = vmatprep.subr.mxu0 0.0
  %777 = vmatpush2.msra.mxu0 %v69
  %778 = vmatprep.subr.mxu0 0.0
  %779 = vmatpush2.msra.mxu0 %v68
  %780 = vmatprep.subr.mxu0 0.0
  %781 = vmatpush2.msra.mxu0 %v67
  %782 = vmatprep.subr.mxu0 0.0
  %783 = vmatpush2.msra.mxu0 %v66
  %784 = vmatprep.mubr.f32.mxu0 %v719
  %785 = vmatmul.mubr.f32.gmra.mxu0 %v712
  %v786 = vpop.f32.mrf.mxu0
  %v787 = vadd.f32 0.0, %v786
  %v788 = vpop.f32.mrf.mxu0
  %789 = vdwg.mxu0
  %v791 = vsel %vm615, %v787, 0
  %793 = vmatprep.subr.mxu0 0.0
  %794 = vmatpush1.msra.mxu0 0.0
  %795 = vmatprep.subr.mxu0 0.0
  %796 = vmatpush1.msra.mxu0 0.0
  %797 = vmatprep.subr.mxu0 0.0
  %798 = vmatpush1.msra.mxu0 0.0
  %799 = vmatprep.subr.mxu0 0.0
  %800 = vmatpush1.msra.mxu0 0.0
  %801 = vmatprep.subr.mxu0 0.0
  %802 = vmatpush1.msra.mxu0 0.0
  %803 = vmatprep.subr.mxu0 0.0
  %804 = vmatpush1.msra.mxu0 0.0
  %805 = vmatprep.subr.mxu0 0.0
  %806 = vmatpush1.msra.mxu0 0.0
  %807 = vmatprep.subr.mxu0 0.0
  %808 = vmatpush1.msra.mxu0 0.0
  %809 = vmatprep.subr.mxu0 0.0
  %810 = vmatpush1.msra.mxu0 0.0
  %811 = vmatprep.subr.mxu0 0.0
  %812 = vmatpush1.msra.mxu0 0.0
  %813 = vmatprep.subr.mxu0 0.0
  %814 = vmatpush1.msra.mxu0 0.0
  %815 = vmatprep.subr.mxu0 0.0
  %816 = vmatpush1.msra.mxu0 0.0
  %817 = vmatprep.subr.mxu0 0.0
  %818 = vmatpush1.msra.mxu0 0.0
  %819 = vmatprep.subr.mxu0 0.0
  %820 = vmatpush1.msra.mxu0 0.0
  %821 = vmatprep.subr.mxu0 0.0
  %822 = vmatpush1.msra.mxu0 0.0
  %823 = vmatprep.subr.mxu0 %v83
  %824 = vmatpush1.msra.mxu0 %v82
  %825 = vmatprep.subr.mxu0 0.0
  %826 = vmatpush2.msra.mxu0 0.0
  %827 = vmatprep.subr.mxu0 0.0
  %828 = vmatpush2.msra.mxu0 0.0
  %829 = vmatprep.subr.mxu0 0.0
  %830 = vmatpush2.msra.mxu0 0.0
  %831 = vmatprep.subr.mxu0 0.0
  %832 = vmatpush2.msra.mxu0 0.0
  %833 = vmatprep.subr.mxu0 0.0
  %834 = vmatpush2.msra.mxu0 0.0
  %835 = vmatprep.subr.mxu0 0.0
  %836 = vmatpush2.msra.mxu0 0.0
  %837 = vmatprep.subr.mxu0 0.0
  %838 = vmatpush2.msra.mxu0 0.0
  %839 = vmatprep.subr.mxu0 0.0
  %840 = vmatpush2.msra.mxu0 0.0
  %841 = vmatprep.subr.mxu0 0.0
  %842 = vmatpush2.msra.mxu0 0.0
  %843 = vmatprep.subr.mxu0 0.0
  %844 = vmatpush2.msra.mxu0 0.0
  %845 = vmatprep.subr.mxu0 0.0
  %846 = vmatpush2.msra.mxu0 0.0
  %847 = vmatprep.subr.mxu0 0.0
  %848 = vmatpush2.msra.mxu0 0.0
  %849 = vmatprep.subr.mxu0 0.0
  %850 = vmatpush2.msra.mxu0 0.0
  %851 = vmatprep.subr.mxu0 0.0
  %852 = vmatpush2.msra.mxu0 0.0
  %853 = vmatprep.subr.mxu0 0.0
  %854 = vmatpush2.msra.mxu0 0.0
  %855 = vmatprep.subr.mxu0 0.0
  %856 = vmatpush2.msra.mxu0 0.0
  %857 = vmatprep.mubr.f32.mxu0 0.0
  %858 = vmatmul.mubr.f32.gmra.mxu0 %v791
  %v859 = vpop.f32.mrf.mxu0
  %v860 = vadd.f32 1e-05, %v859
  %v861 = vpop.f32.mrf.mxu0
  %v862 = vadd.f32 1e-05, %v861
  %863 = vdwg.mxu0
  %v864 = vrsqrt.pop %v860
  %v865 = vrsqrt.pop %v862
  %v866 = vlaneseq
  %v867 = vshrl.u32 %v866, 7
  %v868 = vsub.s32 0, %v867
  %v869 = vrot.slane %v864, %v868
  %v870 = vlaneseq
  %v871 = vshrl.u32 %v870, 7
  %v872 = vsub.s32 0, %v871
  %v873 = vrot.slane %v865, %v872
  %v874 = vmul.f32 %v698, %v869
  %v875 = vmul.f32 %v699, %v873
  %v876 = vmul.f32 %v700, %v869
  %v877 = vmul.f32 %v701, %v873
  %v879 = vlaneseq
  %v880 = vshrl.u32 %v879, 7
  %v881 = vsub.s32 0, %v880
  %v882 = vrot.slane %v45, %v881
  %v883 = vlaneseq
  %v884 = vshrl.u32 %v883, 7
  %v885 = vsub.s32 1, %v884
  %v886 = vrot.slane %v45, %v885
  %v889 = vmul.f32 %v874, %v882
  %v890 = vmul.f32 %v875, %v886
  %v891 = vmul.f32 %v876, %v882
  %v892 = vmul.f32 %v877, %v886
  %v894 = vlaneseq
  %v895 = vshrl.u32 %v894, 7
  %v896 = vsub.s32 0, %v895
  %v897 = vrot.slane %v46, %v896
  %v898 = vlaneseq
  %v899 = vshrl.u32 %v898, 7
  %v900 = vsub.s32 1, %v899
  %v901 = vrot.slane %v46, %v900
  %v904 = vadd.f32 %v889, %v897
  %v905 = vadd.f32 %v890, %v901
  %v906 = vadd.f32 %v891, %v897
  %v907 = vadd.f32 %v892, %v901
  %v908 = vxor.u32 %v904, 2147483648
  %v909 = vxor.u32 %v905, 2147483648
  %v910 = vxor.u32 %v906, 2147483648
  %v911 = vxor.u32 %v907, 2147483648
  %v912 = vmul.f32 %v908, 1.442695
  %v913 = vpow.pop %v912
  %v914 = vmul.f32 %v909, 1.442695
  %v915 = vpow.pop %v914
  %v916 = vmul.f32 %v910, 1.442695
  %v917 = vpow.pop %v916
  %v918 = vmul.f32 %v911, 1.442695
  %v919 = vpow.pop %v918
  %v920 = vadd.f32 %v913, 1.0
  %v921 = vadd.f32 %v915, 1.0
  %v922 = vadd.f32 %v917, 1.0
  %v923 = vadd.f32 %v919, 1.0
  %v924 = vrcp.pop %v920
  %v925 = vmul.f32 1.0, %v924
  %v926 = vrcp.pop %v921
  %v927 = vmul.f32 1.0, %v926
  %v928 = vrcp.pop %v922
  %v929 = vmul.f32 1.0, %v928
  %v930 = vrcp.pop %v923
  %v931 = vmul.f32 1.0, %v930
  %v932 = vmul.f32 %v904, %v925
  %v933 = vmul.f32 %v905, %v927
  %v934 = vmul.f32 %v906, %v929
  %v935 = vmul.f32 %v907, %v931
  %vm940 = vcmask 1040384
  %v941 = vrot.slane %v932, 7
  %v942 = vrot.slane %v933, 7
  %v943 = vrot.slane %v934, 7
  %v944 = vsel %vm940, %v941, %v943
  %v945 = vrot.slane %v935, 7
  %v946 = vsel %vm940, %v942, %v945
  %953 = vst [vmem:[#allocation2] sm:$0xfe] %v941
  %954 = vst [vmem:[#allocation2 + $0x8] sm:$0xfe] %v942
  %955 = vst [vmem:[#allocation2 + $0x10] sm:$0xff] %v944
  %956 = vst [vmem:[#allocation2 + $0x18] sm:$0xff] %v946
  %957 = vst [vmem:[#allocation2 + $0x20] sm:$0x1] %v943
  %958 = vst [vmem:[#allocation2 + $0x28] sm:$0x1] %v945
  %v959 = vadd.f32 %v527, %v529
  %v960 = vrot.slane %v959, 4
  %v961 = vadd.f32 %v959, %v960
  %v962 = vrot.slane %v961, 2
  %v963 = vadd.f32 %v961, %v962
  %v964 = vrot.slane %v963, 1
  %v965 = vadd.f32 %v963, %v964
  %v966 = vadd.f32 %v528, %v530
  %v967 = vrot.slane %v966, 4
  %v968 = vadd.f32 %v966, %v967
  %v969 = vrot.slane %v968, 2
  %v970 = vadd.f32 %v968, %v969
  %v971 = vrot.slane %v970, 1
  %v972 = vadd.f32 %v970, %v971
  %973 = vmatprep.subr.mxu0 0.0
  %974 = vmatpush1.msra.mxu0 %v65
  %975 = vmatprep.subr.mxu0 0.0
  %976 = vmatpush1.msra.mxu0 %v64
  %977 = vmatprep.subr.mxu0 0.0
  %978 = vmatpush1.msra.mxu0 %v63
  %979 = vmatprep.subr.mxu0 0.0
  %980 = vmatpush1.msra.mxu0 %v62
  %981 = vmatprep.subr.mxu0 0.0
  %982 = vmatpush1.msra.mxu0 %v61
  %983 = vmatprep.subr.mxu0 0.0
  %984 = vmatpush1.msra.mxu0 %v60
  %985 = vmatprep.subr.mxu0 0.0
  %986 = vmatpush1.msra.mxu0 %v59
  %987 = vmatprep.subr.mxu0 0.0
  %988 = vmatpush1.msra.mxu0 %v58
  %989 = vmatprep.subr.mxu0 0.0
  %990 = vmatpush1.msra.mxu0 %v57
  %991 = vmatprep.subr.mxu0 0.0
  %992 = vmatpush1.msra.mxu0 %v56
  %993 = vmatprep.subr.mxu0 0.0
  %994 = vmatpush1.msra.mxu0 %v55
  %995 = vmatprep.subr.mxu0 0.0
  %996 = vmatpush1.msra.mxu0 %v54
  %997 = vmatprep.subr.mxu0 0.0
  %998 = vmatpush1.msra.mxu0 %v53
  %999 = vmatprep.subr.mxu0 0.0
  %1000 = vmatpush1.msra.mxu0 %v52
  %1001 = vmatprep.subr.mxu0 0.0
  %1002 = vmatpush1.msra.mxu0 %v51
  %1003 = vmatprep.subr.mxu0 0.0
  %1004 = vmatpush1.msra.mxu0 %v50
  %1005 = vmatprep.subr.mxu0 0.0
  %1006 = vmatpush2.msra.mxu0 %v81
  %1007 = vmatprep.subr.mxu0 0.0
  %1008 = vmatpush2.msra.mxu0 %v80
  %1009 = vmatprep.subr.mxu0 0.0
  %1010 = vmatpush2.msra.mxu0 %v79
  %1011 = vmatprep.subr.mxu0 0.0
  %1012 = vmatpush2.msra.mxu0 %v78
  %1013 = vmatprep.subr.mxu0 0.0
  %1014 = vmatpush2.msra.mxu0 %v77
  %1015 = vmatprep.subr.mxu0 0.0
  %1016 = vmatpush2.msra.mxu0 %v76
  %1017 = vmatprep.subr.mxu0 0.0
  %1018 = vmatpush2.msra.mxu0 %v75
  %1019 = vmatprep.subr.mxu0 0.0
  %1020 = vmatpush2.msra.mxu0 %v74
  %1021 = vmatprep.subr.mxu0 0.0
  %1022 = vmatpush2.msra.mxu0 %v73
  %1023 = vmatprep.subr.mxu0 0.0
  %1024 = vmatpush2.msra.mxu0 %v72
  %1025 = vmatprep.subr.mxu0 0.0
  %1026 = vmatpush2.msra.mxu0 %v71
  %1027 = vmatprep.subr.mxu0 0.0
  %1028 = vmatpush2.msra.mxu0 %v70
  %1029 = vmatprep.subr.mxu0 0.0
  %1030 = vmatpush2.msra.mxu0 %v69
  %1031 = vmatprep.subr.mxu0 0.0
  %1032 = vmatpush2.msra.mxu0 %v68
  %1033 = vmatprep.subr.mxu0 0.0
  %1034 = vmatpush2.msra.mxu0 %v67
  %1035 = vmatprep.subr.mxu0 0.0
  %1036 = vmatpush2.msra.mxu0 %v66
  %1037 = vmatprep.mubr.f32.mxu0 %v972
  %1038 = vmatmul.mubr.f32.gmra.mxu0 %v965
  %v1039 = vpop.f32.mrf.mxu0
  %v1040 = vadd.f32 0.0, %v1039
  %v1041 = vpop.f32.mrf.mxu0
  %1042 = vdwg.mxu0
  %v1044 = vsel %vm615, %v1040, 0
  %1046 = vmatprep.subr.mxu0 0.0
  %1047 = vmatpush1.msra.mxu0 0.0
  %1048 = vmatprep.subr.mxu0 0.0
  %1049 = vmatpush1.msra.mxu0 0.0
  %1050 = vmatprep.subr.mxu0 0.0
  %1051 = vmatpush1.msra.mxu0 0.0
  %1052 = vmatprep.subr.mxu0 0.0
  %1053 = vmatpush1.msra.mxu0 0.0
  %1054 = vmatprep.subr.mxu0 0.0
  %1055 = vmatpush1.msra.mxu0 0.0
  %1056 = vmatprep.subr.mxu0 0.0
  %1057 = vmatpush1.msra.mxu0 0.0
  %1058 = vmatprep.subr.mxu0 0.0
  %1059 = vmatpush1.msra.mxu0 0.0
  %1060 = vmatprep.subr.mxu0 0.0
  %1061 = vmatpush1.msra.mxu0 0.0
  %1062 = vmatprep.subr.mxu0 0.0
  %1063 = vmatpush1.msra.mxu0 0.0
  %1064 = vmatprep.subr.mxu0 0.0
  %1065 = vmatpush1.msra.mxu0 0.0
  %1066 = vmatprep.subr.mxu0 0.0
  %1067 = vmatpush1.msra.mxu0 0.0
  %1068 = vmatprep.subr.mxu0 0.0
  %1069 = vmatpush1.msra.mxu0 0.0
  %1070 = vmatprep.subr.mxu0 0.0
  %1071 = vmatpush1.msra.mxu0 0.0
  %1072 = vmatprep.subr.mxu0 0.0
  %1073 = vmatpush1.msra.mxu0 0.0
  %1074 = vmatprep.subr.mxu0 0.0
  %1075 = vmatpush1.msra.mxu0 0.0
  %1076 = vmatprep.subr.mxu0 %v83
  %1077 = vmatpush1.msra.mxu0 %v82
  %1078 = vmatprep.subr.mxu0 0.0
  %1079 = vmatpush2.msra.mxu0 0.0
  %1080 = vmatprep.subr.mxu0 0.0
  %1081 = vmatpush2.msra.mxu0 0.0
  %1082 = vmatprep.subr.mxu0 0.0
  %1083 = vmatpush2.msra.mxu0 0.0
  %1084 = vmatprep.subr.mxu0 0.0
  %1085 = vmatpush2.msra.mxu0 0.0
  %1086 = vmatprep.subr.mxu0 0.0
  %1087 = vmatpush2.msra.mxu0 0.0
  %1088 = vmatprep.subr.mxu0 0.0
  %1089 = vmatpush2.msra.mxu0 0.0
  %1090 = vmatprep.subr.mxu0 0.0
  %1091 = vmatpush2.msra.mxu0 0.0
  %1092 = vmatprep.subr.mxu0 0.0
  %1093 = vmatpush2.msra.mxu0 0.0
  %1094 = vmatprep.subr.mxu0 0.0
  %1095 = vmatpush2.msra.mxu0 0.0
  %1096 = vmatprep.subr.mxu0 0.0
  %1097 = vmatpush2.msra.mxu0 0.0
  %1098 = vmatprep.subr.mxu0 0.0
  %1099 = vmatpush2.msra.mxu0 0.0
  %1100 = vmatprep.subr.mxu0 0.0
  %1101 = vmatpush2.msra.mxu0 0.0
  %1102 = vmatprep.subr.mxu0 0.0
  %1103 = vmatpush2.msra.mxu0 0.0
  %1104 = vmatprep.subr.mxu0 0.0
  %1105 = vmatpush2.msra.mxu0 0.0
  %1106 = vmatprep.subr.mxu0 0.0
  %1107 = vmatpush2.msra.mxu0 0.0
  %1108 = vmatprep.subr.mxu0 0.0
  %1109 = vmatpush2.msra.mxu0 0.0
  %1110 = vmatprep.mubr.f32.mxu0 0.0
  %1111 = vmatmul.mubr.f32.gmra.mxu0 %v1044
  %v1112 = vpop.f32.mrf.mxu0
  %v1113 = vadd.f32 0.0, %v1112
  %v1114 = vpop.f32.mrf.mxu0
  %v1115 = vadd.f32 0.0, %v1114
  %1116 = vdwg.mxu0
  %v1117 = vlaneseq
  %v1118 = vshrl.u32 %v1117, 7
  %v1119 = vsub.s32 0, %v1118
  %v1120 = vrot.slane %v1113, %v1119
  %v1121 = vlaneseq
  %v1122 = vshrl.u32 %v1121, 7
  %v1123 = vsub.s32 0, %v1122
  %v1124 = vrot.slane %v1115, %v1123
  %v1125 = vsub.f32 %v527, %v1120
  %v1126 = vsub.f32 %v528, %v1124
  %v1127 = vsub.f32 %v529, %v1120
  %v1128 = vsub.f32 %v530, %v1124
  %v1129 = vmul.f32 %v1125, %v1125
  %v1130 = vmul.f32 %v1126, %v1126
  %v1131 = vmul.f32 %v1127, %v1127
  %v1132 = vmul.f32 %v1128, %v1128
  %v1133 = vadd.f32 %v1129, %v1131
  %v1134 = vrot.slane %v1133, 4
  %v1135 = vadd.f32 %v1133, %v1134
  %v1136 = vrot.slane %v1135, 2
  %v1137 = vadd.f32 %v1135, %v1136
  %v1138 = vrot.slane %v1137, 1
  %v1139 = vadd.f32 %v1137, %v1138
  %v1140 = vadd.f32 %v1130, %v1132
  %v1141 = vrot.slane %v1140, 4
  %v1142 = vadd.f32 %v1140, %v1141
  %v1143 = vrot.slane %v1142, 2
  %v1144 = vadd.f32 %v1142, %v1143
  %v1145 = vrot.slane %v1144, 1
  %v1146 = vadd.f32 %v1144, %v1145
  %1147 = vmatprep.subr.mxu0 0.0
  %1148 = vmatpush1.msra.mxu0 %v65
  %1149 = vmatprep.subr.mxu0 0.0
  %1150 = vmatpush1.msra.mxu0 %v64
  %1151 = vmatprep.subr.mxu0 0.0
  %1152 = vmatpush1.msra.mxu0 %v63
  %1153 = vmatprep.subr.mxu0 0.0
  %1154 = vmatpush1.msra.mxu0 %v62
  %1155 = vmatprep.subr.mxu0 0.0
  %1156 = vmatpush1.msra.mxu0 %v61
  %1157 = vmatprep.subr.mxu0 0.0
  %1158 = vmatpush1.msra.mxu0 %v60
  %1159 = vmatprep.subr.mxu0 0.0
  %1160 = vmatpush1.msra.mxu0 %v59
  %1161 = vmatprep.subr.mxu0 0.0
  %1162 = vmatpush1.msra.mxu0 %v58
  %1163 = vmatprep.subr.mxu0 0.0
  %1164 = vmatpush1.msra.mxu0 %v57
  %1165 = vmatprep.subr.mxu0 0.0
  %1166 = vmatpush1.msra.mxu0 %v56
  %1167 = vmatprep.subr.mxu0 0.0
  %1168 = vmatpush1.msra.mxu0 %v55
  %1169 = vmatprep.subr.mxu0 0.0
  %1170 = vmatpush1.msra.mxu0 %v54
  %1171 = vmatprep.subr.mxu0 0.0
  %1172 = vmatpush1.msra.mxu0 %v53
  %1173 = vmatprep.subr.mxu0 0.0
  %1174 = vmatpush1.msra.mxu0 %v52
  %1175 = vmatprep.subr.mxu0 0.0
  %1176 = vmatpush1.msra.mxu0 %v51
  %1177 = vmatprep.subr.mxu0 0.0
  %1178 = vmatpush1.msra.mxu0 %v50
  %1179 = vmatprep.subr.mxu0 0.0
  %1180 = vmatpush2.msra.mxu0 %v81
  %1181 = vmatprep.subr.mxu0 0.0
  %1182 = vmatpush2.msra.mxu0 %v80
  %1183 = vmatprep.subr.mxu0 0.0
  %1184 = vmatpush2.msra.mxu0 %v79
  %1185 = vmatprep.subr.mxu0 0.0
  %1186 = vmatpush2.msra.mxu0 %v78
  %1187 = vmatprep.subr.mxu0 0.0
  %1188 = vmatpush2.msra.mxu0 %v77
  %1189 = vmatprep.subr.mxu0 0.0
  %1190 = vmatpush2.msra.mxu0 %v76
  %1191 = vmatprep.subr.mxu0 0.0
  %1192 = vmatpush2.msra.mxu0 %v75
  %1193 = vmatprep.subr.mxu0 0.0
  %1194 = vmatpush2.msra.mxu0 %v74
  %1195 = vmatprep.subr.mxu0 0.0
  %1196 = vmatpush2.msra.mxu0 %v73
  %1197 = vmatprep.subr.mxu0 0.0
  %1198 = vmatpush2.msra.mxu0 %v72
  %1199 = vmatprep.subr.mxu0 0.0
  %1200 = vmatpush2.msra.mxu0 %v71
  %1201 = vmatprep.subr.mxu0 0.0
  %1202 = vmatpush2.msra.mxu0 %v70
  %1203 = vmatprep.subr.mxu0 0.0
  %1204 = vmatpush2.msra.mxu0 %v69
  %1205 = vmatprep.subr.mxu0 0.0
  %1206 = vmatpush2.msra.mxu0 %v68
  %1207 = vmatprep.subr.mxu0 0.0
  %1208 = vmatpush2.msra.mxu0 %v67
  %1209 = vmatprep.subr.mxu0 0.0
  %1210 = vmatpush2.msra.mxu0 %v66
  %1211 = vmatprep.mubr.f32.mxu0 %v1146
  %1212 = vmatmul.mubr.f32.gmra.mxu0 %v1139
  %v1213 = vpop.f32.mrf.mxu0
  %v1214 = vadd.f32 0.0, %v1213
  %v1215 = vpop.f32.mrf.mxu0
  %1216 = vdwg.mxu0
  %v1218 = vsel %vm615, %v1214, 0
  %1220 = vmatprep.subr.mxu0 0.0
  %1221 = vmatpush1.msra.mxu0 0.0
  %1222 = vmatprep.subr.mxu0 0.0
  %1223 = vmatpush1.msra.mxu0 0.0
  %1224 = vmatprep.subr.mxu0 0.0
  %1225 = vmatpush1.msra.mxu0 0.0
  %1226 = vmatprep.subr.mxu0 0.0
  %1227 = vmatpush1.msra.mxu0 0.0
  %1228 = vmatprep.subr.mxu0 0.0
  %1229 = vmatpush1.msra.mxu0 0.0
  %1230 = vmatprep.subr.mxu0 0.0
  %1231 = vmatpush1.msra.mxu0 0.0
  %1232 = vmatprep.subr.mxu0 0.0
  %1233 = vmatpush1.msra.mxu0 0.0
  %1234 = vmatprep.subr.mxu0 0.0
  %1235 = vmatpush1.msra.mxu0 0.0
  %1236 = vmatprep.subr.mxu0 0.0
  %1237 = vmatpush1.msra.mxu0 0.0
  %1238 = vmatprep.subr.mxu0 0.0
  %1239 = vmatpush1.msra.mxu0 0.0
  %1240 = vmatprep.subr.mxu0 0.0
  %1241 = vmatpush1.msra.mxu0 0.0
  %1242 = vmatprep.subr.mxu0 0.0
  %1243 = vmatpush1.msra.mxu0 0.0
  %1244 = vmatprep.subr.mxu0 0.0
  %1245 = vmatpush1.msra.mxu0 0.0
  %1246 = vmatprep.subr.mxu0 0.0
  %1247 = vmatpush1.msra.mxu0 0.0
  %1248 = vmatprep.subr.mxu0 0.0
  %1249 = vmatpush1.msra.mxu0 0.0
  %1250 = vmatprep.subr.mxu0 %v83
  %1251 = vmatpush1.msra.mxu0 %v82
  %1252 = vmatprep.subr.mxu0 0.0
  %1253 = vmatpush2.msra.mxu0 0.0
  %1254 = vmatprep.subr.mxu0 0.0
  %1255 = vmatpush2.msra.mxu0 0.0
  %1256 = vmatprep.subr.mxu0 0.0
  %1257 = vmatpush2.msra.mxu0 0.0
  %1258 = vmatprep.subr.mxu0 0.0
  %1259 = vmatpush2.msra.mxu0 0.0
  %1260 = vmatprep.subr.mxu0 0.0
  %1261 = vmatpush2.msra.mxu0 0.0
  %1262 = vmatprep.subr.mxu0 0.0
  %1263 = vmatpush2.msra.mxu0 0.0
  %1264 = vmatprep.subr.mxu0 0.0
  %1265 = vmatpush2.msra.mxu0 0.0
  %1266 = vmatprep.subr.mxu0 0.0
  %1267 = vmatpush2.msra.mxu0 0.0
  %1268 = vmatprep.subr.mxu0 0.0
  %1269 = vmatpush2.msra.mxu0 0.0
  %1270 = vmatprep.subr.mxu0 0.0
  %1271 = vmatpush2.msra.mxu0 0.0
  %1272 = vmatprep.subr.mxu0 0.0
  %1273 = vmatpush2.msra.mxu0 0.0
  %1274 = vmatprep.subr.mxu0 0.0
  %1275 = vmatpush2.msra.mxu0 0.0
  %1276 = vmatprep.subr.mxu0 0.0
  %1277 = vmatpush2.msra.mxu0 0.0
  %1278 = vmatprep.subr.mxu0 0.0
  %1279 = vmatpush2.msra.mxu0 0.0
  %1280 = vmatprep.subr.mxu0 0.0
  %1281 = vmatpush2.msra.mxu0 0.0
  %1282 = vmatprep.subr.mxu0 0.0
  %1283 = vmatpush2.msra.mxu0 0.0
  %1284 = vmatprep.mubr.f32.mxu0 0.0
  %1285 = vmatmul.mubr.f32.gmra.mxu0 %v1218
  %v1286 = vpop.f32.mrf.mxu0
  %v1287 = vadd.f32 1e-05, %v1286
  %v1288 = vpop.f32.mrf.mxu0
  %v1289 = vadd.f32 1e-05, %v1288
  %1290 = vdwg.mxu0
  %v1291 = vrsqrt.pop %v1287
  %v1292 = vrsqrt.pop %v1289
  %v1293 = vlaneseq
  %v1294 = vshrl.u32 %v1293, 7
  %v1295 = vsub.s32 0, %v1294
  %v1296 = vrot.slane %v1291, %v1295
  %v1297 = vlaneseq
  %v1298 = vshrl.u32 %v1297, 7
  %v1299 = vsub.s32 0, %v1298
  %v1300 = vrot.slane %v1292, %v1299
  %v1301 = vmul.f32 %v1125, %v1296
  %v1302 = vmul.f32 %v1126, %v1300
  %v1303 = vmul.f32 %v1127, %v1296
  %v1304 = vmul.f32 %v1128, %v1300
  %v1305 = vmul.f32 %v1301, %v882
  %v1306 = vmul.f32 %v1302, %v886
  %v1307 = vmul.f32 %v1303, %v882
  %v1308 = vmul.f32 %v1304, %v886
  %v1309 = vadd.f32 %v1305, %v897
  %v1310 = vadd.f32 %v1306, %v901
  %v1311 = vadd.f32 %v1307, %v897
  %v1312 = vadd.f32 %v1308, %v901
  %v1313 = vxor.u32 %v1309, 2147483648
  %v1314 = vxor.u32 %v1310, 2147483648
  %v1315 = vxor.u32 %v1311, 2147483648
  %v1316 = vxor.u32 %v1312, 2147483648
  %v1317 = vmul.f32 %v1313, 1.442695
  %v1318 = vpow.pop %v1317
  %v1319 = vmul.f32 %v1314, 1.442695
  %v1320 = vpow.pop %v1319
  %v1321 = vmul.f32 %v1315, 1.442695
  %v1322 = vpow.pop %v1321
  %v1323 = vmul.f32 %v1316, 1.442695
  %v1324 = vpow.pop %v1323
  %v1325 = vadd.f32 %v1318, 1.0
  %v1326 = vadd.f32 %v1320, 1.0
  %v1327 = vadd.f32 %v1322, 1.0
  %v1328 = vadd.f32 %v1324, 1.0
  %v1329 = vrcp.pop %v1325
  %v1330 = vmul.f32 1.0, %v1329
  %v1331 = vrcp.pop %v1326
  %v1332 = vmul.f32 1.0, %v1331
  %v1333 = vrcp.pop %v1327
  %v1334 = vmul.f32 1.0, %v1333
  %v1335 = vrcp.pop %v1328
  %v1336 = vmul.f32 1.0, %v1335
  %v1337 = vmul.f32 %v1309, %v1330
  %v1338 = vmul.f32 %v1310, %v1332
  %v1339 = vmul.f32 %v1311, %v1334
  %v1340 = vmul.f32 %v1312, %v1336
  %v1345 = vrot.slane %v1337, 7
  %v1346 = vrot.slane %v1338, 7
  %v1347 = vrot.slane %v1339, 7
  %v1348 = vsel %vm940, %v1345, %v1347
  %v1349 = vrot.slane %v1340, 7
  %v1350 = vsel %vm940, %v1346, %v1349
  %1357 = vst [vmem:[#allocation2 + $0x30] sm:$0xfe] %v1345
  %1358 = vst [vmem:[#allocation2 + $0x38] sm:$0xfe] %v1346
  %1359 = vst [vmem:[#allocation2 + $0x40] sm:$0xff] %v1348
  %1360 = vst [vmem:[#allocation2 + $0x48] sm:$0xff] %v1350
  %1361 = vst [vmem:[#allocation2 + $0x50] sm:$0x1] %v1347
  %1362 = vst [vmem:[#allocation2 + $0x58] sm:$0x1] %v1349
  %v1363 = vld [vmem:[#allocation2] sm:$0xff]
  %v1364 = vld [vmem:[#allocation2 + $0x8] sm:$0xff]
  %v1365 = vld [vmem:[#allocation2 + $0x10] sm:$0xff]
  %v1366 = vld [vmem:[#allocation2 + $0x18] sm:$0xff]
  %v1367 = vld [vmem:[#allocation2 + $0x20] sm:$0xff]
  %v1368 = vld [vmem:[#allocation2 + $0x28] sm:$0xff]
  %v1369 = vld [vmem:[#allocation2 + $0x30] sm:$0xff]
  %v1370 = vld [vmem:[#allocation2 + $0x38] sm:$0xff]
  %v1371 = vld [vmem:[#allocation2 + $0x40] sm:$0xff]
  %v1372 = vld [vmem:[#allocation2 + $0x48] sm:$0xff]
  %v1373 = vld [vmem:[#allocation2 + $0x50] sm:$0x3f]
  %v1374 = vld [vmem:[#allocation2 + $0x58] sm:$0x3f]
  %v1375 = vld [vmem:[%s5] sm:$0xff]
  %v1376 = vld [vmem:[%s5 + $0x8] sm:$0xff]
  %v1377 = vld [vmem:[%s5 + $0x10] sm:$0xff]
  %v1378 = vld [vmem:[%s5 + $0x18] sm:$0xff]
  %v1379 = vld [vmem:[%s5 + $0x20] sm:$0xff]
  %v1380 = vld [vmem:[%s5 + $0x28] sm:$0xff]
  %v1381 = vld [vmem:[%s5 + $0x30] sm:$0xff]
  %v1382 = vld [vmem:[%s5 + $0x38] sm:$0xff]
  %v1383 = vld [vmem:[%s5 + $0x40] sm:$0xff]
  %v1384 = vld [vmem:[%s5 + $0x48] sm:$0xff]
  %v1385 = vld [vmem:[%s5 + $0x50] sm:$0xff]
  %v1386 = vld [vmem:[%s5 + $0x58] sm:$0xff]
  %v1387 = vld [vmem:[%s5 + $0x60] sm:$0xff]
  %v1388 = vld [vmem:[%s5 + $0x68] sm:$0xff]
  %v1389 = vld [vmem:[%s5 + $0x70] sm:$0xff]
  %v1390 = vld [vmem:[%s5 + $0x78] sm:$0xff]
  %v1391 = vld [vmem:[%s5 + $0x80] sm:$0xff]
  %v1392 = vld [vmem:[%s5 + $0x88] sm:$0xff]
  %v1393 = vld [vmem:[%s5 + $0x90] sm:$0xff]
  %v1394 = vld [vmem:[%s5 + $0x98] sm:$0xff]
  %v1395 = vld [vmem:[%s5 + $0xa0] sm:$0xff]
  %v1396 = vld [vmem:[%s5 + $0xa8] sm:$0xff]
  %v1397 = vld [vmem:[%s5 + $0xb0] sm:$0xff]
  %v1398 = vld [vmem:[%s5 + $0xb8] sm:$0xff]
  %v1399 = vld [vmem:[%s5 + $0xc0] sm:$0xff]
  %v1400 = vld [vmem:[%s5 + $0xc8] sm:$0xff]
  %v1401 = vld [vmem:[%s5 + $0xd0] sm:$0xff]
  %v1402 = vld [vmem:[%s5 + $0xd8] sm:$0xff]
  %v1403 = vld [vmem:[%s5 + $0xe0] sm:$0xff]
  %v1404 = vld [vmem:[%s5 + $0xe8] sm:$0xff]
  %v1405 = vld [vmem:[%s5 + $0xf0] sm:$0xff]
  %v1406 = vld [vmem:[%s5 + $0xf8] sm:$0xff]
  %v1407 = vld [vmem:[%s5 + $0x100] sm:$0xff]
  %v1408 = vld [vmem:[%s5 + $0x108] sm:$0xff]
  %v1409 = vld [vmem:[%s5 + $0x110] sm:$0xff]
  %v1410 = vld [vmem:[%s5 + $0x118] sm:$0xff]
  %v1411 = vld [vmem:[%s5 + $0x120] sm:$0xff]
  %v1412 = vld [vmem:[%s5 + $0x128] sm:$0xff]
  %v1413 = vld [vmem:[%s5 + $0x130] sm:$0xff]
  %v1414 = vld [vmem:[%s5 + $0x138] sm:$0xff]
  %v1415 = vld [vmem:[%s5 + $0x140] sm:$0xff]
  %v1416 = vld [vmem:[%s5 + $0x148] sm:$0xff]
  %v1417 = vld [vmem:[%s5 + $0x150] sm:$0xff]
  %v1418 = vld [vmem:[%s5 + $0x158] sm:$0xff]
  %v1419 = vld [vmem:[%s5 + $0x160] sm:$0xff]
  %v1420 = vld [vmem:[%s5 + $0x168] sm:$0xff]
  %v1421 = vld [vmem:[%s5 + $0x170] sm:$0xff]
  %v1422 = vld [vmem:[%s5 + $0x178] sm:$0xff]
  %v1423 = vld [vmem:[%s5 + $0x180] sm:$0xff]
  %v1424 = vld [vmem:[%s5 + $0x188] sm:$0xff]
  %v1425 = vld [vmem:[%s5 + $0x190] sm:$0xff]
  %v1426 = vld [vmem:[%s5 + $0x198] sm:$0xff]
  %v1427 = vld [vmem:[%s5 + $0x1a0] sm:$0xff]
  %v1428 = vld [vmem:[%s5 + $0x1a8] sm:$0xff]
  %v1429 = vld [vmem:[%s5 + $0x1b0] sm:$0xff]
  %v1430 = vld [vmem:[%s5 + $0x1b8] sm:$0xff]
  %v1431 = vld [vmem:[%s5 + $0x1c0] sm:$0xff]
  %v1432 = vld [vmem:[%s5 + $0x1c8] sm:$0xff]
  %v1433 = vld [vmem:[%s5 + $0x1d0] sm:$0xff]
  %v1434 = vld [vmem:[%s5 + $0x1d8] sm:$0xff]
  %v1435 = vld [vmem:[%s5 + $0x1e0] sm:$0xff]
  %v1436 = vld [vmem:[%s5 + $0x1e8] sm:$0xff]
  %v1437 = vld [vmem:[%s5 + $0x1f0] sm:$0xff]
  %v1438 = vld [vmem:[%s5 + $0x1f8] sm:$0xff]
  %v1439 = vld [vmem:[#allocation2] sm:$0xfe]
  %v1440 = vld [vmem:[#allocation2 + $0x8] sm:$0xfe]
  %v1441 = vld [vmem:[#allocation2 + $0x50] sm:$0x7f]
  %v1442 = vld [vmem:[#allocation2 + $0x58] sm:$0x7f]
  %s1443 = scalar_lea.vmem %s5, 512
  %v1444 = vld [vmem:[%s1443] sm:$0xff]
  %v1445 = vld [vmem:[%s1443 + $0x8] sm:$0xff]
  %v1446 = vld [vmem:[%s1443 + $0x10] sm:$0xff]
  %v1447 = vld [vmem:[%s1443 + $0x18] sm:$0xff]
  %v1448 = vld [vmem:[%s1443 + $0x20] sm:$0xff]
  %v1449 = vld [vmem:[%s1443 + $0x28] sm:$0xff]
  %v1450 = vld [vmem:[%s1443 + $0x30] sm:$0xff]
  %v1451 = vld [vmem:[%s1443 + $0x38] sm:$0xff]
  %v1452 = vld [vmem:[%s1443 + $0x40] sm:$0xff]
  %v1453 = vld [vmem:[%s1443 + $0x48] sm:$0xff]
  %v1454 = vld [vmem:[%s1443 + $0x50] sm:$0xff]
  %v1455 = vld [vmem:[%s1443 + $0x58] sm:$0xff]
  %v1456 = vld [vmem:[%s1443 + $0x60] sm:$0xff]
  %v1457 = vld [vmem:[%s1443 + $0x68] sm:$0xff]
  %v1458 = vld [vmem:[%s1443 + $0x70] sm:$0xff]
  %v1459 = vld [vmem:[%s1443 + $0x78] sm:$0xff]
  %v1460 = vld [vmem:[%s1443 + $0x80] sm:$0xff]
  %v1461 = vld [vmem:[%s1443 + $0x88] sm:$0xff]
  %v1462 = vld [vmem:[%s1443 + $0x90] sm:$0xff]
  %v1463 = vld [vmem:[%s1443 + $0x98] sm:$0xff]
  %v1464 = vld [vmem:[%s1443 + $0xa0] sm:$0xff]
  %v1465 = vld [vmem:[%s1443 + $0xa8] sm:$0xff]
  %v1466 = vld [vmem:[%s1443 + $0xb0] sm:$0xff]
  %v1467 = vld [vmem:[%s1443 + $0xb8] sm:$0xff]
  %v1468 = vld [vmem:[%s1443 + $0xc0] sm:$0xff]
  %v1469 = vld [vmem:[%s1443 + $0xc8] sm:$0xff]
  %v1470 = vld [vmem:[%s1443 + $0xd0] sm:$0xff]
  %v1471 = vld [vmem:[%s1443 + $0xd8] sm:$0xff]
  %v1472 = vld [vmem:[%s1443 + $0xe0] sm:$0xff]
  %v1473 = vld [vmem:[%s1443 + $0xe8] sm:$0xff]
  %v1474 = vld [vmem:[%s1443 + $0xf0] sm:$0xff]
  %v1475 = vld [vmem:[%s1443 + $0xf8] sm:$0xff]
  %v1476 = vld [vmem:[%s1443 + $0x100] sm:$0xff]
  %v1477 = vld [vmem:[%s1443 + $0x108] sm:$0xff]
  %v1478 = vld [vmem:[%s1443 + $0x110] sm:$0xff]
  %v1479 = vld [vmem:[%s1443 + $0x118] sm:$0xff]
  %v1480 = vld [vmem:[%s1443 + $0x120] sm:$0xff]
  %v1481 = vld [vmem:[%s1443 + $0x128] sm:$0xff]
  %v1482 = vld [vmem:[%s1443 + $0x130] sm:$0xff]
  %v1483 = vld [vmem:[%s1443 + $0x138] sm:$0xff]
  %v1484 = vld [vmem:[%s1443 + $0x140] sm:$0xff]
  %v1485 = vld [vmem:[%s1443 + $0x148] sm:$0xff]
  %v1486 = vld [vmem:[%s1443 + $0x150] sm:$0xff]
  %v1487 = vld [vmem:[%s1443 + $0x158] sm:$0xff]
  %v1488 = vld [vmem:[%s1443 + $0x160] sm:$0xff]
  %v1489 = vld [vmem:[%s1443 + $0x168] sm:$0xff]
  %v1490 = vld [vmem:[%s1443 + $0x170] sm:$0xff]
  %v1491 = vld [vmem:[%s1443 + $0x178] sm:$0xff]
  %v1492 = vld [vmem:[%s1443 + $0x180] sm:$0xff]
  %v1493 = vld [vmem:[%s1443 + $0x188] sm:$0xff]
  %v1494 = vld [vmem:[%s1443 + $0x190] sm:$0xff]
  %v1495 = vld [vmem:[%s1443 + $0x198] sm:$0xff]
  %v1496 = vld [vmem:[%s1443 + $0x1a0] sm:$0xff]
  %v1497 = vld [vmem:[%s1443 + $0x1a8] sm:$0xff]
  %v1498 = vld [vmem:[%s1443 + $0x1b0] sm:$0xff]
  %v1499 = vld [vmem:[%s1443 + $0x1b8] sm:$0xff]
  %v1500 = vld [vmem:[%s1443 + $0x1c0] sm:$0xff]
  %v1501 = vld [vmem:[%s1443 + $0x1c8] sm:$0xff]
  %v1502 = vld [vmem:[%s1443 + $0x1d0] sm:$0xff]
  %v1503 = vld [vmem:[%s1443 + $0x1d8] sm:$0xff]
  %v1504 = vld [vmem:[%s1443 + $0x1e0] sm:$0xff]
  %v1505 = vld [vmem:[%s1443 + $0x1e8] sm:$0xff]
  %v1506 = vld [vmem:[%s1443 + $0x1f0] sm:$0xff]
  %v1507 = vld [vmem:[%s1443 + $0x1f8] sm:$0xff]
  %vm1520 = vcmask 1046528
  %v1521 = vrot.slane %v1439, 1
  %v1522 = vrot.slane %v1365, 1
  %v1523 = vsel %vm1520, %v1521, %v1522
  %v1524 = vrot.slane %v1440, 1
  %v1525 = vrot.slane %v1366, 1
  %v1526 = vsel %vm1520, %v1524, %v1525
  %v1527 = vrot.slane %v1367, 1
  %v1528 = vsel %vm1520, %v1522, %v1527
  %v1529 = vrot.slane %v1368, 1
  %v1530 = vsel %vm1520, %v1525, %v1529
  %v1531 = vrot.slane %v1369, 1
  %v1532 = vsel %vm1520, %v1527, %v1531
  %v1533 = vrot.slane %v1370, 1
  %v1534 = vsel %vm1520, %v1529, %v1533
  %v1535 = vrot.slane %v1371, 1
  %v1536 = vsel %vm1520, %v1531, %v1535
  %v1537 = vrot.slane %v1372, 1
  %v1538 = vsel %vm1520, %v1533, %v1537
  %v1539 = vrot.slane %v1441, 1
  %v1540 = vsel %vm1520, %v1535, %v1539
  %v1541 = vrot.slane %v1442, 1
  %v1542 = vsel %vm1520, %v1537, %v1541
  %1555 = vmatprep.subr.mxu0 %v1475
  %1556 = vmatpush1.msra.mxu0 %v1474
  %1557 = vmatprep.subr.mxu0 %v1473
  %1558 = vmatpush1.msra.mxu0 %v1472
  %1559 = vmatprep.subr.mxu0 %v1471
  %1560 = vmatpush1.msra.mxu0 %v1470
  %1561 = vmatprep.subr.mxu0 %v1469
  %1562 = vmatpush1.msra.mxu0 %v1468
  %1563 = vmatprep.subr.mxu0 %v1467
  %1564 = vmatpush1.msra.mxu0 %v1466
  %1565 = vmatprep.subr.mxu0 %v1465
  %1566 = vmatpush1.msra.mxu0 %v1464
  %1567 = vmatprep.subr.mxu0 %v1463
  %1568 = vmatpush1.msra.mxu0 %v1462
  %1569 = vmatprep.subr.mxu0 %v1461
  %1570 = vmatpush1.msra.mxu0 %v1460
  %1571 = vmatprep.subr.mxu0 %v1459
  %1572 = vmatpush1.msra.mxu0 %v1458
  %1573 = vmatprep.subr.mxu0 %v1457
  %1574 = vmatpush1.msra.mxu0 %v1456
  %1575 = vmatprep.subr.mxu0 %v1455
  %1576 = vmatpush1.msra.mxu0 %v1454
  %1577 = vmatprep.subr.mxu0 %v1453
  %1578 = vmatpush1.msra.mxu0 %v1452
  %1579 = vmatprep.subr.mxu0 %v1451
  %1580 = vmatpush1.msra.mxu0 %v1450
  %1581 = vmatprep.subr.mxu0 %v1449
  %1582 = vmatpush1.msra.mxu0 %v1448
  %1583 = vmatprep.subr.mxu0 %v1447
  %1584 = vmatpush1.msra.mxu0 %v1446
  %1585 = vmatprep.subr.mxu0 %v1445
  %1586 = vmatpush1.msra.mxu0 %v1444
  %1587 = vmatprep.subr.mxu0 %v1507
  %1588 = vmatpush2.msra.mxu0 %v1506
  %1589 = vmatprep.subr.mxu0 %v1505
  %1590 = vmatpush2.msra.mxu0 %v1504
  %1591 = vmatprep.subr.mxu0 %v1503
  %1592 = vmatpush2.msra.mxu0 %v1502
  %1593 = vmatprep.subr.mxu0 %v1501
  %1594 = vmatpush2.msra.mxu0 %v1500
  %1595 = vmatprep.subr.mxu0 %v1499
  %1596 = vmatpush2.msra.mxu0 %v1498
  %1597 = vmatprep.subr.mxu0 %v1497
  %1598 = vmatpush2.msra.mxu0 %v1496
  %1599 = vmatprep.subr.mxu0 %v1495
  %1600 = vmatpush2.msra.mxu0 %v1494
  %1601 = vmatprep.subr.mxu0 %v1493
  %1602 = vmatpush2.msra.mxu0 %v1492
  %1603 = vmatprep.subr.mxu0 %v1491
  %1604 = vmatpush2.msra.mxu0 %v1490
  %1605 = vmatprep.subr.mxu0 %v1489
  %1606 = vmatpush2.msra.mxu0 %v1488
  %1607 = vmatprep.subr.mxu0 %v1487
  %1608 = vmatpush2.msra.mxu0 %v1486
  %1609 = vmatprep.subr.mxu0 %v1485
  %1610 = vmatpush2.msra.mxu0 %v1484
  %1611 = vmatprep.subr.mxu0 %v1483
  %1612 = vmatpush2.msra.mxu0 %v1482
  %1613 = vmatprep.subr.mxu0 %v1481
  %1614 = vmatpush2.msra.mxu0 %v1480
  %1615 = vmatprep.subr.mxu0 %v1479
  %1616 = vmatpush2.msra.mxu0 %v1478
  %1617 = vmatprep.subr.mxu0 %v1477
  %1618 = vmatpush2.msra.mxu0 %v1476
  %1619 = vmatprep.mubr.f32.mxu0 %v1526
  %1620 = vmatmul.mubr.f32.gmra.mxu0 %v1523
  %v1621 = vpop.f32.mrf.mxu0
  %v1622 = vadd.f32 0.0, %v1621
  %v1623 = vpop.f32.mrf.mxu0
  %v1624 = vadd.f32 0.0, %v1623
  %1625 = vmatprep.mubr.f32.mxu0 %v1530
  %1626 = vmatmul.mubr.f32.gmra.mxu0 %v1528
  %v1627 = vpop.f32.mrf.mxu0
  %v1628 = vadd.f32 0.0, %v1627
  %v1629 = vpop.f32.mrf.mxu0
  %v1630 = vadd.f32 0.0, %v1629
  %1631 = vmatprep.mubr.f32.mxu0 %v1534
  %1632 = vmatmul.mubr.f32.gmra.mxu0 %v1532
  %v1633 = vpop.f32.mrf.mxu0
  %v1634 = vpop.f32.mrf.mxu0
  %1635 = vmatprep.mubr.f32.mxu0 %v1538
  %1636 = vmatmul.mubr.f32.gmra.mxu0 %v1536
  %v1637 = vpop.f32.mrf.mxu0
  %v1638 = vadd.f32 0.0, %v1637
  %v1639 = vpop.f32.mrf.mxu0
  %v1640 = vadd.f32 0.0, %v1639
  %1641 = vmatprep.mubr.f32.mxu0 %v1542
  %1642 = vmatmul.mubr.f32.gmra.mxu0 %v1540
  %v1643 = vpop.f32.mrf.mxu0
  %v1644 = vadd.f32 0.0, %v1643
  %v1645 = vpop.f32.mrf.mxu0
  %v1646 = vadd.f32 0.0, %v1645
  %1647 = vmatprep.mubr.f32.mxu0 %v1541
  %1648 = vmatmul.mubr.f32.gmra.mxu0 %v1539
  %v1649 = vpop.f32.mrf.mxu0
  %v1650 = vpop.f32.mrf.mxu0
  %1651 = vdwg.mxu0
  %1652 = vmatprep.subr.mxu0 %v1406
  %1653 = vmatpush1.msra.mxu0 %v1405
  %1654 = vmatprep.subr.mxu0 %v1404
  %1655 = vmatpush1.msra.mxu0 %v1403
  %1656 = vmatprep.subr.mxu0 %v1402
  %1657 = vmatpush1.msra.mxu0 %v1401
  %1658 = vmatprep.subr.mxu0 %v1400
  %1659 = vmatpush1.msra.mxu0 %v1399
  %1660 = vmatprep.subr.mxu0 %v1398
  %1661 = vmatpush1.msra.mxu0 %v1397
  %1662 = vmatprep.subr.mxu0 %v1396
  %1663 = vmatpush1.msra.mxu0 %v1395
  %1664 = vmatprep.subr.mxu0 %v1394
  %1665 = vmatpush1.msra.mxu0 %v1393
  %1666 = vmatprep.subr.mxu0 %v1392
  %1667 = vmatpush1.msra.mxu0 %v1391
  %1668 = vmatprep.subr.mxu0 %v1390
  %1669 = vmatpush1.msra.mxu0 %v1389
  %1670 = vmatprep.subr.mxu0 %v1388
  %1671 = vmatpush1.msra.mxu0 %v1387
  %1672 = vmatprep.subr.mxu0 %v1386
  %1673 = vmatpush1.msra.mxu0 %v1385
  %1674 = vmatprep.subr.mxu0 %v1384
  %1675 = vmatpush1.msra.mxu0 %v1383
  %1676 = vmatprep.subr.mxu0 %v1382
  %1677 = vmatpush1.msra.mxu0 %v1381
  %1678 = vmatprep.subr.mxu0 %v1380
  %1679 = vmatpush1.msra.mxu0 %v1379
  %1680 = vmatprep.subr.mxu0 %v1378
  %1681 = vmatpush1.msra.mxu0 %v1377
  %1682 = vmatprep.subr.mxu0 %v1376
  %1683 = vmatpush1.msra.mxu0 %v1375
  %1684 = vmatprep.subr.mxu0 %v1438
  %1685 = vmatpush2.msra.mxu0 %v1437
  %1686 = vmatprep.subr.mxu0 %v1436
  %1687 = vmatpush2.msra.mxu0 %v1435
  %1688 = vmatprep.subr.mxu0 %v1434
  %1689 = vmatpush2.msra.mxu0 %v1433
  %1690 = vmatprep.subr.mxu0 %v1432
  %1691 = vmatpush2.msra.mxu0 %v1431
  %1692 = vmatprep.subr.mxu0 %v1430
  %1693 = vmatpush2.msra.mxu0 %v1429
  %1694 = vmatprep.subr.mxu0 %v1428
  %1695 = vmatpush2.msra.mxu0 %v1427
  %1696 = vmatprep.subr.mxu0 %v1426
  %1697 = vmatpush2.msra.mxu0 %v1425
  %1698 = vmatprep.subr.mxu0 %v1424
  %1699 = vmatpush2.msra.mxu0 %v1423
  %1700 = vmatprep.subr.mxu0 %v1422
  %1701 = vmatpush2.msra.mxu0 %v1421
  %1702 = vmatprep.subr.mxu0 %v1420
  %1703 = vmatpush2.msra.mxu0 %v1419
  %1704 = vmatprep.subr.mxu0 %v1418
  %1705 = vmatpush2.msra.mxu0 %v1417
  %1706 = vmatprep.subr.mxu0 %v1416
  %1707 = vmatpush2.msra.mxu0 %v1415
  %1708 = vmatprep.subr.mxu0 %v1414
  %1709 = vmatpush2.msra.mxu0 %v1413
  %1710 = vmatprep.subr.mxu0 %v1412
  %1711 = vmatpush2.msra.mxu0 %v1411
  %1712 = vmatprep.subr.mxu0 %v1410
  %1713 = vmatpush2.msra.mxu0 %v1409
  %1714 = vmatprep.subr.mxu0 %v1408
  %1715 = vmatpush2.msra.mxu0 %v1407
  %1716 = vmatprep.mubr.f32.mxu0 %v1364
  %1717 = vmatmul.mubr.f32.gmra.mxu0 %v1363
  %v1718 = vpop.f32.mrf.mxu0
  %v1719 = vadd.f32 %v1622, %v1718
  %v1720 = vpop.f32.mrf.mxu0
  %v1721 = vadd.f32 %v1624, %v1720
  %1722 = vmatprep.mubr.f32.mxu0 %v1366
  %1723 = vmatmul.mubr.f32.gmra.mxu0 %v1365
  %v1724 = vpop.f32.mrf.mxu0
  %v1725 = vadd.f32 %v1628, %v1724
  %v1726 = vpop.f32.mrf.mxu0
  %v1727 = vadd.f32 %v1630, %v1726
  %1728 = vmatprep.mubr.f32.mxu0 %v1368
  %1729 = vmatmul.mubr.f32.gmra.mxu0 %v1367
  %v1730 = vpop.f32.mrf.mxu0
  %v1731 = vpop.f32.mrf.mxu0
  %1732 = vmatprep.mubr.f32.mxu0 %v1370
  %1733 = vmatmul.mubr.f32.gmra.mxu0 %v1369
  %v1734 = vpop.f32.mrf.mxu0
  %v1735 = vadd.f32 %v1638, %v1734
  %v1736 = vpop.f32.mrf.mxu0
  %v1737 = vadd.f32 %v1640, %v1736
  %1738 = vmatprep.mubr.f32.mxu0 %v1372
  %1739 = vmatmul.mubr.f32.gmra.mxu0 %v1371
  %v1740 = vpop.f32.mrf.mxu0
  %v1741 = vadd.f32 %v1644, %v1740
  %v1742 = vpop.f32.mrf.mxu0
  %v1743 = vadd.f32 %v1646, %v1742
  %1744 = vmatprep.mubr.f32.mxu0 %v1374
  %1745 = vmatmul.mubr.f32.gmra.mxu0 %v1373
  %v1746 = vpop.f32.mrf.mxu0
  %v1747 = vpop.f32.mrf.mxu0
  %1748 = vdwg.mxu0
  %v1749 = vld [vmem:[#allocation2] sm:$0xfc]
  %v1750 = vld [vmem:[#allocation2 + $0x8] sm:$0xfc]
  %v1751 = vld [vmem:[#allocation2 + $0x50] sm:$0xff]
  %v1752 = vld [vmem:[#allocation2 + $0x58] sm:$0xff]
  %s1753 = scalar_lea.vmem %s5, 1024
  %v1754 = vld [vmem:[%s1753] sm:$0xff]
  %v1755 = vld [vmem:[%s1753 + $0x8] sm:$0xff]
  %v1756 = vld [vmem:[%s1753 + $0x10] sm:$0xff]
  %v1757 = vld [vmem:[%s1753 + $0x18] sm:$0xff]
  %v1758 = vld [vmem:[%s1753 + $0x20] sm:$0xff]
  %v1759 = vld [vmem:[%s1753 + $0x28] sm:$0xff]
  %v1760 = vld [vmem:[%s1753 + $0x30] sm:$0xff]
  %v1761 = vld [vmem:[%s1753 + $0x38] sm:$0xff]
  %v1762 = vld [vmem:[%s1753 + $0x40] sm:$0xff]
  %v1763 = vld [vmem:[%s1753 + $0x48] sm:$0xff]
  %v1764 = vld [vmem:[%s1753 + $0x50] sm:$0xff]
  %v1765 = vld [vmem:[%s1753 + $0x58] sm:$0xff]
  %v1766 = vld [vmem:[%s1753 + $0x60] sm:$0xff]
  %v1767 = vld [vmem:[%s1753 + $0x68] sm:$0xff]
  %v1768 = vld [vmem:[%s1753 + $0x70] sm:$0xff]
  %v1769 = vld [vmem:[%s1753 + $0x78] sm:$0xff]
  %v1770 = vld [vmem:[%s1753 + $0x80] sm:$0xff]
  %v1771 = vld [vmem:[%s1753 + $0x88] sm:$0xff]
  %v1772 = vld [vmem:[%s1753 + $0x90] sm:$0xff]
  %v1773 = vld [vmem:[%s1753 + $0x98] sm:$0xff]
  %v1774 = vld [vmem:[%s1753 + $0xa0] sm:$0xff]
  %v1775 = vld [vmem:[%s1753 + $0xa8] sm:$0xff]
  %v1776 = vld [vmem:[%s1753 + $0xb0] sm:$0xff]
  %v1777 = vld [vmem:[%s1753 + $0xb8] sm:$0xff]
  %v1778 = vld [vmem:[%s1753 + $0xc0] sm:$0xff]
  %v1779 = vld [vmem:[%s1753 + $0xc8] sm:$0xff]
  %v1780 = vld [vmem:[%s1753 + $0xd0] sm:$0xff]
  %v1781 = vld [vmem:[%s1753 + $0xd8] sm:$0xff]
  %v1782 = vld [vmem:[%s1753 + $0xe0] sm:$0xff]
  %v1783 = vld [vmem:[%s1753 + $0xe8] sm:$0xff]
  %v1784 = vld [vmem:[%s1753 + $0xf0] sm:$0xff]
  %v1785 = vld [vmem:[%s1753 + $0xf8] sm:$0xff]
  %v1786 = vld [vmem:[%s1753 + $0x100] sm:$0xff]
  %v1787 = vld [vmem:[%s1753 + $0x108] sm:$0xff]
  %v1788 = vld [vmem:[%s1753 + $0x110] sm:$0xff]
  %v1789 = vld [vmem:[%s1753 + $0x118] sm:$0xff]
  %v1790 = vld [vmem:[%s1753 + $0x120] sm:$0xff]
  %v1791 = vld [vmem:[%s1753 + $0x128] sm:$0xff]
  %v1792 = vld [vmem:[%s1753 + $0x130] sm:$0xff]
  %v1793 = vld [vmem:[%s1753 + $0x138] sm:$0xff]
  %v1794 = vld [vmem:[%s1753 + $0x140] sm:$0xff]
  %v1795 = vld [vmem:[%s1753 + $0x148] sm:$0xff]
  %v1796 = vld [vmem:[%s1753 + $0x150] sm:$0xff]
  %v1797 = vld [vmem:[%s1753 + $0x158] sm:$0xff]
  %v1798 = vld [vmem:[%s1753 + $0x160] sm:$0xff]
  %v1799 = vld [vmem:[%s1753 + $0x168] sm:$0xff]
  %v1800 = vld [vmem:[%s1753 + $0x170] sm:$0xff]
  %v1801 = vld [vmem:[%s1753 + $0x178] sm:$0xff]
  %v1802 = vld [vmem:[%s1753 + $0x180] sm:$0xff]
  %v1803 = vld [vmem:[%s1753 + $0x188] sm:$0xff]
  %v1804 = vld [vmem:[%s1753 + $0x190] sm:$0xff]
  %v1805 = vld [vmem:[%s1753 + $0x198] sm:$0xff]
  %v1806 = vld [vmem:[%s1753 + $0x1a0] sm:$0xff]
  %v1807 = vld [vmem:[%s1753 + $0x1a8] sm:$0xff]
  %v1808 = vld [vmem:[%s1753 + $0x1b0] sm:$0xff]
  %v1809 = vld [vmem:[%s1753 + $0x1b8] sm:$0xff]
  %v1810 = vld [vmem:[%s1753 + $0x1c0] sm:$0xff]
  %v1811 = vld [vmem:[%s1753 + $0x1c8] sm:$0xff]
  %v1812 = vld [vmem:[%s1753 + $0x1d0] sm:$0xff]
  %v1813 = vld [vmem:[%s1753 + $0x1d8] sm:$0xff]
  %v1814 = vld [vmem:[%s1753 + $0x1e0] sm:$0xff]
  %v1815 = vld [vmem:[%s1753 + $0x1e8] sm:$0xff]
  %v1816 = vld [vmem:[%s1753 + $0x1f0] sm:$0xff]
  %v1817 = vld [vmem:[%s1753 + $0x1f8] sm:$0xff]
  %vm1822 = vcmask 1045504
  %v1823 = vrot.slane %v1749, 2
  %v1824 = vrot.slane %v1365, 2
  %v1825 = vsel %vm1822, %v1823, %v1824
  %v1826 = vrot.slane %v1750, 2
  %v1827 = vrot.slane %v1366, 2
  %v1828 = vsel %vm1822, %v1826, %v1827
  %v1829 = vrot.slane %v1367, 2
  %v1830 = vsel %vm1822, %v1824, %v1829
  %v1831 = vrot.slane %v1368, 2
  %v1832 = vsel %vm1822, %v1827, %v1831
  %v1833 = vrot.slane %v1369, 2
  %v1834 = vsel %vm1822, %v1829, %v1833
  %v1835 = vrot.slane %v1370, 2
  %v1836 = vsel %vm1822, %v1831, %v1835
  %v1837 = vrot.slane %v1371, 2
  %v1838 = vsel %vm1822, %v1833, %v1837
  %v1839 = vrot.slane %v1372, 2
  %v1840 = vsel %vm1822, %v1835, %v1839
  %v1841 = vrot.slane %v1751, 2
  %v1842 = vsel %vm1822, %v1837, %v1841
  %v1843 = vrot.slane %v1752, 2
  %v1844 = vsel %vm1822, %v1839, %v1843
  %1857 = vmatprep.subr.mxu0 %v1785
  %1858 = vmatpush1.msra.mxu0 %v1784
  %1859 = vmatprep.subr.mxu0 %v1783
  %1860 = vmatpush1.msra.mxu0 %v1782
  %1861 = vmatprep.subr.mxu0 %v1781
  %1862 = vmatpush1.msra.mxu0 %v1780
  %1863 = vmatprep.subr.mxu0 %v1779
  %1864 = vmatpush1.msra.mxu0 %v1778
  %1865 = vmatprep.subr.mxu0 %v1777
  %1866 = vmatpush1.msra.mxu0 %v1776
  %1867 = vmatprep.subr.mxu0 %v1775
  %1868 = vmatpush1.msra.mxu0 %v1774
  %1869 = vmatprep.subr.mxu0 %v1773
  %1870 = vmatpush1.msra.mxu0 %v1772
  %1871 = vmatprep.subr.mxu0 %v1771
  %1872 = vmatpush1.msra.mxu0 %v1770
  %1873 = vmatprep.subr.mxu0 %v1769
  %1874 = vmatpush1.msra.mxu0 %v1768
  %1875 = vmatprep.subr.mxu0 %v1767
  %1876 = vmatpush1.msra.mxu0 %v1766
  %1877 = vmatprep.subr.mxu0 %v1765
  %1878 = vmatpush1.msra.mxu0 %v1764
  %1879 = vmatprep.subr.mxu0 %v1763
  %1880 = vmatpush1.msra.mxu0 %v1762
  %1881 = vmatprep.subr.mxu0 %v1761
  %1882 = vmatpush1.msra.mxu0 %v1760
  %1883 = vmatprep.subr.mxu0 %v1759
  %1884 = vmatpush1.msra.mxu0 %v1758
  %1885 = vmatprep.subr.mxu0 %v1757
  %1886 = vmatpush1.msra.mxu0 %v1756
  %1887 = vmatprep.subr.mxu0 %v1755
  %1888 = vmatpush1.msra.mxu0 %v1754
  %1889 = vmatprep.subr.mxu0 %v1817
  %1890 = vmatpush2.msra.mxu0 %v1816
  %1891 = vmatprep.subr.mxu0 %v1815
  %1892 = vmatpush2.msra.mxu0 %v1814
  %1893 = vmatprep.subr.mxu0 %v1813
  %1894 = vmatpush2.msra.mxu0 %v1812
  %1895 = vmatprep.subr.mxu0 %v1811
  %1896 = vmatpush2.msra.mxu0 %v1810
  %1897 = vmatprep.subr.mxu0 %v1809
  %1898 = vmatpush2.msra.mxu0 %v1808
  %1899 = vmatprep.subr.mxu0 %v1807
  %1900 = vmatpush2.msra.mxu0 %v1806
  %1901 = vmatprep.subr.mxu0 %v1805
  %1902 = vmatpush2.msra.mxu0 %v1804
  %1903 = vmatprep.subr.mxu0 %v1803
  %1904 = vmatpush2.msra.mxu0 %v1802
  %1905 = vmatprep.subr.mxu0 %v1801
  %1906 = vmatpush2.msra.mxu0 %v1800
  %1907 = vmatprep.subr.mxu0 %v1799
  %1908 = vmatpush2.msra.mxu0 %v1798
  %1909 = vmatprep.subr.mxu0 %v1797
  %1910 = vmatpush2.msra.mxu0 %v1796
  %1911 = vmatprep.subr.mxu0 %v1795
  %1912 = vmatpush2.msra.mxu0 %v1794
  %1913 = vmatprep.subr.mxu0 %v1793
  %1914 = vmatpush2.msra.mxu0 %v1792
  %1915 = vmatprep.subr.mxu0 %v1791
  %1916 = vmatpush2.msra.mxu0 %v1790
  %1917 = vmatprep.subr.mxu0 %v1789
  %1918 = vmatpush2.msra.mxu0 %v1788
  %1919 = vmatprep.subr.mxu0 %v1787
  %1920 = vmatpush2.msra.mxu0 %v1786
  %1921 = vmatprep.mubr.f32.mxu0 %v1828
  %1922 = vmatmul.mubr.f32.gmra.mxu0 %v1825
  %v1923 = vpop.f32.mrf.mxu0
  %v1924 = vadd.f32 0.0, %v1923
  %v1925 = vpop.f32.mrf.mxu0
  %v1926 = vadd.f32 0.0, %v1925
  %1927 = vmatprep.mubr.f32.mxu0 %v1832
  %1928 = vmatmul.mubr.f32.gmra.mxu0 %v1830
  %v1929 = vpop.f32.mrf.mxu0
  %v1930 = vadd.f32 0.0, %v1929
  %v1931 = vpop.f32.mrf.mxu0
  %v1932 = vadd.f32 0.0, %v1931
  %1933 = vmatprep.mubr.f32.mxu0 %v1836
  %1934 = vmatmul.mubr.f32.gmra.mxu0 %v1834
  %v1935 = vpop.f32.mrf.mxu0
  %v1936 = vpop.f32.mrf.mxu0
  %1937 = vmatprep.mubr.f32.mxu0 %v1840
  %1938 = vmatmul.mubr.f32.gmra.mxu0 %v1838
  %v1939 = vpop.f32.mrf.mxu0
  %v1940 = vadd.f32 0.0, %v1939
  %v1941 = vpop.f32.mrf.mxu0
  %v1942 = vadd.f32 0.0, %v1941
  %1943 = vmatprep.mubr.f32.mxu0 %v1844
  %1944 = vmatmul.mubr.f32.gmra.mxu0 %v1842
  %v1945 = vpop.f32.mrf.mxu0
  %v1946 = vadd.f32 0.0, %v1945
  %v1947 = vpop.f32.mrf.mxu0
  %v1948 = vadd.f32 0.0, %v1947
  %1949 = vmatprep.mubr.f32.mxu0 %v1843
  %1950 = vmatmul.mubr.f32.gmra.mxu0 %v1841
  %v1951 = vpop.f32.mrf.mxu0
  %v1952 = vpop.f32.mrf.mxu0
  %1953 = vdwg.mxu0
  %v1954 = vadd.f32 %v1719, %v1924
  %v1955 = vadd.f32 %v1721, %v1926
  %v1956 = vadd.f32 %v1725, %v1930
  %v1957 = vadd.f32 %v1727, %v1932
  %v1958 = vadd.f32 %v1735, %v1940
  %v1959 = vadd.f32 %v1737, %v1942
  %v1960 = vadd.f32 %v1741, %v1946
  %v1961 = vadd.f32 %v1743, %v1948
  %v1963 = vlaneseq
  %v1964 = vshrl.u32 %v1963, 7
  %v1965 = vsub.s32 0, %v1964
  %v1966 = vrot.slane %v47, %v1965
  %v1967 = vlaneseq
  %v1968 = vshrl.u32 %v1967, 7
  %v1969 = vsub.s32 1, %v1968
  %v1970 = vrot.slane %v47, %v1969
  %v1973 = vadd.f32 %v1954, %v1966
  %v1974 = vadd.f32 %v1955, %v1970
  %v1975 = vadd.f32 %v1956, %v1966
  %v1976 = vadd.f32 %v1957, %v1970
  %v1977 = vadd.f32 %v1958, %v1966
  %v1978 = vadd.f32 %v1959, %v1970
  %v1979 = vadd.f32 %v1960, %v1966
  %v1980 = vadd.f32 %v1961, %v1970
  %v1981 = vld [vmem:[%s0] sm:$0xff]
  %v1982 = vld [vmem:[%s0 + $0x8] sm:$0xff]
  %v1983 = vld [vmem:[%s0 + $0x10] sm:$0xff]
  %v1984 = vld [vmem:[%s0 + $0x18] sm:$0xff]
  %v1985 = vld [vmem:[%s0 + $0x20] sm:$0xff]
  %v1986 = vld [vmem:[%s0 + $0x28] sm:$0xff]
  %v1987 = vld [vmem:[%s11] sm:$0xff]
  %v1988 = vld [vmem:[%s11 + $0x8] sm:$0xff]
  %v1989 = vld [vmem:[%s11 + $0x10] sm:$0xff]
  %v1990 = vld [vmem:[%s11 + $0x18] sm:$0xff]
  %v1991 = vld [vmem:[%s11 + $0x20] sm:$0xff]
  %v1992 = vld [vmem:[%s11 + $0x28] sm:$0xff]
  %v1993 = vld [vmem:[%s11 + $0x30] sm:$0xff]
  %v1994 = vld [vmem:[%s11 + $0x38] sm:$0xff]
  %v1995 = vld [vmem:[%s11 + $0x40] sm:$0xff]
  %v1996 = vld [vmem:[%s11 + $0x48] sm:$0xff]
  %v1997 = vld [vmem:[%s11 + $0x50] sm:$0xff]
  %v1998 = vld [vmem:[%s11 + $0x58] sm:$0xff]
  %v1999 = vld [vmem:[%s11 + $0x60] sm:$0xff]
  %v2000 = vld [vmem:[%s11 + $0x68] sm:$0xff]
  %v2001 = vld [vmem:[%s11 + $0x70] sm:$0xff]
  %v2002 = vld [vmem:[%s11 + $0x78] sm:$0xff]
  %v2003 = vld [vmem:[%s11 + $0x80] sm:$0xff]
  %v2004 = vld [vmem:[%s11 + $0x88] sm:$0xff]
  %v2005 = vld [vmem:[%s11 + $0x90] sm:$0xff]
  %v2006 = vld [vmem:[%s11 + $0x98] sm:$0xff]
  %v2007 = vld [vmem:[%s11 + $0xa0] sm:$0xff]
  %v2008 = vld [vmem:[%s11 + $0xa8] sm:$0xff]
  %v2009 = vld [vmem:[%s11 + $0xb0] sm:$0xff]
  %v2010 = vld [vmem:[%s11 + $0xb8] sm:$0xff]
  %v2011 = vld [vmem:[%s11 + $0xc0] sm:$0xff]
  %v2012 = vld [vmem:[%s11 + $0xc8] sm:$0xff]
  %v2013 = vld [vmem:[%s11 + $0xd0] sm:$0xff]
  %v2014 = vld [vmem:[%s11 + $0xd8] sm:$0xff]
  %v2015 = vld [vmem:[%s11 + $0xe0] sm:$0xff]
  %v2016 = vld [vmem:[%s11 + $0xe8] sm:$0xff]
  %v2017 = vld [vmem:[%s11 + $0xf0] sm:$0xff]
  %v2018 = vld [vmem:[%s11 + $0xf8] sm:$0xff]
  %v2019 = vld [vmem:[%s12] sm:$0x3]
  %v2021 = vlaneseq
  %v2022 = vshrl.u32 %v2021, 7
  %v2023 = vsub.s32 0, %v2022
  %v2024 = vrot.slane %v2019, %v2023
  %v2025 = vlaneseq
  %v2026 = vshrl.u32 %v2025, 7
  %v2027 = vsub.s32 1, %v2026
  %v2028 = vrot.slane %v2019, %v2027
  %2031 = vmatprep.subr.mxu0 %v2018
  %2032 = vmatpush1.msra.mxu0 %v2017
  %2033 = vmatprep.subr.mxu0 %v2016
  %2034 = vmatpush1.msra.mxu0 %v2015
  %2035 = vmatprep.subr.mxu0 %v2014
  %2036 = vmatpush1.msra.mxu0 %v2013
  %2037 = vmatprep.subr.mxu0 %v2012
  %2038 = vmatpush1.msra.mxu0 %v2011
  %2039 = vmatprep.subr.mxu0 %v2010
  %2040 = vmatpush1.msra.mxu0 %v2009
  %2041 = vmatprep.subr.mxu0 %v2008
  %2042 = vmatpush1.msra.mxu0 %v2007
  %2043 = vmatprep.subr.mxu0 %v2006
  %2044 = vmatpush1.msra.mxu0 %v2005
  %2045 = vmatprep.subr.mxu0 %v2004
  %2046 = vmatpush1.msra.mxu0 %v2003
  %2047 = vmatprep.subr.mxu0 %v2002
  %2048 = vmatpush1.msra.mxu0 %v2001
  %2049 = vmatprep.subr.mxu0 %v2000
  %2050 = vmatpush1.msra.mxu0 %v1999
  %2051 = vmatprep.subr.mxu0 %v1998
  %2052 = vmatpush1.msra.mxu0 %v1997
  %2053 = vmatprep.subr.mxu0 %v1996
  %2054 = vmatpush1.msra.mxu0 %v1995
  %2055 = vmatprep.subr.mxu0 %v1994
  %2056 = vmatpush1.msra.mxu0 %v1993
  %2057 = vmatprep.subr.mxu0 %v1992
  %2058 = vmatpush1.msra.mxu0 %v1991
  %2059 = vmatprep.subr.mxu0 %v1990
  %2060 = vmatpush1.msra.mxu0 %v1989
  %2061 = vmatprep.subr.mxu0 %v1988
  %2062 = vmatpush1.msra.mxu0 %v1987
  %2063 = vmatprep.subr.mxu0 0.0
  %2064 = vmatpush2.msra.mxu0 0.0
  %2065 = vmatprep.subr.mxu0 0.0
  %2066 = vmatpush2.msra.mxu0 0.0
  %2067 = vmatprep.subr.mxu0 0.0
  %2068 = vmatpush2.msra.mxu0 0.0
  %2069 = vmatprep.subr.mxu0 0.0
  %2070 = vmatpush2.msra.mxu0 0.0
  %2071 = vmatprep.subr.mxu0 0.0
  %2072 = vmatpush2.msra.mxu0 0.0
  %2073 = vmatprep.subr.mxu0 0.0
  %2074 = vmatpush2.msra.mxu0 0.0
  %2075 = vmatprep.subr.mxu0 0.0
  %2076 = vmatpush2.msra.mxu0 0.0
  %2077 = vmatprep.subr.mxu0 0.0
  %2078 = vmatpush2.msra.mxu0 0.0
  %2079 = vmatprep.subr.mxu0 0.0
  %2080 = vmatpush2.msra.mxu0 0.0
  %2081 = vmatprep.subr.mxu0 0.0
  %2082 = vmatpush2.msra.mxu0 0.0
  %2083 = vmatprep.subr.mxu0 0.0
  %2084 = vmatpush2.msra.mxu0 0.0
  %2085 = vmatprep.subr.mxu0 0.0
  %2086 = vmatpush2.msra.mxu0 0.0
  %2087 = vmatprep.subr.mxu0 0.0
  %2088 = vmatpush2.msra.mxu0 0.0
  %2089 = vmatprep.subr.mxu0 0.0
  %2090 = vmatpush2.msra.mxu0 0.0
  %2091 = vmatprep.subr.mxu0 0.0
  %2092 = vmatpush2.msra.mxu0 0.0
  %2093 = vmatprep.subr.mxu0 0.0
  %2094 = vmatpush2.msra.mxu0 0.0
  %2095 = vmatprep.mubr.f32.mxu0 0.0
  %2096 = vmatmul.mubr.f32.gmra.mxu0 %v1981
  %v2097 = vpop.f32.mrf.mxu0
  %v2098 = vadd.f32 %v2024, %v2097
  %v2099 = vpop.f32.mrf.mxu0
  %v2100 = vadd.f32 %v2028, %v2099
  %2101 = vmatprep.mubr.f32.mxu0 0.0
  %2102 = vmatmul.mubr.f32.gmra.mxu0 %v1982
  %v2103 = vpop.f32.mrf.mxu0
  %v2104 = vadd.f32 %v2024, %v2103
  %v2105 = vpop.f32.mrf.mxu0
  %v2106 = vadd.f32 %v2028, %v2105
  %2107 = vmatprep.mubr.f32.mxu0 0.0
  %2108 = vmatmul.mubr.f32.gmra.mxu0 %v1983
  %v2109 = vpop.f32.mrf.mxu0
  %v2110 = vadd.f32 %v2024, %v2109
  %v2111 = vpop.f32.mrf.mxu0
  %v2112 = vadd.f32 %v2028, %v2111
  %2113 = vmatprep.mubr.f32.mxu0 0.0
  %2114 = vmatmul.mubr.f32.gmra.mxu0 %v1984
  %v2115 = vpop.f32.mrf.mxu0
  %v2116 = vadd.f32 %v2024, %v2115
  %v2117 = vpop.f32.mrf.mxu0
  %v2118 = vadd.f32 %v2028, %v2117
  %2119 = vmatprep.mubr.f32.mxu0 0.0
  %2120 = vmatmul.mubr.f32.gmra.mxu0 %v1985
  %v2121 = vpop.f32.mrf.mxu0
  %v2122 = vadd.f32 %v2024, %v2121
  %v2123 = vpop.f32.mrf.mxu0
  %v2124 = vadd.f32 %v2028, %v2123
  %2125 = vmatprep.mubr.f32.mxu0 0.0
  %2126 = vmatmul.mubr.f32.gmra.mxu0 %v1986
  %v2127 = vpop.f32.mrf.mxu0
  %v2128 = vadd.f32 %v2024, %v2127
  %v2129 = vpop.f32.mrf.mxu0
  %v2130 = vadd.f32 %v2028, %v2129
  %2131 = vdwg.mxu0
  %v2132 = vadd.f32 %v1973, %v1975
  %v2133 = vrot.slane %v2132, 4
  %v2134 = vadd.f32 %v2132, %v2133
  %v2135 = vrot.slane %v2134, 2
  %v2136 = vadd.f32 %v2134, %v2135
  %v2137 = vrot.slane %v2136, 1
  %v2138 = vadd.f32 %v2136, %v2137
  %v2139 = vadd.f32 %v1974, %v1976
  %v2140 = vrot.slane %v2139, 4
  %v2141 = vadd.f32 %v2139, %v2140
  %v2142 = vrot.slane %v2141, 2
  %v2143 = vadd.f32 %v2141, %v2142
  %v2144 = vrot.slane %v2143, 1
  %v2145 = vadd.f32 %v2143, %v2144
  %2146 = vmatprep.subr.mxu0 0.0
  %2147 = vmatpush1.msra.mxu0 %v65
  %2148 = vmatprep.subr.mxu0 0.0
  %2149 = vmatpush1.msra.mxu0 %v64
  %2150 = vmatprep.subr.mxu0 0.0
  %2151 = vmatpush1.msra.mxu0 %v63
  %2152 = vmatprep.subr.mxu0 0.0
  %2153 = vmatpush1.msra.mxu0 %v62
  %2154 = vmatprep.subr.mxu0 0.0
  %2155 = vmatpush1.msra.mxu0 %v61
  %2156 = vmatprep.subr.mxu0 0.0
  %2157 = vmatpush1.msra.mxu0 %v60
  %2158 = vmatprep.subr.mxu0 0.0
  %2159 = vmatpush1.msra.mxu0 %v59
  %2160 = vmatprep.subr.mxu0 0.0
  %2161 = vmatpush1.msra.mxu0 %v58
  %2162 = vmatprep.subr.mxu0 0.0
  %2163 = vmatpush1.msra.mxu0 %v57
  %2164 = vmatprep.subr.mxu0 0.0
  %2165 = vmatpush1.msra.mxu0 %v56
  %2166 = vmatprep.subr.mxu0 0.0
  %2167 = vmatpush1.msra.mxu0 %v55
  %2168 = vmatprep.subr.mxu0 0.0
  %2169 = vmatpush1.msra.mxu0 %v54
  %2170 = vmatprep.subr.mxu0 0.0
  %2171 = vmatpush1.msra.mxu0 %v53
  %2172 = vmatprep.subr.mxu0 0.0
  %2173 = vmatpush1.msra.mxu0 %v52
  %2174 = vmatprep.subr.mxu0 0.0
  %2175 = vmatpush1.msra.mxu0 %v51
  %2176 = vmatprep.subr.mxu0 0.0
  %2177 = vmatpush1.msra.mxu0 %v50
  %2178 = vmatprep.subr.mxu0 0.0
  %2179 = vmatpush2.msra.mxu0 %v81
  %2180 = vmatprep.subr.mxu0 0.0
  %2181 = vmatpush2.msra.mxu0 %v80
  %2182 = vmatprep.subr.mxu0 0.0
  %2183 = vmatpush2.msra.mxu0 %v79
  %2184 = vmatprep.subr.mxu0 0.0
  %2185 = vmatpush2.msra.mxu0 %v78
  %2186 = vmatprep.subr.mxu0 0.0
  %2187 = vmatpush2.msra.mxu0 %v77
  %2188 = vmatprep.subr.mxu0 0.0
  %2189 = vmatpush2.msra.mxu0 %v76
  %2190 = vmatprep.subr.mxu0 0.0
  %2191 = vmatpush2.msra.mxu0 %v75
  %2192 = vmatprep.subr.mxu0 0.0
  %2193 = vmatpush2.msra.mxu0 %v74
  %2194 = vmatprep.subr.mxu0 0.0
  %2195 = vmatpush2.msra.mxu0 %v73
  %2196 = vmatprep.subr.mxu0 0.0
  %2197 = vmatpush2.msra.mxu0 %v72
  %2198 = vmatprep.subr.mxu0 0.0
  %2199 = vmatpush2.msra.mxu0 %v71
  %2200 = vmatprep.subr.mxu0 0.0
  %2201 = vmatpush2.msra.mxu0 %v70
  %2202 = vmatprep.subr.mxu0 0.0
  %2203 = vmatpush2.msra.mxu0 %v69
  %2204 = vmatprep.subr.mxu0 0.0
  %2205 = vmatpush2.msra.mxu0 %v68
  %2206 = vmatprep.subr.mxu0 0.0
  %2207 = vmatpush2.msra.mxu0 %v67
  %2208 = vmatprep.subr.mxu0 0.0
  %2209 = vmatpush2.msra.mxu0 %v66
  %2210 = vmatprep.mubr.f32.mxu0 %v2145
  %2211 = vmatmul.mubr.f32.gmra.mxu0 %v2138
  %v2212 = vpop.f32.mrf.mxu0
  %v2213 = vadd.f32 0.0, %v2212
  %v2214 = vpop.f32.mrf.mxu0
  %2215 = vdwg.mxu0
  %v2217 = vsel %vm615, %v2213, 0
  %2219 = vmatprep.subr.mxu0 0.0
  %2220 = vmatpush1.msra.mxu0 0.0
  %2221 = vmatprep.subr.mxu0 0.0
  %2222 = vmatpush1.msra.mxu0 0.0
  %2223 = vmatprep.subr.mxu0 0.0
  %2224 = vmatpush1.msra.mxu0 0.0
  %2225 = vmatprep.subr.mxu0 0.0
  %2226 = vmatpush1.msra.mxu0 0.0
  %2227 = vmatprep.subr.mxu0 0.0
  %2228 = vmatpush1.msra.mxu0 0.0
  %2229 = vmatprep.subr.mxu0 0.0
  %2230 = vmatpush1.msra.mxu0 0.0
  %2231 = vmatprep.subr.mxu0 0.0
  %2232 = vmatpush1.msra.mxu0 0.0
  %2233 = vmatprep.subr.mxu0 0.0
  %2234 = vmatpush1.msra.mxu0 0.0
  %2235 = vmatprep.subr.mxu0 0.0
  %2236 = vmatpush1.msra.mxu0 0.0
  %2237 = vmatprep.subr.mxu0 0.0
  %2238 = vmatpush1.msra.mxu0 0.0
  %2239 = vmatprep.subr.mxu0 0.0
  %2240 = vmatpush1.msra.mxu0 0.0
  %2241 = vmatprep.subr.mxu0 0.0
  %2242 = vmatpush1.msra.mxu0 0.0
  %2243 = vmatprep.subr.mxu0 0.0
  %2244 = vmatpush1.msra.mxu0 0.0
  %2245 = vmatprep.subr.mxu0 0.0
  %2246 = vmatpush1.msra.mxu0 0.0
  %2247 = vmatprep.subr.mxu0 0.0
  %2248 = vmatpush1.msra.mxu0 0.0
  %2249 = vmatprep.subr.mxu0 %v83
  %2250 = vmatpush1.msra.mxu0 %v82
  %2251 = vmatprep.subr.mxu0 0.0
  %2252 = vmatpush2.msra.mxu0 0.0
  %2253 = vmatprep.subr.mxu0 0.0
  %2254 = vmatpush2.msra.mxu0 0.0
  %2255 = vmatprep.subr.mxu0 0.0
  %2256 = vmatpush2.msra.mxu0 0.0
  %2257 = vmatprep.subr.mxu0 0.0
  %2258 = vmatpush2.msra.mxu0 0.0
  %2259 = vmatprep.subr.mxu0 0.0
  %2260 = vmatpush2.msra.mxu0 0.0
  %2261 = vmatprep.subr.mxu0 0.0
  %2262 = vmatpush2.msra.mxu0 0.0
  %2263 = vmatprep.subr.mxu0 0.0
  %2264 = vmatpush2.msra.mxu0 0.0
  %2265 = vmatprep.subr.mxu0 0.0
  %2266 = vmatpush2.msra.mxu0 0.0
  %2267 = vmatprep.subr.mxu0 0.0
  %2268 = vmatpush2.msra.mxu0 0.0
  %2269 = vmatprep.subr.mxu0 0.0
  %2270 = vmatpush2.msra.mxu0 0.0
  %2271 = vmatprep.subr.mxu0 0.0
  %2272 = vmatpush2.msra.mxu0 0.0
  %2273 = vmatprep.subr.mxu0 0.0
  %2274 = vmatpush2.msra.mxu0 0.0
  %2275 = vmatprep.subr.mxu0 0.0
  %2276 = vmatpush2.msra.mxu0 0.0
  %2277 = vmatprep.subr.mxu0 0.0
  %2278 = vmatpush2.msra.mxu0 0.0
  %2279 = vmatprep.subr.mxu0 0.0
  %2280 = vmatpush2.msra.mxu0 0.0
  %2281 = vmatprep.subr.mxu0 0.0
  %2282 = vmatpush2.msra.mxu0 0.0
  %2283 = vmatprep.mubr.f32.mxu0 0.0
  %2284 = vmatmul.mubr.f32.gmra.mxu0 %v2217
  %v2285 = vpop.f32.mrf.mxu0
  %v2286 = vadd.f32 0.0, %v2285
  %v2287 = vpop.f32.mrf.mxu0
  %v2288 = vadd.f32 0.0, %v2287
  %2289 = vdwg.mxu0
  %v2290 = vlaneseq
  %v2291 = vshrl.u32 %v2290, 7
  %v2292 = vsub.s32 0, %v2291
  %v2293 = vrot.slane %v2286, %v2292
  %v2294 = vlaneseq
  %v2295 = vshrl.u32 %v2294, 7
  %v2296 = vsub.s32 0, %v2295
  %v2297 = vrot.slane %v2288, %v2296
  %v2298 = vsub.f32 %v1973, %v2293
  %v2299 = vsub.f32 %v1974, %v2297
  %v2300 = vsub.f32 %v1975, %v2293
  %v2301 = vsub.f32 %v1976, %v2297
  %v2302 = vmul.f32 %v2298, %v2298
  %v2303 = vmul.f32 %v2299, %v2299
  %v2304 = vmul.f32 %v2300, %v2300
  %v2305 = vmul.f32 %v2301, %v2301
  %v2306 = vadd.f32 %v2302, %v2304
  %v2307 = vrot.slane %v2306, 4
  %v2308 = vadd.f32 %v2306, %v2307
  %v2309 = vrot.slane %v2308, 2
  %v2310 = vadd.f32 %v2308, %v2309
  %v2311 = vrot.slane %v2310, 1
  %v2312 = vadd.f32 %v2310, %v2311
  %v2313 = vadd.f32 %v2303, %v2305
  %v2314 = vrot.slane %v2313, 4
  %v2315 = vadd.f32 %v2313, %v2314
  %v2316 = vrot.slane %v2315, 2
  %v2317 = vadd.f32 %v2315, %v2316
  %v2318 = vrot.slane %v2317, 1
  %v2319 = vadd.f32 %v2317, %v2318
  %2320 = vmatprep.subr.mxu0 0.0
  %2321 = vmatpush1.msra.mxu0 %v65
  %2322 = vmatprep.subr.mxu0 0.0
  %2323 = vmatpush1.msra.mxu0 %v64
  %2324 = vmatprep.subr.mxu0 0.0
  %2325 = vmatpush1.msra.mxu0 %v63
  %2326 = vmatprep.subr.mxu0 0.0
  %2327 = vmatpush1.msra.mxu0 %v62
  %2328 = vmatprep.subr.mxu0 0.0
  %2329 = vmatpush1.msra.mxu0 %v61
  %2330 = vmatprep.subr.mxu0 0.0
  %2331 = vmatpush1.msra.mxu0 %v60
  %2332 = vmatprep.subr.mxu0 0.0
  %2333 = vmatpush1.msra.mxu0 %v59
  %2334 = vmatprep.subr.mxu0 0.0
  %2335 = vmatpush1.msra.mxu0 %v58
  %2336 = vmatprep.subr.mxu0 0.0
  %2337 = vmatpush1.msra.mxu0 %v57
  %2338 = vmatprep.subr.mxu0 0.0
  %2339 = vmatpush1.msra.mxu0 %v56
  %2340 = vmatprep.subr.mxu0 0.0
  %2341 = vmatpush1.msra.mxu0 %v55
  %2342 = vmatprep.subr.mxu0 0.0
  %2343 = vmatpush1.msra.mxu0 %v54
  %2344 = vmatprep.subr.mxu0 0.0
  %2345 = vmatpush1.msra.mxu0 %v53
  %2346 = vmatprep.subr.mxu0 0.0
  %2347 = vmatpush1.msra.mxu0 %v52
  %2348 = vmatprep.subr.mxu0 0.0
  %2349 = vmatpush1.msra.mxu0 %v51
  %2350 = vmatprep.subr.mxu0 0.0
  %2351 = vmatpush1.msra.mxu0 %v50
  %2352 = vmatprep.subr.mxu0 0.0
  %2353 = vmatpush2.msra.mxu0 %v81
  %2354 = vmatprep.subr.mxu0 0.0
  %2355 = vmatpush2.msra.mxu0 %v80
  %2356 = vmatprep.subr.mxu0 0.0
  %2357 = vmatpush2.msra.mxu0 %v79
  %2358 = vmatprep.subr.mxu0 0.0
  %2359 = vmatpush2.msra.mxu0 %v78
  %2360 = vmatprep.subr.mxu0 0.0
  %2361 = vmatpush2.msra.mxu0 %v77
  %2362 = vmatprep.subr.mxu0 0.0
  %2363 = vmatpush2.msra.mxu0 %v76
  %2364 = vmatprep.subr.mxu0 0.0
  %2365 = vmatpush2.msra.mxu0 %v75
  %2366 = vmatprep.subr.mxu0 0.0
  %2367 = vmatpush2.msra.mxu0 %v74
  %2368 = vmatprep.subr.mxu0 0.0
  %2369 = vmatpush2.msra.mxu0 %v73
  %2370 = vmatprep.subr.mxu0 0.0
  %2371 = vmatpush2.msra.mxu0 %v72
  %2372 = vmatprep.subr.mxu0 0.0
  %2373 = vmatpush2.msra.mxu0 %v71
  %2374 = vmatprep.subr.mxu0 0.0
  %2375 = vmatpush2.msra.mxu0 %v70
  %2376 = vmatprep.subr.mxu0 0.0
  %2377 = vmatpush2.msra.mxu0 %v69
  %2378 = vmatprep.subr.mxu0 0.0
  %2379 = vmatpush2.msra.mxu0 %v68
  %2380 = vmatprep.subr.mxu0 0.0
  %2381 = vmatpush2.msra.mxu0 %v67
  %2382 = vmatprep.subr.mxu0 0.0
  %2383 = vmatpush2.msra.mxu0 %v66
  %2384 = vmatprep.mubr.f32.mxu0 %v2319
  %2385 = vmatmul.mubr.f32.gmra.mxu0 %v2312
  %v2386 = vpop.f32.mrf.mxu0
  %v2387 = vadd.f32 0.0, %v2386
  %v2388 = vpop.f32.mrf.mxu0
  %2389 = vdwg.mxu0
  %v2391 = vsel %vm615, %v2387, 0
  %2393 = vmatprep.subr.mxu0 0.0
  %2394 = vmatpush1.msra.mxu0 0.0
  %2395 = vmatprep.subr.mxu0 0.0
  %2396 = vmatpush1.msra.mxu0 0.0
  %2397 = vmatprep.subr.mxu0 0.0
  %2398 = vmatpush1.msra.mxu0 0.0
  %2399 = vmatprep.subr.mxu0 0.0
  %2400 = vmatpush1.msra.mxu0 0.0
  %2401 = vmatprep.subr.mxu0 0.0
  %2402 = vmatpush1.msra.mxu0 0.0
  %2403 = vmatprep.subr.mxu0 0.0
  %2404 = vmatpush1.msra.mxu0 0.0
  %2405 = vmatprep.subr.mxu0 0.0
  %2406 = vmatpush1.msra.mxu0 0.0
  %2407 = vmatprep.subr.mxu0 0.0
  %2408 = vmatpush1.msra.mxu0 0.0
  %2409 = vmatprep.subr.mxu0 0.0
  %2410 = vmatpush1.msra.mxu0 0.0
  %2411 = vmatprep.subr.mxu0 0.0
  %2412 = vmatpush1.msra.mxu0 0.0
  %2413 = vmatprep.subr.mxu0 0.0
  %2414 = vmatpush1.msra.mxu0 0.0
  %2415 = vmatprep.subr.mxu0 0.0
  %2416 = vmatpush1.msra.mxu0 0.0
  %2417 = vmatprep.subr.mxu0 0.0
  %2418 = vmatpush1.msra.mxu0 0.0
  %2419 = vmatprep.subr.mxu0 0.0
  %2420 = vmatpush1.msra.mxu0 0.0
  %2421 = vmatprep.subr.mxu0 0.0
  %2422 = vmatpush1.msra.mxu0 0.0
  %2423 = vmatprep.subr.mxu0 %v83
  %2424 = vmatpush1.msra.mxu0 %v82
  %2425 = vmatprep.subr.mxu0 0.0
  %2426 = vmatpush2.msra.mxu0 0.0
  %2427 = vmatprep.subr.mxu0 0.0
  %2428 = vmatpush2.msra.mxu0 0.0
  %2429 = vmatprep.subr.mxu0 0.0
  %2430 = vmatpush2.msra.mxu0 0.0
  %2431 = vmatprep.subr.mxu0 0.0
  %2432 = vmatpush2.msra.mxu0 0.0
  %2433 = vmatprep.subr.mxu0 0.0
  %2434 = vmatpush2.msra.mxu0 0.0
  %2435 = vmatprep.subr.mxu0 0.0
  %2436 = vmatpush2.msra.mxu0 0.0
  %2437 = vmatprep.subr.mxu0 0.0
  %2438 = vmatpush2.msra.mxu0 0.0
  %2439 = vmatprep.subr.mxu0 0.0
  %2440 = vmatpush2.msra.mxu0 0.0
  %2441 = vmatprep.subr.mxu0 0.0
  %2442 = vmatpush2.msra.mxu0 0.0
  %2443 = vmatprep.subr.mxu0 0.0
  %2444 = vmatpush2.msra.mxu0 0.0
  %2445 = vmatprep.subr.mxu0 0.0
  %2446 = vmatpush2.msra.mxu0 0.0
  %2447 = vmatprep.subr.mxu0 0.0
  %2448 = vmatpush2.msra.mxu0 0.0
  %2449 = vmatprep.subr.mxu0 0.0
  %2450 = vmatpush2.msra.mxu0 0.0
  %2451 = vmatprep.subr.mxu0 0.0
  %2452 = vmatpush2.msra.mxu0 0.0
  %2453 = vmatprep.subr.mxu0 0.0
  %2454 = vmatpush2.msra.mxu0 0.0
  %2455 = vmatprep.subr.mxu0 0.0
  %2456 = vmatpush2.msra.mxu0 0.0
  %2457 = vmatprep.mubr.f32.mxu0 0.0
  %2458 = vmatmul.mubr.f32.gmra.mxu0 %v2391
  %v2459 = vpop.f32.mrf.mxu0
  %v2460 = vadd.f32 1e-05, %v2459
  %v2461 = vpop.f32.mrf.mxu0
  %v2462 = vadd.f32 1e-05, %v2461
  %2463 = vdwg.mxu0
  %v2464 = vrsqrt.pop %v2460
  %v2465 = vrsqrt.pop %v2462
  %v2466 = vlaneseq
  %v2467 = vshrl.u32 %v2466, 7
  %v2468 = vsub.s32 0, %v2467
  %v2469 = vrot.slane %v2464, %v2468
  %v2470 = vlaneseq
  %v2471 = vshrl.u32 %v2470, 7
  %v2472 = vsub.s32 0, %v2471
  %v2473 = vrot.slane %v2465, %v2472
  %v2474 = vmul.f32 %v2298, %v2469
  %v2475 = vmul.f32 %v2299, %v2473
  %v2476 = vmul.f32 %v2300, %v2469
  %v2477 = vmul.f32 %v2301, %v2473
  %v2479 = vlaneseq
  %v2480 = vshrl.u32 %v2479, 7
  %v2481 = vsub.s32 0, %v2480
  %v2482 = vrot.slane %v48, %v2481
  %v2483 = vlaneseq
  %v2484 = vshrl.u32 %v2483, 7
  %v2485 = vsub.s32 1, %v2484
  %v2486 = vrot.slane %v48, %v2485
  %v2489 = vmul.f32 %v2474, %v2482
  %v2490 = vmul.f32 %v2475, %v2486
  %v2491 = vmul.f32 %v2476, %v2482
  %v2492 = vmul.f32 %v2477, %v2486
  %v2494 = vlaneseq
  %v2495 = vshrl.u32 %v2494, 7
  %v2496 = vsub.s32 0, %v2495
  %v2497 = vrot.slane %v49, %v2496
  %v2498 = vlaneseq
  %v2499 = vshrl.u32 %v2498, 7
  %v2500 = vsub.s32 1, %v2499
  %v2501 = vrot.slane %v49, %v2500
  %v2504 = vadd.f32 %v2489, %v2497
  %v2505 = vadd.f32 %v2490, %v2501
  %v2506 = vadd.f32 %v2491, %v2497
  %v2507 = vadd.f32 %v2492, %v2501
  %v2508 = vxor.u32 %v2504, 2147483648
  %v2509 = vxor.u32 %v2505, 2147483648
  %v2510 = vxor.u32 %v2506, 2147483648
  %v2511 = vxor.u32 %v2507, 2147483648
  %v2512 = vmul.f32 %v2508, 1.442695
  %v2513 = vpow.pop %v2512
  %v2514 = vmul.f32 %v2509, 1.442695
  %v2515 = vpow.pop %v2514
  %v2516 = vmul.f32 %v2510, 1.442695
  %v2517 = vpow.pop %v2516
  %v2518 = vmul.f32 %v2511, 1.442695
  %v2519 = vpow.pop %v2518
  %v2520 = vadd.f32 %v2513, 1.0
  %v2521 = vadd.f32 %v2515, 1.0
  %v2522 = vadd.f32 %v2517, 1.0
  %v2523 = vadd.f32 %v2519, 1.0
  %v2524 = vrcp.pop %v2520
  %v2525 = vmul.f32 1.0, %v2524
  %v2526 = vrcp.pop %v2521
  %v2527 = vmul.f32 1.0, %v2526
  %v2528 = vrcp.pop %v2522
  %v2529 = vmul.f32 1.0, %v2528
  %v2530 = vrcp.pop %v2523
  %v2531 = vmul.f32 1.0, %v2530
  %v2532 = vmul.f32 %v2504, %v2525
  %v2533 = vmul.f32 %v2505, %v2527
  %v2534 = vmul.f32 %v2506, %v2529
  %v2535 = vmul.f32 %v2507, %v2531
  %v2542 = vrot.slane %v2098, 1
  %v2543 = vrot.slane %v2104, 1
  %v2544 = vsel %vm1520, %v2542, %v2543
  %v2545 = vrot.slane %v2100, 1
  %v2546 = vrot.slane %v2106, 1
  %v2547 = vsel %vm1520, %v2545, %v2546
  %v2548 = vrot.slane %v2110, 1
  %v2549 = vsel %vm1520, %v2543, %v2548
  %v2550 = vrot.slane %v2112, 1
  %v2551 = vsel %vm1520, %v2546, %v2550
  %v2556 = vadd.f32 %v2532, %v2544
  %v2557 = vadd.f32 %v2533, %v2547
  %v2558 = vadd.f32 %v2534, %v2549
  %v2559 = vadd.f32 %v2535, %v2551
  %2560 = vst [vmem:[%s13] sm:$0xff] %v2556
  %2561 = vst [vmem:[%s13 + $0x8] sm:$0xff] %v2557
  %2562 = vst [vmem:[%s13 + $0x10] sm:$0xff] %v2558
  %2563 = vst [vmem:[%s13 + $0x18] sm:$0xff] %v2559
  %v2564 = vadd.f32 %v1977, %v1979
  %v2565 = vrot.slane %v2564, 4
  %v2566 = vadd.f32 %v2564, %v2565
  %v2567 = vrot.slane %v2566, 2
  %v2568 = vadd.f32 %v2566, %v2567
  %v2569 = vrot.slane %v2568, 1
  %v2570 = vadd.f32 %v2568, %v2569
  %v2571 = vadd.f32 %v1978, %v1980
  %v2572 = vrot.slane %v2571, 4
  %v2573 = vadd.f32 %v2571, %v2572
  %v2574 = vrot.slane %v2573, 2
  %v2575 = vadd.f32 %v2573, %v2574
  %v2576 = vrot.slane %v2575, 1
  %v2577 = vadd.f32 %v2575, %v2576
  %2578 = vmatprep.subr.mxu0 0.0
  %2579 = vmatpush1.msra.mxu0 %v65
  %2580 = vmatprep.subr.mxu0 0.0
  %2581 = vmatpush1.msra.mxu0 %v64
  %2582 = vmatprep.subr.mxu0 0.0
  %2583 = vmatpush1.msra.mxu0 %v63
  %2584 = vmatprep.subr.mxu0 0.0
  %2585 = vmatpush1.msra.mxu0 %v62
  %2586 = vmatprep.subr.mxu0 0.0
  %2587 = vmatpush1.msra.mxu0 %v61
  %2588 = vmatprep.subr.mxu0 0.0
  %2589 = vmatpush1.msra.mxu0 %v60
  %2590 = vmatprep.subr.mxu0 0.0
  %2591 = vmatpush1.msra.mxu0 %v59
  %2592 = vmatprep.subr.mxu0 0.0
  %2593 = vmatpush1.msra.mxu0 %v58
  %2594 = vmatprep.subr.mxu0 0.0
  %2595 = vmatpush1.msra.mxu0 %v57
  %2596 = vmatprep.subr.mxu0 0.0
  %2597 = vmatpush1.msra.mxu0 %v56
  %2598 = vmatprep.subr.mxu0 0.0
  %2599 = vmatpush1.msra.mxu0 %v55
  %2600 = vmatprep.subr.mxu0 0.0
  %2601 = vmatpush1.msra.mxu0 %v54
  %2602 = vmatprep.subr.mxu0 0.0
  %2603 = vmatpush1.msra.mxu0 %v53
  %2604 = vmatprep.subr.mxu0 0.0
  %2605 = vmatpush1.msra.mxu0 %v52
  %2606 = vmatprep.subr.mxu0 0.0
  %2607 = vmatpush1.msra.mxu0 %v51
  %2608 = vmatprep.subr.mxu0 0.0
  %2609 = vmatpush1.msra.mxu0 %v50
  %2610 = vmatprep.subr.mxu0 0.0
  %2611 = vmatpush2.msra.mxu0 %v81
  %2612 = vmatprep.subr.mxu0 0.0
  %2613 = vmatpush2.msra.mxu0 %v80
  %2614 = vmatprep.subr.mxu0 0.0
  %2615 = vmatpush2.msra.mxu0 %v79
  %2616 = vmatprep.subr.mxu0 0.0
  %2617 = vmatpush2.msra.mxu0 %v78
  %2618 = vmatprep.subr.mxu0 0.0
  %2619 = vmatpush2.msra.mxu0 %v77
  %2620 = vmatprep.subr.mxu0 0.0
  %2621 = vmatpush2.msra.mxu0 %v76
  %2622 = vmatprep.subr.mxu0 0.0
  %2623 = vmatpush2.msra.mxu0 %v75
  %2624 = vmatprep.subr.mxu0 0.0
  %2625 = vmatpush2.msra.mxu0 %v74
  %2626 = vmatprep.subr.mxu0 0.0
  %2627 = vmatpush2.msra.mxu0 %v73
  %2628 = vmatprep.subr.mxu0 0.0
  %2629 = vmatpush2.msra.mxu0 %v72
  %2630 = vmatprep.subr.mxu0 0.0
  %2631 = vmatpush2.msra.mxu0 %v71
  %2632 = vmatprep.subr.mxu0 0.0
  %2633 = vmatpush2.msra.mxu0 %v70
  %2634 = vmatprep.subr.mxu0 0.0
  %2635 = vmatpush2.msra.mxu0 %v69
  %2636 = vmatprep.subr.mxu0 0.0
  %2637 = vmatpush2.msra.mxu0 %v68
  %2638 = vmatprep.subr.mxu0 0.0
  %2639 = vmatpush2.msra.mxu0 %v67
  %2640 = vmatprep.subr.mxu0 0.0
  %2641 = vmatpush2.msra.mxu0 %v66
  %2642 = vmatprep.mubr.f32.mxu0 %v2577
  %2643 = vmatmul.mubr.f32.gmra.mxu0 %v2570
  %v2644 = vpop.f32.mrf.mxu0
  %v2645 = vadd.f32 0.0, %v2644
  %v2646 = vpop.f32.mrf.mxu0
  %2647 = vdwg.mxu0
  %v2649 = vsel %vm615, %v2645, 0
  %2651 = vmatprep.subr.mxu0 0.0
  %2652 = vmatpush1.msra.mxu0 0.0
  %2653 = vmatprep.subr.mxu0 0.0
  %2654 = vmatpush1.msra.mxu0 0.0
  %2655 = vmatprep.subr.mxu0 0.0
  %2656 = vmatpush1.msra.mxu0 0.0
  %2657 = vmatprep.subr.mxu0 0.0
  %2658 = vmatpush1.msra.mxu0 0.0
  %2659 = vmatprep.subr.mxu0 0.0
  %2660 = vmatpush1.msra.mxu0 0.0
  %2661 = vmatprep.subr.mxu0 0.0
  %2662 = vmatpush1.msra.mxu0 0.0
  %2663 = vmatprep.subr.mxu0 0.0
  %2664 = vmatpush1.msra.mxu0 0.0
  %2665 = vmatprep.subr.mxu0 0.0
  %2666 = vmatpush1.msra.mxu0 0.0
  %2667 = vmatprep.subr.mxu0 0.0
  %2668 = vmatpush1.msra.mxu0 0.0
  %2669 = vmatprep.subr.mxu0 0.0
  %2670 = vmatpush1.msra.mxu0 0.0
  %2671 = vmatprep.subr.mxu0 0.0
  %2672 = vmatpush1.msra.mxu0 0.0
  %2673 = vmatprep.subr.mxu0 0.0
  %2674 = vmatpush1.msra.mxu0 0.0
  %2675 = vmatprep.subr.mxu0 0.0
  %2676 = vmatpush1.msra.mxu0 0.0
  %2677 = vmatprep.subr.mxu0 0.0
  %2678 = vmatpush1.msra.mxu0 0.0
  %2679 = vmatprep.subr.mxu0 0.0
  %2680 = vmatpush1.msra.mxu0 0.0
  %2681 = vmatprep.subr.mxu0 %v83
  %2682 = vmatpush1.msra.mxu0 %v82
  %2683 = vmatprep.subr.mxu0 0.0
  %2684 = vmatpush2.msra.mxu0 0.0
  %2685 = vmatprep.subr.mxu0 0.0
  %2686 = vmatpush2.msra.mxu0 0.0
  %2687 = vmatprep.subr.mxu0 0.0
  %2688 = vmatpush2.msra.mxu0 0.0
  %2689 = vmatprep.subr.mxu0 0.0
  %2690 = vmatpush2.msra.mxu0 0.0
  %2691 = vmatprep.subr.mxu0 0.0
  %2692 = vmatpush2.msra.mxu0 0.0
  %2693 = vmatprep.subr.mxu0 0.0
  %2694 = vmatpush2.msra.mxu0 0.0
  %2695 = vmatprep.subr.mxu0 0.0
  %2696 = vmatpush2.msra.mxu0 0.0
  %2697 = vmatprep.subr.mxu0 0.0
  %2698 = vmatpush2.msra.mxu0 0.0
  %2699 = vmatprep.subr.mxu0 0.0
  %2700 = vmatpush2.msra.mxu0 0.0
  %2701 = vmatprep.subr.mxu0 0.0
  %2702 = vmatpush2.msra.mxu0 0.0
  %2703 = vmatprep.subr.mxu0 0.0
  %2704 = vmatpush2.msra.mxu0 0.0
  %2705 = vmatprep.subr.mxu0 0.0
  %2706 = vmatpush2.msra.mxu0 0.0
  %2707 = vmatprep.subr.mxu0 0.0
  %2708 = vmatpush2.msra.mxu0 0.0
  %2709 = vmatprep.subr.mxu0 0.0
  %2710 = vmatpush2.msra.mxu0 0.0
  %2711 = vmatprep.subr.mxu0 0.0
  %2712 = vmatpush2.msra.mxu0 0.0
  %2713 = vmatprep.subr.mxu0 0.0
  %2714 = vmatpush2.msra.mxu0 0.0
  %2715 = vmatprep.mubr.f32.mxu0 0.0
  %2716 = vmatmul.mubr.f32.gmra.mxu0 %v2649
  %v2717 = vpop.f32.mrf.mxu0
  %v2718 = vadd.f32 0.0, %v2717
  %v2719 = vpop.f32.mrf.mxu0
  %v2720 = vadd.f32 0.0, %v2719
  %2721 = vdwg.mxu0
  %v2722 = vlaneseq
  %v2723 = vshrl.u32 %v2722, 7
  %v2724 = vsub.s32 0, %v2723
  %v2725 = vrot.slane %v2718, %v2724
  %v2726 = vlaneseq
  %v2727 = vshrl.u32 %v2726, 7
  %v2728 = vsub.s32 0, %v2727
  %v2729 = vrot.slane %v2720, %v2728
  %v2730 = vsub.f32 %v1977, %v2725
  %v2731 = vsub.f32 %v1978, %v2729
  %v2732 = vsub.f32 %v1979, %v2725
  %v2733 = vsub.f32 %v1980, %v2729
  %v2734 = vmul.f32 %v2730, %v2730
  %v2735 = vmul.f32 %v2731, %v2731
  %v2736 = vmul.f32 %v2732, %v2732
  %v2737 = vmul.f32 %v2733, %v2733
  %v2738 = vadd.f32 %v2734, %v2736
  %v2739 = vrot.slane %v2738, 4
  %v2740 = vadd.f32 %v2738, %v2739
  %v2741 = vrot.slane %v2740, 2
  %v2742 = vadd.f32 %v2740, %v2741
  %v2743 = vrot.slane %v2742, 1
  %v2744 = vadd.f32 %v2742, %v2743
  %v2745 = vadd.f32 %v2735, %v2737
  %v2746 = vrot.slane %v2745, 4
  %v2747 = vadd.f32 %v2745, %v2746
  %v2748 = vrot.slane %v2747, 2
  %v2749 = vadd.f32 %v2747, %v2748
  %v2750 = vrot.slane %v2749, 1
  %v2751 = vadd.f32 %v2749, %v2750
  %2752 = vmatprep.subr.mxu0 0.0
  %2753 = vmatpush1.msra.mxu0 %v65
  %2754 = vmatprep.subr.mxu0 0.0
  %2755 = vmatpush1.msra.mxu0 %v64
  %2756 = vmatprep.subr.mxu0 0.0
  %2757 = vmatpush1.msra.mxu0 %v63
  %2758 = vmatprep.subr.mxu0 0.0
  %2759 = vmatpush1.msra.mxu0 %v62
  %2760 = vmatprep.subr.mxu0 0.0
  %2761 = vmatpush1.msra.mxu0 %v61
  %2762 = vmatprep.subr.mxu0 0.0
  %2763 = vmatpush1.msra.mxu0 %v60
  %2764 = vmatprep.subr.mxu0 0.0
  %2765 = vmatpush1.msra.mxu0 %v59
  %2766 = vmatprep.subr.mxu0 0.0
  %2767 = vmatpush1.msra.mxu0 %v58
  %2768 = vmatprep.subr.mxu0 0.0
  %2769 = vmatpush1.msra.mxu0 %v57
  %2770 = vmatprep.subr.mxu0 0.0
  %2771 = vmatpush1.msra.mxu0 %v56
  %2772 = vmatprep.subr.mxu0 0.0
  %2773 = vmatpush1.msra.mxu0 %v55
  %2774 = vmatprep.subr.mxu0 0.0
  %2775 = vmatpush1.msra.mxu0 %v54
  %2776 = vmatprep.subr.mxu0 0.0
  %2777 = vmatpush1.msra.mxu0 %v53
  %2778 = vmatprep.subr.mxu0 0.0
  %2779 = vmatpush1.msra.mxu0 %v52
  %2780 = vmatprep.subr.mxu0 0.0
  %2781 = vmatpush1.msra.mxu0 %v51
  %2782 = vmatprep.subr.mxu0 0.0
  %2783 = vmatpush1.msra.mxu0 %v50
  %2784 = vmatprep.subr.mxu0 0.0
  %2785 = vmatpush2.msra.mxu0 %v81
  %2786 = vmatprep.subr.mxu0 0.0
  %2787 = vmatpush2.msra.mxu0 %v80
  %2788 = vmatprep.subr.mxu0 0.0
  %2789 = vmatpush2.msra.mxu0 %v79
  %2790 = vmatprep.subr.mxu0 0.0
  %2791 = vmatpush2.msra.mxu0 %v78
  %2792 = vmatprep.subr.mxu0 0.0
  %2793 = vmatpush2.msra.mxu0 %v77
  %2794 = vmatprep.subr.mxu0 0.0
  %2795 = vmatpush2.msra.mxu0 %v76
  %2796 = vmatprep.subr.mxu0 0.0
  %2797 = vmatpush2.msra.mxu0 %v75
  %2798 = vmatprep.subr.mxu0 0.0
  %2799 = vmatpush2.msra.mxu0 %v74
  %2800 = vmatprep.subr.mxu0 0.0
  %2801 = vmatpush2.msra.mxu0 %v73
  %2802 = vmatprep.subr.mxu0 0.0
  %2803 = vmatpush2.msra.mxu0 %v72
  %2804 = vmatprep.subr.mxu0 0.0
  %2805 = vmatpush2.msra.mxu0 %v71
  %2806 = vmatprep.subr.mxu0 0.0
  %2807 = vmatpush2.msra.mxu0 %v70
  %2808 = vmatprep.subr.mxu0 0.0
  %2809 = vmatpush2.msra.mxu0 %v69
  %2810 = vmatprep.subr.mxu0 0.0
  %2811 = vmatpush2.msra.mxu0 %v68
  %2812 = vmatprep.subr.mxu0 0.0
  %2813 = vmatpush2.msra.mxu0 %v67
  %2814 = vmatprep.subr.mxu0 0.0
  %2815 = vmatpush2.msra.mxu0 %v66
  %2816 = vmatprep.mubr.f32.mxu0 %v2751
  %2817 = vmatmul.mubr.f32.gmra.mxu0 %v2744
  %v2818 = vpop.f32.mrf.mxu0
  %v2819 = vadd.f32 0.0, %v2818
  %v2820 = vpop.f32.mrf.mxu0
  %2821 = vdwg.mxu0
  %v2823 = vsel %vm615, %v2819, 0
  %2825 = vmatprep.subr.mxu0 0.0
  %2826 = vmatpush1.msra.mxu0 0.0
  %2827 = vmatprep.subr.mxu0 0.0
  %2828 = vmatpush1.msra.mxu0 0.0
  %2829 = vmatprep.subr.mxu0 0.0
  %2830 = vmatpush1.msra.mxu0 0.0
  %2831 = vmatprep.subr.mxu0 0.0
  %2832 = vmatpush1.msra.mxu0 0.0
  %2833 = vmatprep.subr.mxu0 0.0
  %2834 = vmatpush1.msra.mxu0 0.0
  %2835 = vmatprep.subr.mxu0 0.0
  %2836 = vmatpush1.msra.mxu0 0.0
  %2837 = vmatprep.subr.mxu0 0.0
  %2838 = vmatpush1.msra.mxu0 0.0
  %2839 = vmatprep.subr.mxu0 0.0
  %2840 = vmatpush1.msra.mxu0 0.0
  %2841 = vmatprep.subr.mxu0 0.0
  %2842 = vmatpush1.msra.mxu0 0.0
  %2843 = vmatprep.subr.mxu0 0.0
  %2844 = vmatpush1.msra.mxu0 0.0
  %2845 = vmatprep.subr.mxu0 0.0
  %2846 = vmatpush1.msra.mxu0 0.0
  %2847 = vmatprep.subr.mxu0 0.0
  %2848 = vmatpush1.msra.mxu0 0.0
  %2849 = vmatprep.subr.mxu0 0.0
  %2850 = vmatpush1.msra.mxu0 0.0
  %2851 = vmatprep.subr.mxu0 0.0
  %2852 = vmatpush1.msra.mxu0 0.0
  %2853 = vmatprep.subr.mxu0 0.0
  %2854 = vmatpush1.msra.mxu0 0.0
  %2855 = vmatprep.subr.mxu0 %v83
  %2856 = vmatpush1.msra.mxu0 %v82
  %2857 = vmatprep.subr.mxu0 0.0
  %2858 = vmatpush2.msra.mxu0 0.0
  %2859 = vmatprep.subr.mxu0 0.0
  %2860 = vmatpush2.msra.mxu0 0.0
  %2861 = vmatprep.subr.mxu0 0.0
  %2862 = vmatpush2.msra.mxu0 0.0
  %2863 = vmatprep.subr.mxu0 0.0
  %2864 = vmatpush2.msra.mxu0 0.0
  %2865 = vmatprep.subr.mxu0 0.0
  %2866 = vmatpush2.msra.mxu0 0.0
  %2867 = vmatprep.subr.mxu0 0.0
  %2868 = vmatpush2.msra.mxu0 0.0
  %2869 = vmatprep.subr.mxu0 0.0
  %2870 = vmatpush2.msra.mxu0 0.0
  %2871 = vmatprep.subr.mxu0 0.0
  %2872 = vmatpush2.msra.mxu0 0.0
  %2873 = vmatprep.subr.mxu0 0.0
  %2874 = vmatpush2.msra.mxu0 0.0
  %2875 = vmatprep.subr.mxu0 0.0
  %2876 = vmatpush2.msra.mxu0 0.0
  %2877 = vmatprep.subr.mxu0 0.0
  %2878 = vmatpush2.msra.mxu0 0.0
  %2879 = vmatprep.subr.mxu0 0.0
  %2880 = vmatpush2.msra.mxu0 0.0
  %2881 = vmatprep.subr.mxu0 0.0
  %2882 = vmatpush2.msra.mxu0 0.0
  %2883 = vmatprep.subr.mxu0 0.0
  %2884 = vmatpush2.msra.mxu0 0.0
  %2885 = vmatprep.subr.mxu0 0.0
  %2886 = vmatpush2.msra.mxu0 0.0
  %2887 = vmatprep.subr.mxu0 0.0
  %2888 = vmatpush2.msra.mxu0 0.0
  %2889 = vmatprep.mubr.f32.mxu0 0.0
  %2890 = vmatmul.mubr.f32.gmra.mxu0 %v2823
  %v2891 = vpop.f32.mrf.mxu0
  %v2892 = vadd.f32 1e-05, %v2891
  %v2893 = vpop.f32.mrf.mxu0
  %v2894 = vadd.f32 1e-05, %v2893
  %2895 = vdwg.mxu0
  %v2896 = vrsqrt.pop %v2892
  %v2897 = vrsqrt.pop %v2894
  %v2898 = vlaneseq
  %v2899 = vshrl.u32 %v2898, 7
  %v2900 = vsub.s32 0, %v2899
  %v2901 = vrot.slane %v2896, %v2900
  %v2902 = vlaneseq
  %v2903 = vshrl.u32 %v2902, 7
  %v2904 = vsub.s32 0, %v2903
  %v2905 = vrot.slane %v2897, %v2904
  %v2906 = vmul.f32 %v2730, %v2901
  %v2907 = vmul.f32 %v2731, %v2905
  %v2908 = vmul.f32 %v2732, %v2901
  %v2909 = vmul.f32 %v2733, %v2905
  %v2910 = vmul.f32 %v2906, %v2482
  %v2911 = vmul.f32 %v2907, %v2486
  %v2912 = vmul.f32 %v2908, %v2482
  %v2913 = vmul.f32 %v2909, %v2486
  %v2914 = vadd.f32 %v2910, %v2497
  %v2915 = vadd.f32 %v2911, %v2501
  %v2916 = vadd.f32 %v2912, %v2497
  %v2917 = vadd.f32 %v2913, %v2501
  %v2918 = vxor.u32 %v2914, 2147483648
  %v2919 = vxor.u32 %v2915, 2147483648
  %v2920 = vxor.u32 %v2916, 2147483648
  %v2921 = vxor.u32 %v2917, 2147483648
  %v2922 = vmul.f32 %v2918, 1.442695
  %v2923 = vpow.pop %v2922
  %v2924 = vmul.f32 %v2919, 1.442695
  %v2925 = vpow.pop %v2924
  %v2926 = vmul.f32 %v2920, 1.442695
  %v2927 = vpow.pop %v2926
  %v2928 = vmul.f32 %v2921, 1.442695
  %v2929 = vpow.pop %v2928
  %v2930 = vadd.f32 %v2923, 1.0
  %v2931 = vadd.f32 %v2925, 1.0
  %v2932 = vadd.f32 %v2927, 1.0
  %v2933 = vadd.f32 %v2929, 1.0
  %v2934 = vrcp.pop %v2930
  %v2935 = vmul.f32 1.0, %v2934
  %v2936 = vrcp.pop %v2931
  %v2937 = vmul.f32 1.0, %v2936
  %v2938 = vrcp.pop %v2932
  %v2939 = vmul.f32 1.0, %v2938
  %v2940 = vrcp.pop %v2933
  %v2941 = vmul.f32 1.0, %v2940
  %v2942 = vmul.f32 %v2914, %v2935
  %v2943 = vmul.f32 %v2915, %v2937
  %v2944 = vmul.f32 %v2916, %v2939
  %v2945 = vmul.f32 %v2917, %v2941
  %v2952 = vrot.slane %v2116, 1
  %v2953 = vrot.slane %v2122, 1
  %v2954 = vsel %vm1520, %v2952, %v2953
  %v2955 = vrot.slane %v2118, 1
  %v2956 = vrot.slane %v2124, 1
  %v2957 = vsel %vm1520, %v2955, %v2956
  %v2958 = vrot.slane %v2128, 1
  %v2959 = vsel %vm1520, %v2953, %v2958
  %v2960 = vrot.slane %v2130, 1
  %v2961 = vsel %vm1520, %v2956, %v2960
  %v2966 = vadd.f32 %v2942, %v2954
  %v2967 = vadd.f32 %v2943, %v2957
  %v2968 = vadd.f32 %v2944, %v2959
  %v2969 = vadd.f32 %v2945, %v2961
  %2970 = vst [vmem:[%s13 + $0x20] sm:$0xff] %v2966
  %2971 = vst [vmem:[%s13 + $0x28] sm:$0xff] %v2967
  %2972 = vst [vmem:[%s13 + $0x30] sm:$0xff] %v2968
  %2973 = vst [vmem:[%s13 + $0x38] sm:$0xff] %v2969
  // Predicated region
  $region54: #{resnet_block.1} parent=0 // pred_check
    _
  $region55: #{resnet_block.1} parent=0 // pred_check_branch
    %2975 = sbr.rel (0) target = $region57
  $region56: #{resnet_block.1} parent=0 // pred_region
    _
  $region57: #{resnet_block.1} parent=0 // pred_fallthru
    _
  // Predicated region
  $region58: #{resnet_block.1} parent=0 // pred_check
    _
  $region59: #{resnet_block.1} parent=0 // pred_check_branch
    %2977 = sbr.rel (0) target = $region61
  $region60: #{resnet_block.1} parent=0 // pred_region
    _
  $region61: #{resnet_block.1} parent=0 // pred_fallthru
    _

</llo_original>
